<compile_context>
chip_gen: v7x
topology: tpu7x:2x2x1
jax: 0.10.0
libtpu: 0.0.40
codegen_flags: <defaults>
</compile_context>

<pallas_src>
import functools
import math

import jax
import jax.numpy as jnp
from jax import lax
from jax.experimental import pallas as pl
from jax.experimental.pallas import tpu as pltpu  # noqa: F401  (TPU backend)

CFG = dict(
    num_classes=2, channel=3, im_size=(8, 8), hidden=32,
    img_pc=4, batch_pc=2, window=2,
    lr=0.01, momentum=0.9, weight_decay=5e-4,
)

# dot_general dimension numbers (avoid any host- or kernel-side transposes)
_DN_NT = (((1,), (1,)), ((), ()))   # (M,K)·(N,K) -> (M,N)   i.e. x @ w.T
_DN_TN = (((0,), (0,)), ((), ()))   # (M,K)·(M,N) -> (K,N)   i.e. a.T @ b
_DN_NN = (((1,), (0,)), ((), ()))   # standard matmul


# ---------------------------- single fused Pallas kernel ----------------------------

def _distill_kernel(imgs_ref, tgt_ref, x_ref,
                    w1_ref, b1_ref, w2_ref, b2_ref, w3_ref, b3_ref,
                    out_ref, pres_ref, *, steps, lr, momentum, wd, inv_m):
    # Load all params once; they (and the SGD velocity buffers) live in vregs/VMEM
    # across the entire statically-unrolled training loop.
    w1 = w1_ref[...]; b1 = b1_ref[...]
    w2 = w2_ref[...]; b2 = b2_ref[...]
    w3 = w3_ref[...]; b3 = b3_ref[...]
    v1 = jnp.zeros_like(w1); vb1 = jnp.zeros_like(b1)
    v2 = jnp.zeros_like(w2); vb2 = jnp.zeros_like(b2)
    v3 = jnp.zeros_like(w3); vb3 = jnp.zeros_like(b3)

    def fwd(x, w1, b1, w2, b2, w3, b3):
        h1 = jnp.maximum(
            lax.dot_general(x, w1, _DN_NT, preferred_element_type=jnp.float32) + b1, 0.0)
        h2 = jnp.maximum(
            lax.dot_general(h1, w2, _DN_NT, preferred_element_type=jnp.float32) + b2, 0.0)
        logits = lax.dot_general(h2, w3, _DN_NT, preferred_element_type=jnp.float32) + b3
        return h1, h2, logits

    def sgd(w, g, v):
        # PyTorch SGD: g += wd*w ; buf = momentum*buf + g ; w -= lr*buf
        g = g + wd * w
        v = momentum * v + g
        return w - lr * v, v

    # Statically unrolled: 4 tiny steps, full LLO scheduling visibility.
    for step in range(steps):
        x = imgs_ref[step]        # (M, D)
        y = tgt_ref[step]         # (M, C) one-hot

        h1, h2, logits = fwd(x, w1, b1, w2, b2, w3, b3)

        # d/dlogits of mean CrossEntropy = (softmax(logits) - onehot) / M
        z = logits - jnp.max(logits, axis=-1, keepdims=True)
        e = jnp.exp(z)
        p = e / jnp.sum(e, axis=-1, keepdims=True)
        dl = (p - y) * inv_m                                             # (M, C)

        gw3 = lax.dot_general(dl, h2, _DN_TN, preferred_element_type=jnp.float32)   # (C, H)
        gb3 = jnp.sum(dl, axis=0, keepdims=True)                                     # (1, C)
        dh2 = lax.dot_general(dl, w3, _DN_NN, preferred_element_type=jnp.float32)    # (M, H)
        dz2 = jnp.where(h2 > 0.0, dh2, 0.0)
        gw2 = lax.dot_general(dz2, h1, _DN_TN, preferred_element_type=jnp.float32)   # (H, H)
        gb2 = jnp.sum(dz2, axis=0, keepdims=True)
        dh1 = lax.dot_general(dz2, w2, _DN_NN, preferred_element_type=jnp.float32)   # (M, H)
        dz1 = jnp.where(h1 > 0.0, dh1, 0.0)
        gw1 = lax.dot_general(dz1, x, _DN_TN, preferred_element_type=jnp.float32)    # (H, D)
        gb1 = jnp.sum(dz1, axis=0, keepdims=True)

        w1, v1 = sgd(w1, gw1, v1); b1, vb1 = sgd(b1, gb1, vb1)
        w2, v2 = sgd(w2, gw2, v2); b2, vb2 = sgd(b2, gb2, vb2)
        w3, v3 = sgd(w3, gw3, v3); b3, vb3 = sgd(b3, gb3, vb3)

    # Final fnet(x): (logits, penultimate features)
    _, h2x, outx = fwd(x_ref[...], w1, b1, w2, b2, w3, b3)
    out_ref[...] = outx
    pres_ref[...] = h2x


def distill_fused_call(imgs_all, tgt_all, x_flat, params, cfg):
    steps, m, _ = imgs_all.shape
    batch = x_flat.shape[0]
    kernel = functools.partial(
        _distill_kernel, steps=steps, lr=cfg['lr'], momentum=cfg['momentum'],
        wd=cfg['weight_decay'], inv_m=1.0 / m)
    # No grid / no BlockSpecs: whole arrays are tiny (~50 KB) and live in VMEM for the
    # full kernel -> single launch, zero intermediate HBM traffic.
    return pl.pallas_call(
        kernel,
        out_shape=(jax.ShapeDtypeStruct((batch, cfg['num_classes']), jnp.float32),
                   jax.ShapeDtypeStruct((batch, cfg['hidden']), jnp.float32)),
    )(imgs_all, tgt_all, x_flat,
      params['w1'], params['b1'], params['w2'], params['b2'],
      params['w3'], params['b3'])


# ---------------------------- Inner network init (get_arch 'MLP') ----------------------------

def mlp_init(key, in_dim, hidden, num_classes):
    # matches nn.Linear default bound U(-1/sqrt(fan_in), 1/sqrt(fan_in))
    def lin_init(k, fan_in, fan_out):
        kw, kb = jax.random.split(k)
        bound = 1.0 / math.sqrt(fan_in)
        w = jax.random.uniform(kw, (fan_out, fan_in), jnp.float32, -bound, bound)
        b = jax.random.uniform(kb, (1, fan_out), jnp.float32, -bound, bound)
        return w, b
    k1, k2, k3 = jax.random.split(key, 3)
    w1, b1 = lin_init(k1, in_dim, hidden)
    w2, b2 = lin_init(k2, hidden, hidden)
    w3, b3 = lin_init(k3, hidden, num_classes)
    return dict(w1=w1, b1=b1, w2=w2, b2=b2, w3=w3, b3=b3)


# ---------------------------- Distill.forward ----------------------------

def _subsample_indices(key, step, num_classes, img_pc, batch_pc):
    # TODO(synk): reference uses torch.randperm; deterministic jax.random stand-in.
    k = jax.random.fold_in(key, step)
    idx = []
    for c in range(num_classes):
        kc = jax.random.fold_in(k, c)
        perm = jax.random.permutation(kc, img_pc)[:batch_pc]
        idx.append(jnp.sort(perm) + c * img_pc)
    return jnp.concatenate(idx)


def distill_forward(data, y_labels, x, key):
    cfg = CFG
    C, (H, W) = cfg['channel'], cfg['im_size']
    D = C * H * W
    nc = cfg['num_classes']

    # forward() re-instantiates the inner net each call (get_arch(...)).
    k_net, k_sub = jax.random.split(key)
    params = mlp_init(k_net, D, cfg['hidden'], nc)

    onehot_all = jax.nn.one_hot(y_labels, nc, dtype=jnp.float32)

    curriculum = cfg['window']                 # self.curriculum = window
    total_steps = curriculum + cfg['window']   # dd_type == 'curriculum' assumed

    # Resolve all per-step subsample indices once, outside the hot kernel; the gathered
    # slabs (steps, M, D) / (steps, M, C) are a few KB and ride into VMEM with the kernel.
    idx_all = jnp.stack([
        _subsample_indices(k_sub, s, nc, cfg['img_pc'], cfg['batch_pc'])
        for s in range(total_steps)
    ])                                          # (steps, nc*batch_pc)
    # TODO(synk): syn_intervention is an opaque callable in the reference; identity here.
    imgs_all = data[idx_all]                    # (steps, M, D)
    tgt_all = onehot_all[idx_all]               # (steps, M, nc)

    # TODO(synk): real_intervention is an opaque callable in the reference; identity here.
    x_flat = x.reshape(x.shape[0], -1)          # NCHW -> (B, C*H*W), same as torch .view

    # TODO(synk): only forward values are reproduced; differentiability through the
    # unrolled steps (higher.innerloop_ctx) is not wired up.
    out, pres = distill_fused_call(imgs_all, tgt_all, x_flat, params, cfg)
    return out, pres


if __name__ == "__main__":
    key = jax.random.PRNGKey(0)
    k_data, k_x, k_fwd = jax.random.split(key, 3)

    C, (H, W) = CFG['channel'], CFG['im_size']
    D = C * H * W
    n_syn = CFG['img_pc'] * CFG['num_classes']

    # nn.Embedding(img_pc*num_classes, C*H*W) default init ~ N(0, 1)
    data = jax.random.normal(k_data, (n_syn, D), dtype=jnp.float32)
    # y_init (train_y=False): hard integer class labels, img_pc per class
    y_labels = jnp.repeat(jnp.arange(CFG['num_classes'], dtype=jnp.int32), CFG['img_pc'])
    # real input, NCHW like the PyTorch module
    x = jax.random.normal(k_x, (2, C, H, W), dtype=jnp.float32)

    fwd = jax.jit(distill_forward)
    out, pres = fwd(data, y_labels, x, k_fwd)
    jax.block_until_ready((out, pres))
    assert out.shape == (2, CFG['num_classes'])
    assert pres.shape == (2, CFG['hidden'])
    assert bool(jnp.all(jnp.isfinite(out))) and bool(jnp.all(jnp.isfinite(pres)))
    print("KERNEL_OK")
</pallas_src>

<mosaic_0001>
module attributes {stable_mosaic.version = 11 : i64} {
  func.func @_distill_kernel(%arg0: memref<4x4x192xf32, #tpu.memory_space<vmem>>, %arg1: memref<4x4x2xf32, #tpu.memory_space<vmem>>, %arg2: memref<2x192xf32, #tpu.memory_space<vmem>>, %arg3: memref<32x192xf32, #tpu.memory_space<vmem>>, %arg4: memref<1x32xf32, #tpu.memory_space<vmem>>, %arg5: memref<32x32xf32, #tpu.memory_space<vmem>>, %arg6: memref<1x32xf32, #tpu.memory_space<vmem>>, %arg7: memref<2x32xf32, #tpu.memory_space<vmem>>, %arg8: memref<1x2xf32, #tpu.memory_space<vmem>>, %arg9: memref<2x2xf32, #tpu.memory_space<vmem>>, %arg10: memref<2x32xf32, #tpu.memory_space<vmem>>) attributes {dimension_semantics = [], scalar_prefetch = 0 : i64, scratch_operands = 0 : i64, tpu.core_type = #tpu.core_type<tc>} {
    %c0 = arith.constant 0 : index
    %c0_0 = arith.constant 0 : index
    %0 = vector.load %arg3[%c0, %c0_0] : memref<32x192xf32, #tpu.memory_space<vmem>>, vector<32x192xf32>
    %c0_1 = arith.constant 0 : index
    %c0_2 = arith.constant 0 : index
    %1 = vector.load %arg4[%c0_1, %c0_2] : memref<1x32xf32, #tpu.memory_space<vmem>>, vector<1x32xf32>
    %c0_3 = arith.constant 0 : index
    %c0_4 = arith.constant 0 : index
    %2 = vector.load %arg5[%c0_3, %c0_4] : memref<32x32xf32, #tpu.memory_space<vmem>>, vector<32x32xf32>
    %c0_5 = arith.constant 0 : index
    %c0_6 = arith.constant 0 : index
    %3 = vector.load %arg6[%c0_5, %c0_6] : memref<1x32xf32, #tpu.memory_space<vmem>>, vector<1x32xf32>
    %c0_7 = arith.constant 0 : index
    %c0_8 = arith.constant 0 : index
    %4 = vector.load %arg7[%c0_7, %c0_8] : memref<2x32xf32, #tpu.memory_space<vmem>>, vector<2x32xf32>
    %c0_9 = arith.constant 0 : index
    %c0_10 = arith.constant 0 : index
    %5 = vector.load %arg8[%c0_9, %c0_10] : memref<1x2xf32, #tpu.memory_space<vmem>>, vector<1x2xf32>
    %cst = arith.constant 0.000000e+00 : f32
    %6 = vector.broadcast %cst : f32 to vector<32x192xf32>
    %cst_11 = arith.constant 0.000000e+00 : f32
    %7 = vector.broadcast %cst_11 : f32 to vector<1x32xf32>
    %cst_12 = arith.constant 0.000000e+00 : f32
    %8 = vector.broadcast %cst_12 : f32 to vector<32x32xf32>
    %cst_13 = arith.constant 0.000000e+00 : f32
    %9 = vector.broadcast %cst_13 : f32 to vector<1x32xf32>
    %cst_14 = arith.constant 0.000000e+00 : f32
    %10 = vector.broadcast %cst_14 : f32 to vector<2x32xf32>
    %cst_15 = arith.constant 0.000000e+00 : f32
    %11 = vector.broadcast %cst_15 : f32 to vector<1x2xf32>
    %c0_16 = arith.constant 0 : index
    %c0_17 = arith.constant 0 : index
    %c0_18 = arith.constant 0 : index
    %12 = vector.load %arg0[%c0_16, %c0_17, %c0_18] : memref<4x4x192xf32, #tpu.memory_space<vmem>>, vector<1x4x192xf32>
    %13 = vector.shape_cast %12 : vector<1x4x192xf32> to vector<4x192xf32>
    %c0_19 = arith.constant 0 : index
    %c0_20 = arith.constant 0 : index
    %c0_21 = arith.constant 0 : index
    %14 = vector.load %arg1[%c0_19, %c0_20, %c0_21] : memref<4x4x2xf32, #tpu.memory_space<vmem>>, vector<1x4x2xf32>
    %15 = vector.shape_cast %14 : vector<1x4x2xf32> to vector<4x2xf32>
    %cst_22 = arith.constant dense<0.000000e+00> : vector<4x32xf32>
    %16 = tpu.matmul %13, %0, %cst_22 {dimension_numbers = #tpu.dot_dimension_numbers<[1], [1], [0], [0], [0, 0, 1, 0], [], []>} : vector<4x192xf32>, vector<32x192xf32>, vector<4x32xf32> -> vector<4x32xf32>
    %17 = vector.broadcast %1 : vector<1x32xf32> to vector<4x32xf32>
    %18 = arith.addf %16, %17 : vector<4x32xf32>
    %cst_23 = arith.constant 0.000000e+00 : f32
    %19 = vector.broadcast %cst_23 : f32 to vector<4x32xf32>
    %20 = arith.maximumf %18, %19 : vector<4x32xf32>
    %cst_24 = arith.constant dense<0.000000e+00> : vector<4x32xf32>
    %21 = tpu.matmul %20, %2, %cst_24 {dimension_numbers = #tpu.dot_dimension_numbers<[1], [1], [0], [0], [0, 0, 1, 0], [], []>} : vector<4x32xf32>, vector<32x32xf32>, vector<4x32xf32> -> vector<4x32xf32>
    %22 = vector.broadcast %3 : vector<1x32xf32> to vector<4x32xf32>
    %23 = arith.addf %21, %22 : vector<4x32xf32>
    %cst_25 = arith.constant 0.000000e+00 : f32
    %24 = vector.broadcast %cst_25 : f32 to vector<4x32xf32>
    %25 = arith.maximumf %23, %24 : vector<4x32xf32>
    %cst_26 = arith.constant dense<0.000000e+00> : vector<4x2xf32>
    %26 = tpu.matmul %25, %4, %cst_26 {dimension_numbers = #tpu.dot_dimension_numbers<[1], [1], [0], [0], [0, 0, 1, 0], [], []>} : vector<4x32xf32>, vector<2x32xf32>, vector<4x2xf32> -> vector<4x2xf32>
    %27 = vector.broadcast %5 : vector<1x2xf32> to vector<4x2xf32>
    %28 = arith.addf %26, %27 : vector<4x2xf32>
    %cst_27 = arith.constant dense<0xFF800000> : vector<4xf32>
    %29 = vector.multi_reduction <maximumf>, %28, %cst_27 [1] : vector<4x2xf32> to vector<4xf32>
    %30 = vector.shape_cast %29 : vector<4xf32> to vector<4x1xf32>
    %31 = vector.broadcast %30 : vector<4x1xf32> to vector<4x2xf32>
    %32 = arith.subf %28, %31 : vector<4x2xf32>
    %33 = math.exp %32 : vector<4x2xf32>
    %cst_28 = arith.constant dense<0.000000e+00> : vector<4xf32>
    %34 = vector.multi_reduction <add>, %33, %cst_28 [1] : vector<4x2xf32> to vector<4xf32>
    %35 = vector.shape_cast %34 : vector<4xf32> to vector<4x1xf32>
    %36 = vector.broadcast %35 : vector<4x1xf32> to vector<4x2xf32>
    %37 = arith.divf %33, %36 : vector<4x2xf32>
    %38 = arith.subf %37, %15 : vector<4x2xf32>
    %cst_29 = arith.constant 2.500000e-01 : f32
    %39 = vector.broadcast %cst_29 : f32 to vector<4x2xf32>
    %40 = arith.mulf %38, %39 : vector<4x2xf32>
    %cst_30 = arith.constant dense<0.000000e+00> : vector<2x32xf32>
    %41 = tpu.matmul %40, %25, %cst_30 {dimension_numbers = #tpu.dot_dimension_numbers<[0], [0], [1], [1], [0, 1, 1, 1], [], []>} : vector<4x2xf32>, vector<4x32xf32>, vector<2x32xf32> -> vector<2x32xf32>
    %cst_31 = arith.constant dense<0.000000e+00> : vector<2xf32>
    %42 = vector.multi_reduction <add>, %40, %cst_31 [0] : vector<4x2xf32> to vector<2xf32>
    %43 = vector.shape_cast %42 : vector<2xf32> to vector<1x2xf32>
    %cst_32 = arith.constant dense<0.000000e+00> : vector<4x32xf32>
    %44 = tpu.matmul %40, %4, %cst_32 {dimension_numbers = #tpu.dot_dimension_numbers<[1], [0], [0], [1], [0, 0, 1, 1], [], []>} : vector<4x2xf32>, vector<2x32xf32>, vector<4x32xf32> -> vector<4x32xf32>
    %cst_33 = arith.constant 0.000000e+00 : f32
    %45 = vector.broadcast %cst_33 : f32 to vector<4x32xf32>
    %46 = arith.cmpf ogt, %25, %45 : vector<4x32xf32>
    %cst_34 = arith.constant 0.000000e+00 : f32
    %47 = vector.broadcast %cst_34 : f32 to vector<4x32xf32>
    %48 = arith.select %46, %44, %47 : vector<4x32xi1>, vector<4x32xf32>
    %cst_35 = arith.constant dense<0.000000e+00> : vector<32x32xf32>
    %49 = tpu.matmul %48, %20, %cst_35 {dimension_numbers = #tpu.dot_dimension_numbers<[0], [0], [1], [1], [0, 1, 1, 1], [], []>} : vector<4x32xf32>, vector<4x32xf32>, vector<32x32xf32> -> vector<32x32xf32>
    %cst_36 = arith.constant dense<0.000000e+00> : vector<32xf32>
    %50 = vector.multi_reduction <add>, %48, %cst_36 [0] : vector<4x32xf32> to vector<32xf32>
    %51 = vector.shape_cast %50 : vector<32xf32> to vector<1x32xf32>
    %cst_37 = arith.constant dense<0.000000e+00> : vector<4x32xf32>
    %52 = tpu.matmul %48, %2, %cst_37 {dimension_numbers = #tpu.dot_dimension_numbers<[1], [0], [0], [1], [0, 0, 1, 1], [], []>} : vector<4x32xf32>, vector<32x32xf32>, vector<4x32xf32> -> vector<4x32xf32>
    %cst_38 = arith.constant 0.000000e+00 : f32
    %53 = vector.broadcast %cst_38 : f32 to vector<4x32xf32>
    %54 = arith.cmpf ogt, %20, %53 : vector<4x32xf32>
    %cst_39 = arith.constant 0.000000e+00 : f32
    %55 = vector.broadcast %cst_39 : f32 to vector<4x32xf32>
    %56 = arith.select %54, %52, %55 : vector<4x32xi1>, vector<4x32xf32>
    %cst_40 = arith.constant dense<0.000000e+00> : vector<32x192xf32>
    %57 = tpu.matmul %56, %13, %cst_40 {dimension_numbers = #tpu.dot_dimension_numbers<[0], [0], [1], [1], [0, 1, 1, 1], [], []>} : vector<4x32xf32>, vector<4x192xf32>, vector<32x192xf32> -> vector<32x192xf32>
    %cst_41 = arith.constant dense<0.000000e+00> : vector<32xf32>
    %58 = vector.multi_reduction <add>, %56, %cst_41 [0] : vector<4x32xf32> to vector<32xf32>
    %59 = vector.shape_cast %58 : vector<32xf32> to vector<1x32xf32>
    %cst_42 = arith.constant 5.000000e-04 : f32
    %60 = vector.broadcast %cst_42 : f32 to vector<32x192xf32>
    %61 = arith.mulf %60, %0 : vector<32x192xf32>
    %62 = arith.addf %57, %61 : vector<32x192xf32>
    %cst_43 = arith.constant 0.899999976 : f32
    %63 = vector.broadcast %cst_43 : f32 to vector<32x192xf32>
    %64 = arith.mulf %63, %6 : vector<32x192xf32>
    %65 = arith.addf %64, %62 : vector<32x192xf32>
    %cst_44 = arith.constant 0.00999999977 : f32
    %66 = vector.broadcast %cst_44 : f32 to vector<32x192xf32>
    %67 = arith.mulf %66, %65 : vector<32x192xf32>
    %68 = arith.subf %0, %67 : vector<32x192xf32>
    %cst_45 = arith.constant 5.000000e-04 : f32
    %69 = vector.broadcast %cst_45 : f32 to vector<1x32xf32>
    %70 = arith.mulf %69, %1 : vector<1x32xf32>
    %71 = arith.addf %59, %70 : vector<1x32xf32>
    %cst_46 = arith.constant 0.899999976 : f32
    %72 = vector.broadcast %cst_46 : f32 to vector<1x32xf32>
    %73 = arith.mulf %72, %7 : vector<1x32xf32>
    %74 = arith.addf %73, %71 : vector<1x32xf32>
    %cst_47 = arith.constant 0.00999999977 : f32
    %75 = vector.broadcast %cst_47 : f32 to vector<1x32xf32>
    %76 = arith.mulf %75, %74 : vector<1x32xf32>
    %77 = arith.subf %1, %76 : vector<1x32xf32>
    %cst_48 = arith.constant 5.000000e-04 : f32
    %78 = vector.broadcast %cst_48 : f32 to vector<32x32xf32>
    %79 = arith.mulf %78, %2 : vector<32x32xf32>
    %80 = arith.addf %49, %79 : vector<32x32xf32>
    %cst_49 = arith.constant 0.899999976 : f32
    %81 = vector.broadcast %cst_49 : f32 to vector<32x32xf32>
    %82 = arith.mulf %81, %8 : vector<32x32xf32>
    %83 = arith.addf %82, %80 : vector<32x32xf32>
    %cst_50 = arith.constant 0.00999999977 : f32
    %84 = vector.broadcast %cst_50 : f32 to vector<32x32xf32>
    %85 = arith.mulf %84, %83 : vector<32x32xf32>
    %86 = arith.subf %2, %85 : vector<32x32xf32>
    %cst_51 = arith.constant 5.000000e-04 : f32
    %87 = vector.broadcast %cst_51 : f32 to vector<1x32xf32>
    %88 = arith.mulf %87, %3 : vector<1x32xf32>
    %89 = arith.addf %51, %88 : vector<1x32xf32>
    %cst_52 = arith.constant 0.899999976 : f32
    %90 = vector.broadcast %cst_52 : f32 to vector<1x32xf32>
    %91 = arith.mulf %90, %9 : vector<1x32xf32>
    %92 = arith.addf %91, %89 : vector<1x32xf32>
    %cst_53 = arith.constant 0.00999999977 : f32
    %93 = vector.broadcast %cst_53 : f32 to vector<1x32xf32>
    %94 = arith.mulf %93, %92 : vector<1x32xf32>
    %95 = arith.subf %3, %94 : vector<1x32xf32>
    %cst_54 = arith.constant 5.000000e-04 : f32
    %96 = vector.broadcast %cst_54 : f32 to vector<2x32xf32>
    %97 = arith.mulf %96, %4 : vector<2x32xf32>
    %98 = arith.addf %41, %97 : vector<2x32xf32>
    %cst_55 = arith.constant 0.899999976 : f32
    %99 = vector.broadcast %cst_55 : f32 to vector<2x32xf32>
    %100 = arith.mulf %99, %10 : vector<2x32xf32>
    %101 = arith.addf %100, %98 : vector<2x32xf32>
    %cst_56 = arith.constant 0.00999999977 : f32
    %102 = vector.broadcast %cst_56 : f32 to vector<2x32xf32>
    %103 = arith.mulf %102, %101 : vector<2x32xf32>
    %104 = arith.subf %4, %103 : vector<2x32xf32>
    %cst_57 = arith.constant 5.000000e-04 : f32
    %105 = vector.broadcast %cst_57 : f32 to vector<1x2xf32>
    %106 = arith.mulf %105, %5 : vector<1x2xf32>
    %107 = arith.addf %43, %106 : vector<1x2xf32>
    %cst_58 = arith.constant 0.899999976 : f32
    %108 = vector.broadcast %cst_58 : f32 to vector<1x2xf32>
    %109 = arith.mulf %108, %11 : vector<1x2xf32>
    %110 = arith.addf %109, %107 : vector<1x2xf32>
    %cst_59 = arith.constant 0.00999999977 : f32
    %111 = vector.broadcast %cst_59 : f32 to vector<1x2xf32>
    %112 = arith.mulf %111, %110 : vector<1x2xf32>
    %113 = arith.subf %5, %112 : vector<1x2xf32>
    %c1 = arith.constant 1 : index
    %c0_60 = arith.constant 0 : index
    %c0_61 = arith.constant 0 : index
    %114 = vector.load %arg0[%c1, %c0_60, %c0_61] : memref<4x4x192xf32, #tpu.memory_space<vmem>>, vector<1x4x192xf32>
    %115 = vector.shape_cast %114 : vector<1x4x192xf32> to vector<4x192xf32>
    %c1_62 = arith.constant 1 : index
    %c0_63 = arith.constant 0 : index
    %c0_64 = arith.constant 0 : index
    %116 = vector.load %arg1[%c1_62, %c0_63, %c0_64] : memref<4x4x2xf32, #tpu.memory_space<vmem>>, vector<1x4x2xf32>
    %117 = vector.shape_cast %116 : vector<1x4x2xf32> to vector<4x2xf32>
    %cst_65 = arith.constant dense<0.000000e+00> : vector<4x32xf32>
    %118 = tpu.matmul %115, %68, %cst_65 {dimension_numbers = #tpu.dot_dimension_numbers<[1], [1], [0], [0], [0, 0, 1, 0], [], []>} : vector<4x192xf32>, vector<32x192xf32>, vector<4x32xf32> -> vector<4x32xf32>
    %119 = vector.broadcast %77 : vector<1x32xf32> to vector<4x32xf32>
    %120 = arith.addf %118, %119 : vector<4x32xf32>
    %cst_66 = arith.constant 0.000000e+00 : f32
    %121 = vector.broadcast %cst_66 : f32 to vector<4x32xf32>
    %122 = arith.maximumf %120, %121 : vector<4x32xf32>
    %cst_67 = arith.constant dense<0.000000e+00> : vector<4x32xf32>
    %123 = tpu.matmul %122, %86, %cst_67 {dimension_numbers = #tpu.dot_dimension_numbers<[1], [1], [0], [0], [0, 0, 1, 0], [], []>} : vector<4x32xf32>, vector<32x32xf32>, vector<4x32xf32> -> vector<4x32xf32>
    %124 = vector.broadcast %95 : vector<1x32xf32> to vector<4x32xf32>
    %125 = arith.addf %123, %124 : vector<4x32xf32>
    %cst_68 = arith.constant 0.000000e+00 : f32
    %126 = vector.broadcast %cst_68 : f32 to vector<4x32xf32>
    %127 = arith.maximumf %125, %126 : vector<4x32xf32>
    %cst_69 = arith.constant dense<0.000000e+00> : vector<4x2xf32>
    %128 = tpu.matmul %127, %104, %cst_69 {dimension_numbers = #tpu.dot_dimension_numbers<[1], [1], [0], [0], [0, 0, 1, 0], [], []>} : vector<4x32xf32>, vector<2x32xf32>, vector<4x2xf32> -> vector<4x2xf32>
    %129 = vector.broadcast %113 : vector<1x2xf32> to vector<4x2xf32>
    %130 = arith.addf %128, %129 : vector<4x2xf32>
    %cst_70 = arith.constant dense<0xFF800000> : vector<4xf32>
    %131 = vector.multi_reduction <maximumf>, %130, %cst_70 [1] : vector<4x2xf32> to vector<4xf32>
    %132 = vector.shape_cast %131 : vector<4xf32> to vector<4x1xf32>
    %133 = vector.broadcast %132 : vector<4x1xf32> to vector<4x2xf32>
    %134 = arith.subf %130, %133 : vector<4x2xf32>
    %135 = math.exp %134 : vector<4x2xf32>
    %cst_71 = arith.constant dense<0.000000e+00> : vector<4xf32>
    %136 = vector.multi_reduction <add>, %135, %cst_71 [1] : vector<4x2xf32> to vector<4xf32>
    %137 = vector.shape_cast %136 : vector<4xf32> to vector<4x1xf32>
    %138 = vector.broadcast %137 : vector<4x1xf32> to vector<4x2xf32>
    %139 = arith.divf %135, %138 : vector<4x2xf32>
    %140 = arith.subf %139, %117 : vector<4x2xf32>
    %cst_72 = arith.constant 2.500000e-01 : f32
    %141 = vector.broadcast %cst_72 : f32 to vector<4x2xf32>
    %142 = arith.mulf %140, %141 : vector<4x2xf32>
    %cst_73 = arith.constant dense<0.000000e+00> : vector<2x32xf32>
    %143 = tpu.matmul %142, %127, %cst_73 {dimension_numbers = #tpu.dot_dimension_numbers<[0], [0], [1], [1], [0, 1, 1, 1], [], []>} : vector<4x2xf32>, vector<4x32xf32>, vector<2x32xf32> -> vector<2x32xf32>
    %cst_74 = arith.constant dense<0.000000e+00> : vector<2xf32>
    %144 = vector.multi_reduction <add>, %142, %cst_74 [0] : vector<4x2xf32> to vector<2xf32>
    %145 = vector.shape_cast %144 : vector<2xf32> to vector<1x2xf32>
    %cst_75 = arith.constant dense<0.000000e+00> : vector<4x32xf32>
    %146 = tpu.matmul %142, %104, %cst_75 {dimension_numbers = #tpu.dot_dimension_numbers<[1], [0], [0], [1], [0, 0, 1, 1], [], []>} : vector<4x2xf32>, vector<2x32xf32>, vector<4x32xf32> -> vector<4x32xf32>
    %cst_76 = arith.constant 0.000000e+00 : f32
    %147 = vector.broadcast %cst_76 : f32 to vector<4x32xf32>
    %148 = arith.cmpf ogt, %127, %147 : vector<4x32xf32>
    %cst_77 = arith.constant 0.000000e+00 : f32
    %149 = vector.broadcast %cst_77 : f32 to vector<4x32xf32>
    %150 = arith.select %148, %146, %149 : vector<4x32xi1>, vector<4x32xf32>
    %cst_78 = arith.constant dense<0.000000e+00> : vector<32x32xf32>
    %151 = tpu.matmul %150, %122, %cst_78 {dimension_numbers = #tpu.dot_dimension_numbers<[0], [0], [1], [1], [0, 1, 1, 1], [], []>} : vector<4x32xf32>, vector<4x32xf32>, vector<32x32xf32> -> vector<32x32xf32>
    %cst_79 = arith.constant dense<0.000000e+00> : vector<32xf32>
    %152 = vector.multi_reduction <add>, %150, %cst_79 [0] : vector<4x32xf32> to vector<32xf32>
    %153 = vector.shape_cast %152 : vector<32xf32> to vector<1x32xf32>
    %cst_80 = arith.constant dense<0.000000e+00> : vector<4x32xf32>
    %154 = tpu.matmul %150, %86, %cst_80 {dimension_numbers = #tpu.dot_dimension_numbers<[1], [0], [0], [1], [0, 0, 1, 1], [], []>} : vector<4x32xf32>, vector<32x32xf32>, vector<4x32xf32> -> vector<4x32xf32>
    %cst_81 = arith.constant 0.000000e+00 : f32
    %155 = vector.broadcast %cst_81 : f32 to vector<4x32xf32>
    %156 = arith.cmpf ogt, %122, %155 : vector<4x32xf32>
    %cst_82 = arith.constant 0.000000e+00 : f32
    %157 = vector.broadcast %cst_82 : f32 to vector<4x32xf32>
    %158 = arith.select %156, %154, %157 : vector<4x32xi1>, vector<4x32xf32>
    %cst_83 = arith.constant dense<0.000000e+00> : vector<32x192xf32>
    %159 = tpu.matmul %158, %115, %cst_83 {dimension_numbers = #tpu.dot_dimension_numbers<[0], [0], [1], [1], [0, 1, 1, 1], [], []>} : vector<4x32xf32>, vector<4x192xf32>, vector<32x192xf32> -> vector<32x192xf32>
    %cst_84 = arith.constant dense<0.000000e+00> : vector<32xf32>
    %160 = vector.multi_reduction <add>, %158, %cst_84 [0] : vector<4x32xf32> to vector<32xf32>
    %161 = vector.shape_cast %160 : vector<32xf32> to vector<1x32xf32>
    %cst_85 = arith.constant 5.000000e-04 : f32
    %162 = vector.broadcast %cst_85 : f32 to vector<32x192xf32>
    %163 = arith.mulf %162, %68 : vector<32x192xf32>
    %164 = arith.addf %159, %163 : vector<32x192xf32>
    %cst_86 = arith.constant 0.899999976 : f32
    %165 = vector.broadcast %cst_86 : f32 to vector<32x192xf32>
    %166 = arith.mulf %165, %65 : vector<32x192xf32>
    %167 = arith.addf %166, %164 : vector<32x192xf32>
    %cst_87 = arith.constant 0.00999999977 : f32
    %168 = vector.broadcast %cst_87 : f32 to vector<32x192xf32>
    %169 = arith.mulf %168, %167 : vector<32x192xf32>
    %170 = arith.subf %68, %169 : vector<32x192xf32>
    %cst_88 = arith.constant 5.000000e-04 : f32
    %171 = vector.broadcast %cst_88 : f32 to vector<1x32xf32>
    %172 = arith.mulf %171, %77 : vector<1x32xf32>
    %173 = arith.addf %161, %172 : vector<1x32xf32>
    %cst_89 = arith.constant 0.899999976 : f32
    %174 = vector.broadcast %cst_89 : f32 to vector<1x32xf32>
    %175 = arith.mulf %174, %74 : vector<1x32xf32>
    %176 = arith.addf %175, %173 : vector<1x32xf32>
    %cst_90 = arith.constant 0.00999999977 : f32
    %177 = vector.broadcast %cst_90 : f32 to vector<1x32xf32>
    %178 = arith.mulf %177, %176 : vector<1x32xf32>
    %179 = arith.subf %77, %178 : vector<1x32xf32>
    %cst_91 = arith.constant 5.000000e-04 : f32
    %180 = vector.broadcast %cst_91 : f32 to vector<32x32xf32>
    %181 = arith.mulf %180, %86 : vector<32x32xf32>
    %182 = arith.addf %151, %181 : vector<32x32xf32>
    %cst_92 = arith.constant 0.899999976 : f32
    %183 = vector.broadcast %cst_92 : f32 to vector<32x32xf32>
    %184 = arith.mulf %183, %83 : vector<32x32xf32>
    %185 = arith.addf %184, %182 : vector<32x32xf32>
    %cst_93 = arith.constant 0.00999999977 : f32
    %186 = vector.broadcast %cst_93 : f32 to vector<32x32xf32>
    %187 = arith.mulf %186, %185 : vector<32x32xf32>
    %188 = arith.subf %86, %187 : vector<32x32xf32>
    %cst_94 = arith.constant 5.000000e-04 : f32
    %189 = vector.broadcast %cst_94 : f32 to vector<1x32xf32>
    %190 = arith.mulf %189, %95 : vector<1x32xf32>
    %191 = arith.addf %153, %190 : vector<1x32xf32>
    %cst_95 = arith.constant 0.899999976 : f32
    %192 = vector.broadcast %cst_95 : f32 to vector<1x32xf32>
    %193 = arith.mulf %192, %92 : vector<1x32xf32>
    %194 = arith.addf %193, %191 : vector<1x32xf32>
    %cst_96 = arith.constant 0.00999999977 : f32
    %195 = vector.broadcast %cst_96 : f32 to vector<1x32xf32>
    %196 = arith.mulf %195, %194 : vector<1x32xf32>
    %197 = arith.subf %95, %196 : vector<1x32xf32>
    %cst_97 = arith.constant 5.000000e-04 : f32
    %198 = vector.broadcast %cst_97 : f32 to vector<2x32xf32>
    %199 = arith.mulf %198, %104 : vector<2x32xf32>
    %200 = arith.addf %143, %199 : vector<2x32xf32>
    %cst_98 = arith.constant 0.899999976 : f32
    %201 = vector.broadcast %cst_98 : f32 to vector<2x32xf32>
    %202 = arith.mulf %201, %101 : vector<2x32xf32>
    %203 = arith.addf %202, %200 : vector<2x32xf32>
    %cst_99 = arith.constant 0.00999999977 : f32
    %204 = vector.broadcast %cst_99 : f32 to vector<2x32xf32>
    %205 = arith.mulf %204, %203 : vector<2x32xf32>
    %206 = arith.subf %104, %205 : vector<2x32xf32>
    %cst_100 = arith.constant 5.000000e-04 : f32
    %207 = vector.broadcast %cst_100 : f32 to vector<1x2xf32>
    %208 = arith.mulf %207, %113 : vector<1x2xf32>
    %209 = arith.addf %145, %208 : vector<1x2xf32>
    %cst_101 = arith.constant 0.899999976 : f32
    %210 = vector.broadcast %cst_101 : f32 to vector<1x2xf32>
    %211 = arith.mulf %210, %110 : vector<1x2xf32>
    %212 = arith.addf %211, %209 : vector<1x2xf32>
    %cst_102 = arith.constant 0.00999999977 : f32
    %213 = vector.broadcast %cst_102 : f32 to vector<1x2xf32>
    %214 = arith.mulf %213, %212 : vector<1x2xf32>
    %215 = arith.subf %113, %214 : vector<1x2xf32>
    %c2 = arith.constant 2 : index
    %c0_103 = arith.constant 0 : index
    %c0_104 = arith.constant 0 : index
    %216 = vector.load %arg0[%c2, %c0_103, %c0_104] : memref<4x4x192xf32, #tpu.memory_space<vmem>>, vector<1x4x192xf32>
    %217 = vector.shape_cast %216 : vector<1x4x192xf32> to vector<4x192xf32>
    %c2_105 = arith.constant 2 : index
    %c0_106 = arith.constant 0 : index
    %c0_107 = arith.constant 0 : index
    %218 = vector.load %arg1[%c2_105, %c0_106, %c0_107] : memref<4x4x2xf32, #tpu.memory_space<vmem>>, vector<1x4x2xf32>
    %219 = vector.shape_cast %218 : vector<1x4x2xf32> to vector<4x2xf32>
    %cst_108 = arith.constant dense<0.000000e+00> : vector<4x32xf32>
    %220 = tpu.matmul %217, %170, %cst_108 {dimension_numbers = #tpu.dot_dimension_numbers<[1], [1], [0], [0], [0, 0, 1, 0], [], []>} : vector<4x192xf32>, vector<32x192xf32>, vector<4x32xf32> -> vector<4x32xf32>
    %221 = vector.broadcast %179 : vector<1x32xf32> to vector<4x32xf32>
    %222 = arith.addf %220, %221 : vector<4x32xf32>
    %cst_109 = arith.constant 0.000000e+00 : f32
    %223 = vector.broadcast %cst_109 : f32 to vector<4x32xf32>
    %224 = arith.maximumf %222, %223 : vector<4x32xf32>
    %cst_110 = arith.constant dense<0.000000e+00> : vector<4x32xf32>
    %225 = tpu.matmul %224, %188, %cst_110 {dimension_numbers = #tpu.dot_dimension_numbers<[1], [1], [0], [0], [0, 0, 1, 0], [], []>} : vector<4x32xf32>, vector<32x32xf32>, vector<4x32xf32> -> vector<4x32xf32>
    %226 = vector.broadcast %197 : vector<1x32xf32> to vector<4x32xf32>
    %227 = arith.addf %225, %226 : vector<4x32xf32>
    %cst_111 = arith.constant 0.000000e+00 : f32
    %228 = vector.broadcast %cst_111 : f32 to vector<4x32xf32>
    %229 = arith.maximumf %227, %228 : vector<4x32xf32>
    %cst_112 = arith.constant dense<0.000000e+00> : vector<4x2xf32>
    %230 = tpu.matmul %229, %206, %cst_112 {dimension_numbers = #tpu.dot_dimension_numbers<[1], [1], [0], [0], [0, 0, 1, 0], [], []>} : vector<4x32xf32>, vector<2x32xf32>, vector<4x2xf32> -> vector<4x2xf32>
    %231 = vector.broadcast %215 : vector<1x2xf32> to vector<4x2xf32>
    %232 = arith.addf %230, %231 : vector<4x2xf32>
    %cst_113 = arith.constant dense<0xFF800000> : vector<4xf32>
    %233 = vector.multi_reduction <maximumf>, %232, %cst_113 [1] : vector<4x2xf32> to vector<4xf32>
    %234 = vector.shape_cast %233 : vector<4xf32> to vector<4x1xf32>
    %235 = vector.broadcast %234 : vector<4x1xf32> to vector<4x2xf32>
    %236 = arith.subf %232, %235 : vector<4x2xf32>
    %237 = math.exp %236 : vector<4x2xf32>
    %cst_114 = arith.constant dense<0.000000e+00> : vector<4xf32>
    %238 = vector.multi_reduction <add>, %237, %cst_114 [1] : vector<4x2xf32> to vector<4xf32>
    %239 = vector.shape_cast %238 : vector<4xf32> to vector<4x1xf32>
    %240 = vector.broadcast %239 : vector<4x1xf32> to vector<4x2xf32>
    %241 = arith.divf %237, %240 : vector<4x2xf32>
    %242 = arith.subf %241, %219 : vector<4x2xf32>
    %cst_115 = arith.constant 2.500000e-01 : f32
    %243 = vector.broadcast %cst_115 : f32 to vector<4x2xf32>
    %244 = arith.mulf %242, %243 : vector<4x2xf32>
    %cst_116 = arith.constant dense<0.000000e+00> : vector<2x32xf32>
    %245 = tpu.matmul %244, %229, %cst_116 {dimension_numbers = #tpu.dot_dimension_numbers<[0], [0], [1], [1], [0, 1, 1, 1], [], []>} : vector<4x2xf32>, vector<4x32xf32>, vector<2x32xf32> -> vector<2x32xf32>
    %cst_117 = arith.constant dense<0.000000e+00> : vector<2xf32>
    %246 = vector.multi_reduction <add>, %244, %cst_117 [0] : vector<4x2xf32> to vector<2xf32>
    %247 = vector.shape_cast %246 : vector<2xf32> to vector<1x2xf32>
    %cst_118 = arith.constant dense<0.000000e+00> : vector<4x32xf32>
    %248 = tpu.matmul %244, %206, %cst_118 {dimension_numbers = #tpu.dot_dimension_numbers<[1], [0], [0], [1], [0, 0, 1, 1], [], []>} : vector<4x2xf32>, vector<2x32xf32>, vector<4x32xf32> -> vector<4x32xf32>
    %cst_119 = arith.constant 0.000000e+00 : f32
    %249 = vector.broadcast %cst_119 : f32 to vector<4x32xf32>
    %250 = arith.cmpf ogt, %229, %249 : vector<4x32xf32>
    %cst_120 = arith.constant 0.000000e+00 : f32
    %251 = vector.broadcast %cst_120 : f32 to vector<4x32xf32>
    %252 = arith.select %250, %248, %251 : vector<4x32xi1>, vector<4x32xf32>
    %cst_121 = arith.constant dense<0.000000e+00> : vector<32x32xf32>
    %253 = tpu.matmul %252, %224, %cst_121 {dimension_numbers = #tpu.dot_dimension_numbers<[0], [0], [1], [1], [0, 1, 1, 1], [], []>} : vector<4x32xf32>, vector<4x32xf32>, vector<32x32xf32> -> vector<32x32xf32>
    %cst_122 = arith.constant dense<0.000000e+00> : vector<32xf32>
    %254 = vector.multi_reduction <add>, %252, %cst_122 [0] : vector<4x32xf32> to vector<32xf32>
    %255 = vector.shape_cast %254 : vector<32xf32> to vector<1x32xf32>
    %cst_123 = arith.constant dense<0.000000e+00> : vector<4x32xf32>
    %256 = tpu.matmul %252, %188, %cst_123 {dimension_numbers = #tpu.dot_dimension_numbers<[1], [0], [0], [1], [0, 0, 1, 1], [], []>} : vector<4x32xf32>, vector<32x32xf32>, vector<4x32xf32> -> vector<4x32xf32>
    %cst_124 = arith.constant 0.000000e+00 : f32
    %257 = vector.broadcast %cst_124 : f32 to vector<4x32xf32>
    %258 = arith.cmpf ogt, %224, %257 : vector<4x32xf32>
    %cst_125 = arith.constant 0.000000e+00 : f32
    %259 = vector.broadcast %cst_125 : f32 to vector<4x32xf32>
    %260 = arith.select %258, %256, %259 : vector<4x32xi1>, vector<4x32xf32>
    %cst_126 = arith.constant dense<0.000000e+00> : vector<32x192xf32>
    %261 = tpu.matmul %260, %217, %cst_126 {dimension_numbers = #tpu.dot_dimension_numbers<[0], [0], [1], [1], [0, 1, 1, 1], [], []>} : vector<4x32xf32>, vector<4x192xf32>, vector<32x192xf32> -> vector<32x192xf32>
    %cst_127 = arith.constant dense<0.000000e+00> : vector<32xf32>
    %262 = vector.multi_reduction <add>, %260, %cst_127 [0] : vector<4x32xf32> to vector<32xf32>
    %263 = vector.shape_cast %262 : vector<32xf32> to vector<1x32xf32>
    %cst_128 = arith.constant 5.000000e-04 : f32
    %264 = vector.broadcast %cst_128 : f32 to vector<32x192xf32>
    %265 = arith.mulf %264, %170 : vector<32x192xf32>
    %266 = arith.addf %261, %265 : vector<32x192xf32>
    %cst_129 = arith.constant 0.899999976 : f32
    %267 = vector.broadcast %cst_129 : f32 to vector<32x192xf32>
    %268 = arith.mulf %267, %167 : vector<32x192xf32>
    %269 = arith.addf %268, %266 : vector<32x192xf32>
    %cst_130 = arith.constant 0.00999999977 : f32
    %270 = vector.broadcast %cst_130 : f32 to vector<32x192xf32>
    %271 = arith.mulf %270, %269 : vector<32x192xf32>
    %272 = arith.subf %170, %271 : vector<32x192xf32>
    %cst_131 = arith.constant 5.000000e-04 : f32
    %273 = vector.broadcast %cst_131 : f32 to vector<1x32xf32>
    %274 = arith.mulf %273, %179 : vector<1x32xf32>
    %275 = arith.addf %263, %274 : vector<1x32xf32>
    %cst_132 = arith.constant 0.899999976 : f32
    %276 = vector.broadcast %cst_132 : f32 to vector<1x32xf32>
    %277 = arith.mulf %276, %176 : vector<1x32xf32>
    %278 = arith.addf %277, %275 : vector<1x32xf32>
    %cst_133 = arith.constant 0.00999999977 : f32
    %279 = vector.broadcast %cst_133 : f32 to vector<1x32xf32>
    %280 = arith.mulf %279, %278 : vector<1x32xf32>
    %281 = arith.subf %179, %280 : vector<1x32xf32>
    %cst_134 = arith.constant 5.000000e-04 : f32
    %282 = vector.broadcast %cst_134 : f32 to vector<32x32xf32>
    %283 = arith.mulf %282, %188 : vector<32x32xf32>
    %284 = arith.addf %253, %283 : vector<32x32xf32>
    %cst_135 = arith.constant 0.899999976 : f32
    %285 = vector.broadcast %cst_135 : f32 to vector<32x32xf32>
    %286 = arith.mulf %285, %185 : vector<32x32xf32>
    %287 = arith.addf %286, %284 : vector<32x32xf32>
    %cst_136 = arith.constant 0.00999999977 : f32
    %288 = vector.broadcast %cst_136 : f32 to vector<32x32xf32>
    %289 = arith.mulf %288, %287 : vector<32x32xf32>
    %290 = arith.subf %188, %289 : vector<32x32xf32>
    %cst_137 = arith.constant 5.000000e-04 : f32
    %291 = vector.broadcast %cst_137 : f32 to vector<1x32xf32>
    %292 = arith.mulf %291, %197 : vector<1x32xf32>
    %293 = arith.addf %255, %292 : vector<1x32xf32>
    %cst_138 = arith.constant 0.899999976 : f32
    %294 = vector.broadcast %cst_138 : f32 to vector<1x32xf32>
    %295 = arith.mulf %294, %194 : vector<1x32xf32>
    %296 = arith.addf %295, %293 : vector<1x32xf32>
    %cst_139 = arith.constant 0.00999999977 : f32
    %297 = vector.broadcast %cst_139 : f32 to vector<1x32xf32>
    %298 = arith.mulf %297, %296 : vector<1x32xf32>
    %299 = arith.subf %197, %298 : vector<1x32xf32>
    %cst_140 = arith.constant 5.000000e-04 : f32
    %300 = vector.broadcast %cst_140 : f32 to vector<2x32xf32>
    %301 = arith.mulf %300, %206 : vector<2x32xf32>
    %302 = arith.addf %245, %301 : vector<2x32xf32>
    %cst_141 = arith.constant 0.899999976 : f32
    %303 = vector.broadcast %cst_141 : f32 to vector<2x32xf32>
    %304 = arith.mulf %303, %203 : vector<2x32xf32>
    %305 = arith.addf %304, %302 : vector<2x32xf32>
    %cst_142 = arith.constant 0.00999999977 : f32
    %306 = vector.broadcast %cst_142 : f32 to vector<2x32xf32>
    %307 = arith.mulf %306, %305 : vector<2x32xf32>
    %308 = arith.subf %206, %307 : vector<2x32xf32>
    %cst_143 = arith.constant 5.000000e-04 : f32
    %309 = vector.broadcast %cst_143 : f32 to vector<1x2xf32>
    %310 = arith.mulf %309, %215 : vector<1x2xf32>
    %311 = arith.addf %247, %310 : vector<1x2xf32>
    %cst_144 = arith.constant 0.899999976 : f32
    %312 = vector.broadcast %cst_144 : f32 to vector<1x2xf32>
    %313 = arith.mulf %312, %212 : vector<1x2xf32>
    %314 = arith.addf %313, %311 : vector<1x2xf32>
    %cst_145 = arith.constant 0.00999999977 : f32
    %315 = vector.broadcast %cst_145 : f32 to vector<1x2xf32>
    %316 = arith.mulf %315, %314 : vector<1x2xf32>
    %317 = arith.subf %215, %316 : vector<1x2xf32>
    %c3 = arith.constant 3 : index
    %c0_146 = arith.constant 0 : index
    %c0_147 = arith.constant 0 : index
    %318 = vector.load %arg0[%c3, %c0_146, %c0_147] : memref<4x4x192xf32, #tpu.memory_space<vmem>>, vector<1x4x192xf32>
    %319 = vector.shape_cast %318 : vector<1x4x192xf32> to vector<4x192xf32>
    %c3_148 = arith.constant 3 : index
    %c0_149 = arith.constant 0 : index
    %c0_150 = arith.constant 0 : index
    %320 = vector.load %arg1[%c3_148, %c0_149, %c0_150] : memref<4x4x2xf32, #tpu.memory_space<vmem>>, vector<1x4x2xf32>
    %321 = vector.shape_cast %320 : vector<1x4x2xf32> to vector<4x2xf32>
    %cst_151 = arith.constant dense<0.000000e+00> : vector<4x32xf32>
    %322 = tpu.matmul %319, %272, %cst_151 {dimension_numbers = #tpu.dot_dimension_numbers<[1], [1], [0], [0], [0, 0, 1, 0], [], []>} : vector<4x192xf32>, vector<32x192xf32>, vector<4x32xf32> -> vector<4x32xf32>
    %323 = vector.broadcast %281 : vector<1x32xf32> to vector<4x32xf32>
    %324 = arith.addf %322, %323 : vector<4x32xf32>
    %cst_152 = arith.constant 0.000000e+00 : f32
    %325 = vector.broadcast %cst_152 : f32 to vector<4x32xf32>
    %326 = arith.maximumf %324, %325 : vector<4x32xf32>
    %cst_153 = arith.constant dense<0.000000e+00> : vector<4x32xf32>
    %327 = tpu.matmul %326, %290, %cst_153 {dimension_numbers = #tpu.dot_dimension_numbers<[1], [1], [0], [0], [0, 0, 1, 0], [], []>} : vector<4x32xf32>, vector<32x32xf32>, vector<4x32xf32> -> vector<4x32xf32>
    %328 = vector.broadcast %299 : vector<1x32xf32> to vector<4x32xf32>
    %329 = arith.addf %327, %328 : vector<4x32xf32>
    %cst_154 = arith.constant 0.000000e+00 : f32
    %330 = vector.broadcast %cst_154 : f32 to vector<4x32xf32>
    %331 = arith.maximumf %329, %330 : vector<4x32xf32>
    %cst_155 = arith.constant dense<0.000000e+00> : vector<4x2xf32>
    %332 = tpu.matmul %331, %308, %cst_155 {dimension_numbers = #tpu.dot_dimension_numbers<[1], [1], [0], [0], [0, 0, 1, 0], [], []>} : vector<4x32xf32>, vector<2x32xf32>, vector<4x2xf32> -> vector<4x2xf32>
    %333 = vector.broadcast %317 : vector<1x2xf32> to vector<4x2xf32>
    %334 = arith.addf %332, %333 : vector<4x2xf32>
    %cst_156 = arith.constant dense<0xFF800000> : vector<4xf32>
    %335 = vector.multi_reduction <maximumf>, %334, %cst_156 [1] : vector<4x2xf32> to vector<4xf32>
    %336 = vector.shape_cast %335 : vector<4xf32> to vector<4x1xf32>
    %337 = vector.broadcast %336 : vector<4x1xf32> to vector<4x2xf32>
    %338 = arith.subf %334, %337 : vector<4x2xf32>
    %339 = math.exp %338 : vector<4x2xf32>
    %cst_157 = arith.constant dense<0.000000e+00> : vector<4xf32>
    %340 = vector.multi_reduction <add>, %339, %cst_157 [1] : vector<4x2xf32> to vector<4xf32>
    %341 = vector.shape_cast %340 : vector<4xf32> to vector<4x1xf32>
    %342 = vector.broadcast %341 : vector<4x1xf32> to vector<4x2xf32>
    %343 = arith.divf %339, %342 : vector<4x2xf32>
    %344 = arith.subf %343, %321 : vector<4x2xf32>
    %cst_158 = arith.constant 2.500000e-01 : f32
    %345 = vector.broadcast %cst_158 : f32 to vector<4x2xf32>
    %346 = arith.mulf %344, %345 : vector<4x2xf32>
    %cst_159 = arith.constant dense<0.000000e+00> : vector<2x32xf32>
    %347 = tpu.matmul %346, %331, %cst_159 {dimension_numbers = #tpu.dot_dimension_numbers<[0], [0], [1], [1], [0, 1, 1, 1], [], []>} : vector<4x2xf32>, vector<4x32xf32>, vector<2x32xf32> -> vector<2x32xf32>
    %cst_160 = arith.constant dense<0.000000e+00> : vector<2xf32>
    %348 = vector.multi_reduction <add>, %346, %cst_160 [0] : vector<4x2xf32> to vector<2xf32>
    %349 = vector.shape_cast %348 : vector<2xf32> to vector<1x2xf32>
    %cst_161 = arith.constant dense<0.000000e+00> : vector<4x32xf32>
    %350 = tpu.matmul %346, %308, %cst_161 {dimension_numbers = #tpu.dot_dimension_numbers<[1], [0], [0], [1], [0, 0, 1, 1], [], []>} : vector<4x2xf32>, vector<2x32xf32>, vector<4x32xf32> -> vector<4x32xf32>
    %cst_162 = arith.constant 0.000000e+00 : f32
    %351 = vector.broadcast %cst_162 : f32 to vector<4x32xf32>
    %352 = arith.cmpf ogt, %331, %351 : vector<4x32xf32>
    %cst_163 = arith.constant 0.000000e+00 : f32
    %353 = vector.broadcast %cst_163 : f32 to vector<4x32xf32>
    %354 = arith.select %352, %350, %353 : vector<4x32xi1>, vector<4x32xf32>
    %cst_164 = arith.constant dense<0.000000e+00> : vector<32x32xf32>
    %355 = tpu.matmul %354, %326, %cst_164 {dimension_numbers = #tpu.dot_dimension_numbers<[0], [0], [1], [1], [0, 1, 1, 1], [], []>} : vector<4x32xf32>, vector<4x32xf32>, vector<32x32xf32> -> vector<32x32xf32>
    %cst_165 = arith.constant dense<0.000000e+00> : vector<32xf32>
    %356 = vector.multi_reduction <add>, %354, %cst_165 [0] : vector<4x32xf32> to vector<32xf32>
    %357 = vector.shape_cast %356 : vector<32xf32> to vector<1x32xf32>
    %cst_166 = arith.constant dense<0.000000e+00> : vector<4x32xf32>
    %358 = tpu.matmul %354, %290, %cst_166 {dimension_numbers = #tpu.dot_dimension_numbers<[1], [0], [0], [1], [0, 0, 1, 1], [], []>} : vector<4x32xf32>, vector<32x32xf32>, vector<4x32xf32> -> vector<4x32xf32>
    %cst_167 = arith.constant 0.000000e+00 : f32
    %359 = vector.broadcast %cst_167 : f32 to vector<4x32xf32>
    %360 = arith.cmpf ogt, %326, %359 : vector<4x32xf32>
    %cst_168 = arith.constant 0.000000e+00 : f32
    %361 = vector.broadcast %cst_168 : f32 to vector<4x32xf32>
    %362 = arith.select %360, %358, %361 : vector<4x32xi1>, vector<4x32xf32>
    %cst_169 = arith.constant dense<0.000000e+00> : vector<32x192xf32>
    %363 = tpu.matmul %362, %319, %cst_169 {dimension_numbers = #tpu.dot_dimension_numbers<[0], [0], [1], [1], [0, 1, 1, 1], [], []>} : vector<4x32xf32>, vector<4x192xf32>, vector<32x192xf32> -> vector<32x192xf32>
    %cst_170 = arith.constant dense<0.000000e+00> : vector<32xf32>
    %364 = vector.multi_reduction <add>, %362, %cst_170 [0] : vector<4x32xf32> to vector<32xf32>
    %365 = vector.shape_cast %364 : vector<32xf32> to vector<1x32xf32>
    %cst_171 = arith.constant 5.000000e-04 : f32
    %366 = vector.broadcast %cst_171 : f32 to vector<32x192xf32>
    %367 = arith.mulf %366, %272 : vector<32x192xf32>
    %368 = arith.addf %363, %367 : vector<32x192xf32>
    %cst_172 = arith.constant 0.899999976 : f32
    %369 = vector.broadcast %cst_172 : f32 to vector<32x192xf32>
    %370 = arith.mulf %369, %269 : vector<32x192xf32>
    %371 = arith.addf %370, %368 : vector<32x192xf32>
    %cst_173 = arith.constant 0.00999999977 : f32
    %372 = vector.broadcast %cst_173 : f32 to vector<32x192xf32>
    %373 = arith.mulf %372, %371 : vector<32x192xf32>
    %374 = arith.subf %272, %373 : vector<32x192xf32>
    %cst_174 = arith.constant 5.000000e-04 : f32
    %375 = vector.broadcast %cst_174 : f32 to vector<1x32xf32>
    %376 = arith.mulf %375, %281 : vector<1x32xf32>
    %377 = arith.addf %365, %376 : vector<1x32xf32>
    %cst_175 = arith.constant 0.899999976 : f32
    %378 = vector.broadcast %cst_175 : f32 to vector<1x32xf32>
    %379 = arith.mulf %378, %278 : vector<1x32xf32>
    %380 = arith.addf %379, %377 : vector<1x32xf32>
    %cst_176 = arith.constant 0.00999999977 : f32
    %381 = vector.broadcast %cst_176 : f32 to vector<1x32xf32>
    %382 = arith.mulf %381, %380 : vector<1x32xf32>
    %383 = arith.subf %281, %382 : vector<1x32xf32>
    %cst_177 = arith.constant 5.000000e-04 : f32
    %384 = vector.broadcast %cst_177 : f32 to vector<32x32xf32>
    %385 = arith.mulf %384, %290 : vector<32x32xf32>
    %386 = arith.addf %355, %385 : vector<32x32xf32>
    %cst_178 = arith.constant 0.899999976 : f32
    %387 = vector.broadcast %cst_178 : f32 to vector<32x32xf32>
    %388 = arith.mulf %387, %287 : vector<32x32xf32>
    %389 = arith.addf %388, %386 : vector<32x32xf32>
    %cst_179 = arith.constant 0.00999999977 : f32
    %390 = vector.broadcast %cst_179 : f32 to vector<32x32xf32>
    %391 = arith.mulf %390, %389 : vector<32x32xf32>
    %392 = arith.subf %290, %391 : vector<32x32xf32>
    %cst_180 = arith.constant 5.000000e-04 : f32
    %393 = vector.broadcast %cst_180 : f32 to vector<1x32xf32>
    %394 = arith.mulf %393, %299 : vector<1x32xf32>
    %395 = arith.addf %357, %394 : vector<1x32xf32>
    %cst_181 = arith.constant 0.899999976 : f32
    %396 = vector.broadcast %cst_181 : f32 to vector<1x32xf32>
    %397 = arith.mulf %396, %296 : vector<1x32xf32>
    %398 = arith.addf %397, %395 : vector<1x32xf32>
    %cst_182 = arith.constant 0.00999999977 : f32
    %399 = vector.broadcast %cst_182 : f32 to vector<1x32xf32>
    %400 = arith.mulf %399, %398 : vector<1x32xf32>
    %401 = arith.subf %299, %400 : vector<1x32xf32>
    %cst_183 = arith.constant 5.000000e-04 : f32
    %402 = vector.broadcast %cst_183 : f32 to vector<2x32xf32>
    %403 = arith.mulf %402, %308 : vector<2x32xf32>
    %404 = arith.addf %347, %403 : vector<2x32xf32>
    %cst_184 = arith.constant 0.899999976 : f32
    %405 = vector.broadcast %cst_184 : f32 to vector<2x32xf32>
    %406 = arith.mulf %405, %305 : vector<2x32xf32>
    %407 = arith.addf %406, %404 : vector<2x32xf32>
    %cst_185 = arith.constant 0.00999999977 : f32
    %408 = vector.broadcast %cst_185 : f32 to vector<2x32xf32>
    %409 = arith.mulf %408, %407 : vector<2x32xf32>
    %410 = arith.subf %308, %409 : vector<2x32xf32>
    %cst_186 = arith.constant 5.000000e-04 : f32
    %411 = vector.broadcast %cst_186 : f32 to vector<1x2xf32>
    %412 = arith.mulf %411, %317 : vector<1x2xf32>
    %413 = arith.addf %349, %412 : vector<1x2xf32>
    %cst_187 = arith.constant 0.899999976 : f32
    %414 = vector.broadcast %cst_187 : f32 to vector<1x2xf32>
    %415 = arith.mulf %414, %314 : vector<1x2xf32>
    %416 = arith.addf %415, %413 : vector<1x2xf32>
    %cst_188 = arith.constant 0.00999999977 : f32
    %417 = vector.broadcast %cst_188 : f32 to vector<1x2xf32>
    %418 = arith.mulf %417, %416 : vector<1x2xf32>
    %419 = arith.subf %317, %418 : vector<1x2xf32>
    %c0_189 = arith.constant 0 : index
    %c0_190 = arith.constant 0 : index
    %420 = vector.load %arg2[%c0_189, %c0_190] : memref<2x192xf32, #tpu.memory_space<vmem>>, vector<2x192xf32>
    %cst_191 = arith.constant dense<0.000000e+00> : vector<2x32xf32>
    %421 = tpu.matmul %420, %374, %cst_191 {dimension_numbers = #tpu.dot_dimension_numbers<[1], [1], [0], [0], [0, 0, 1, 0], [], []>} : vector<2x192xf32>, vector<32x192xf32>, vector<2x32xf32> -> vector<2x32xf32>
    %422 = vector.broadcast %383 : vector<1x32xf32> to vector<2x32xf32>
    %423 = arith.addf %421, %422 : vector<2x32xf32>
    %cst_192 = arith.constant 0.000000e+00 : f32
    %424 = vector.broadcast %cst_192 : f32 to vector<2x32xf32>
    %425 = arith.maximumf %423, %424 : vector<2x32xf32>
    %cst_193 = arith.constant dense<0.000000e+00> : vector<2x32xf32>
    %426 = tpu.matmul %425, %392, %cst_193 {dimension_numbers = #tpu.dot_dimension_numbers<[1], [1], [0], [0], [0, 0, 1, 0], [], []>} : vector<2x32xf32>, vector<32x32xf32>, vector<2x32xf32> -> vector<2x32xf32>
    %427 = vector.broadcast %401 : vector<1x32xf32> to vector<2x32xf32>
    %428 = arith.addf %426, %427 : vector<2x32xf32>
    %cst_194 = arith.constant 0.000000e+00 : f32
    %429 = vector.broadcast %cst_194 : f32 to vector<2x32xf32>
    %430 = arith.maximumf %428, %429 : vector<2x32xf32>
    %cst_195 = arith.constant dense<0.000000e+00> : vector<2x2xf32>
    %431 = tpu.matmul %430, %410, %cst_195 {dimension_numbers = #tpu.dot_dimension_numbers<[1], [1], [0], [0], [0, 0, 1, 0], [], []>} : vector<2x32xf32>, vector<2x32xf32>, vector<2x2xf32> -> vector<2x2xf32>
    %432 = vector.broadcast %419 : vector<1x2xf32> to vector<2x2xf32>
    %433 = arith.addf %431, %432 : vector<2x2xf32>
    %c0_196 = arith.constant 0 : index
    %c0_197 = arith.constant 0 : index
    %434 = vector.load %arg9[%c0_196, %c0_197] : memref<2x2xf32, #tpu.memory_space<vmem>>, vector<2x2xf32>
    tpu.vector_store %arg9[%c0_196, %c0_197], %433 {strides = array<i32>} : memref<2x2xf32, #tpu.memory_space<vmem>>, vector<2x2xf32>,
    %c0_198 = arith.constant 0 : index
    %c0_199 = arith.constant 0 : index
    %435 = vector.load %arg10[%c0_198, %c0_199] : memref<2x32xf32, #tpu.memory_space<vmem>>, vector<2x32xf32>
    tpu.vector_store %arg10[%c0_198, %c0_199], %430 {strides = array<i32>} : memref<2x32xf32, #tpu.memory_space<vmem>>, vector<2x32xf32>,
    return
  }
}

</mosaic_0001>

<llo_original>
// kernel: distill_forward.1
$region0: #{distill_forward.1}
  #allocation0 [shape = 'u32[]', space=smem, size = 0x4, offset = 0x4, fixed_abs, tag = 'smem constant byte address 0x4 - core index']
  #allocation1 [shape = 'u32[144,128]{1,0:T(1,128)}', space=vmem, size = 0x12000, scoped, tag = 'internal scratch']
  %s0 = inlined_call_operand.vmem [shape: f32[4,4,192], index: 0, kind: input, shape index: {}]
  %s1 = inlined_call_operand.vmem [shape: f32[4,4,2], index: 1, kind: input, shape index: {}]
  %s2 = inlined_call_operand.vmem [shape: f32[2,192], index: 2, kind: input, shape index: {}]
  %s3 = inlined_call_operand.vmem [shape: f32[32,192], index: 3, kind: input, shape index: {}]
  %s4 = inlined_call_operand.vmem [shape: f32[1,32], index: 4, kind: input, shape index: {}]
  %s5 = inlined_call_operand.vmem [shape: f32[32,32], index: 5, kind: input, shape index: {}]
  %s6 = inlined_call_operand.vmem [shape: f32[1,32], index: 6, kind: input, shape index: {}]
  %s7 = inlined_call_operand.vmem [shape: f32[2,32], index: 7, kind: input, shape index: {}]
  %s8 = inlined_call_operand.vmem [shape: f32[1,2], index: 8, kind: input, shape index: {}]
  %s9 = inlined_call_operand.hbm [shape: f32[2,2], index: 9, kind: output, shape index: {0}]
  %s10 = inlined_call_operand.hbm [shape: f32[2,32], index: 10, kind: output, shape index: {1}]
  %11 = xla_tuple %s9, %s10
  %s12 = sld [smem:[#allocation0]]
  $region54: #{distill_forward.1} parent=0
    _
  %s14 = ssub.s32 1, %s12
  %s15 = scalar_select 0, %s14, %s12
  $region1: #{distill_forward.1} parent=0
    #allocation2 [shape = 'u8[1024]{0}', space=vmem, size = 0x400, scoped, tag = 'output window, operand 0, single buffered']
    #allocation3 [shape = 's32[1]{0}', space=sflag, size = 0x4, scoped, tag = 'scoped memory for distill_forward.1']
    #allocation4 [shape = 'u8[1024]{0}', space=vmem, size = 0x400, scoped, tag = 'output window, operand 1, single buffered']
    #allocation5 [shape = 's32[1]{0}', space=sflag, size = 0x4, scoped, tag = 'scoped memory for distill_forward.1']
    %16 = vsyncpa [#allocation3], 0
    %17 = vsyncpa [#allocation5], 0
    // Predicated region
    $region2: #{distill_forward.1} parent=1 // pred_check
      _
    $region3: #{distill_forward.1} parent=1 // pred_check_branch
      %19 = sbr.rel (0) target = $region5
    $region4: #{distill_forward.1} parent=1 // pred_region
      _
    $region5: #{distill_forward.1} parent=1 // pred_fallthru
      _
    // Predicated region
    $region6: #{distill_forward.1} parent=1 // pred_check
      _
    $region7: #{distill_forward.1} parent=1 // pred_check_branch
      %21 = sbr.rel (0) target = $region9
    $region8: #{distill_forward.1} parent=1 // pred_region
      _
    $region9: #{distill_forward.1} parent=1 // pred_fallthru
      _
    // Predicated region
    $region10: #{distill_forward.1} parent=1 // pred_check
      _
    $region11: #{distill_forward.1} parent=1 // pred_check_branch
      %23 = sbr.rel (0) target = $region13
    $region12: #{distill_forward.1} parent=1 // pred_region
      _
    $region13: #{distill_forward.1} parent=1 // pred_fallthru
      _
    // Predicated region
    $region14: #{distill_forward.1} parent=1 // pred_check
      _
    $region15: #{distill_forward.1} parent=1 // pred_check_branch
      %25 = sbr.rel (0) target = $region17
    $region16: #{distill_forward.1} parent=1 // pred_region
      _
    $region17: #{distill_forward.1} parent=1 // pred_fallthru
      _
    // Predicated region
    $region18: #{distill_forward.1} parent=1 // pred_check
      _
    $region19: #{distill_forward.1} parent=1 // pred_check_branch
      %27 = sbr.rel (0) target = $region21
    $region20: #{distill_forward.1} parent=1 // pred_region
      _
    $region21: #{distill_forward.1} parent=1 // pred_fallthru
      _
    // Predicated region
    $region22: #{distill_forward.1} parent=1 // pred_check
      _
    $region23: #{distill_forward.1} parent=1 // pred_check_branch
      %29 = sbr.rel (0) target = $region25
    $region24: #{distill_forward.1} parent=1 // pred_region
      _
    $region25: #{distill_forward.1} parent=1 // pred_fallthru
      _
    // Predicated region
    $region26: #{distill_forward.1} parent=1 // pred_check
      _
    $region27: #{distill_forward.1} parent=1 // pred_check_branch
      %31 = sbr.rel (0) target = $region29
    $region28: #{distill_forward.1} parent=1 // pred_region
      _
    $region29: #{distill_forward.1} parent=1 // pred_fallthru
      _
    // Predicated region
    $region30: #{distill_forward.1} parent=1 // pred_check
      _
    $region31: #{distill_forward.1} parent=1 // pred_check_branch
      %33 = sbr.rel (0) target = $region33
    $region32: #{distill_forward.1} parent=1 // pred_region
      _
    $region33: #{distill_forward.1} parent=1 // pred_fallthru
      _
    // Predicated region
    $region34: #{distill_forward.1} parent=1 // pred_check
      _
    $region35: #{distill_forward.1} parent=1 // pred_check_branch
      %35 = sbr.rel (0) target = $region37
    $region36: #{distill_forward.1} parent=1 // pred_region
      _
    $region37: #{distill_forward.1} parent=1 // pred_fallthru
      _
    %v36 = vld [vmem:[%s3] sm:$0xff]
    %v37 = vld [vmem:[%s3 + $0x8] sm:$0xff]
    %v38 = vld [vmem:[%s3 + $0x10] sm:$0xff]
    %v39 = vld [vmem:[%s3 + $0x18] sm:$0xff]
    %v40 = vld [vmem:[%s3 + $0x20] sm:$0xff]
    %v41 = vld [vmem:[%s3 + $0x28] sm:$0xff]
    %v42 = vld [vmem:[%s3 + $0x30] sm:$0xff]
    %v43 = vld [vmem:[%s3 + $0x38] sm:$0xff]
    %v44 = vld [vmem:[%s4] sm:$0x1]
    %v45 = vld [vmem:[%s5] sm:$0xff]
    %v46 = vld [vmem:[%s5 + $0x8] sm:$0xff]
    %v47 = vld [vmem:[%s5 + $0x10] sm:$0xff]
    %v48 = vld [vmem:[%s5 + $0x18] sm:$0xff]
    %v49 = vld [vmem:[%s6] sm:$0x1]
    %v50 = vld [vmem:[%s7] sm:$0x3]
    %v51 = vld [vmem:[%s8] sm:$0x1]
    %v52 = vld [vmem:[%s0] sm:$0xff]
    %v53 = vld [vmem:[%s1] sm:$0xf]
    %v55 = vlaneseq
    %v56 = vshrl.u32 %v55, 7
    %v57 = vsub.s32 0, %v56
    %v58 = vrot.slane %v44, %v57
    %v61 = vcombine.high %v52, %v52
    %vm62 = vcmask 523264
    %v63 = vsel %vm62, %v61, 0
    %v66 = vsel %vm62, %v37, 0
    %v69 = vsel %vm62, %v39, 0
    %v72 = vsel %vm62, %v41, 0
    %v75 = vsel %vm62, %v43, 0
    %77 = vmatprep.subr.mxu0 %v66
    %78 = vmatpush1.xpose.msra.mxu0 %v36
    %79 = vmatprep.subr.mxu0 %v69
    %80 = vmatpush1.xpose.msra.mxu0 %v38
    %81 = vmatprep.subr.mxu0 %v72
    %82 = vmatpush1.xpose.msra.mxu0 %v40
    %83 = vmatprep.subr.mxu0 %v75
    %84 = vmatpush1.xpose.msra.mxu0 %v42
    %85 = vmatprep.subr.mxu0 0.0
    %86 = vmatpush1.xpose.msra.mxu0 0.0
    %87 = vmatprep.subr.mxu0 0.0
    %88 = vmatpush1.xpose.msra.mxu0 0.0
    %89 = vmatprep.subr.mxu0 0.0
    %90 = vmatpush1.xpose.msra.mxu0 0.0
    %91 = vmatprep.subr.mxu0 0.0
    %92 = vmatpush1.xpose.msra.mxu0 0.0
    %93 = vmatprep.subr.mxu0 0.0
    %94 = vmatpush1.xpose.msra.mxu0 0.0
    %95 = vmatprep.subr.mxu0 0.0
    %96 = vmatpush1.xpose.msra.mxu0 0.0
    %97 = vmatprep.subr.mxu0 0.0
    %98 = vmatpush1.xpose.msra.mxu0 0.0
    %99 = vmatprep.subr.mxu0 0.0
    %100 = vmatpush1.xpose.msra.mxu0 0.0
    %101 = vmatprep.subr.mxu0 0.0
    %102 = vmatpush1.xpose.msra.mxu0 0.0
    %103 = vmatprep.subr.mxu0 0.0
    %104 = vmatpush1.xpose.msra.mxu0 0.0
    %105 = vmatprep.subr.mxu0 0.0
    %106 = vmatpush1.xpose.msra.mxu0 0.0
    %107 = vmatprep.subr.mxu0 0.0
    %108 = vmatpush1.xpose.msra.mxu0 0.0
    %109 = vmatprep.subr.mxu0 0.0
    %110 = vmatpush1.xpose.msra.mxu0 0.0
    %111 = vmatprep.subr.mxu0 0.0
    %112 = vmatpush1.xpose.msra.mxu0 0.0
    %113 = vmatprep.subr.mxu0 0.0
    %114 = vmatpush1.xpose.msra.mxu0 0.0
    %115 = vmatprep.subr.mxu0 0.0
    %116 = vmatpush1.xpose.msra.mxu0 0.0
    %117 = vmatprep.subr.mxu0 0.0
    %118 = vmatpush1.xpose.msra.mxu0 0.0
    %119 = vmatprep.subr.mxu0 0.0
    %120 = vmatpush1.xpose.msra.mxu0 0.0
    %121 = vmatprep.subr.mxu0 0.0
    %122 = vmatpush1.xpose.msra.mxu0 0.0
    %123 = vmatprep.subr.mxu0 0.0
    %124 = vmatpush1.xpose.msra.mxu0 0.0
    %125 = vmatprep.subr.mxu0 0.0
    %126 = vmatpush1.xpose.msra.mxu0 0.0
    %127 = vmatprep.subr.mxu0 0.0
    %128 = vmatpush1.xpose.msra.mxu0 0.0
    %129 = vmatprep.subr.mxu0 0.0
    %130 = vmatpush1.xpose.msra.mxu0 0.0
    %131 = vmatprep.subr.mxu0 0.0
    %132 = vmatpush1.xpose.msra.mxu0 0.0
    %133 = vmatprep.subr.mxu0 0.0
    %134 = vmatpush1.xpose.msra.mxu0 0.0
    %135 = vmatprep.subr.mxu0 0.0
    %136 = vmatpush1.xpose.msra.mxu0 0.0
    %137 = vmatprep.subr.mxu0 0.0
    %138 = vmatpush1.xpose.msra.mxu0 0.0
    %139 = vmatprep.subr.mxu0 0.0
    %140 = vmatpush1.xpose.msra.mxu0 0.0
    %141 = vmatprep.mubr.f32.mxu0 %v63
    %142 = vmatmul.mubr.f32.gmra.mrb[0].mxu0 %v52
    %v143 = vpop.f32.mrb[0].mxu0
    %v144 = vadd.f32 %v58, %v143
    %v145 = vpop.f32.mrb[0].mxu0
    %146 = vdwg.mxu0
    %v147 = vmax.f32 %v144, 0.0
    %v149 = vlaneseq
    %v150 = vshrl.u32 %v149, 7
    %v151 = vsub.s32 0, %v150
    %v152 = vrot.slane %v49, %v151
    %vm154 = vcmask 261120
    %v156 = vsel %vm154, %v147, 0
    %v159 = vsel %vm154, %v45, 0
    %v162 = vsel %vm154, %v46, 0
    %v165 = vsel %vm154, %v47, 0
    %v168 = vsel %vm154, %v48, 0
    %170 = vmatprep.subr.mxu0 0.0
    %171 = vmatpush1.xpose.msra.mxu0 %v159
    %172 = vmatprep.subr.mxu0 0.0
    %173 = vmatpush1.xpose.msra.mxu0 %v162
    %174 = vmatprep.subr.mxu0 0.0
    %175 = vmatpush1.xpose.msra.mxu0 %v165
    %176 = vmatprep.subr.mxu0 0.0
    %177 = vmatpush1.xpose.msra.mxu0 %v168
    %178 = vmatprep.subr.mxu0 0.0
    %179 = vmatpush1.xpose.msra.mxu0 0.0
    %180 = vmatprep.subr.mxu0 0.0
    %181 = vmatpush1.xpose.msra.mxu0 0.0
    %182 = vmatprep.subr.mxu0 0.0
    %183 = vmatpush1.xpose.msra.mxu0 0.0
    %184 = vmatprep.subr.mxu0 0.0
    %185 = vmatpush1.xpose.msra.mxu0 0.0
    %186 = vmatprep.subr.mxu0 0.0
    %187 = vmatpush1.xpose.msra.mxu0 0.0
    %188 = vmatprep.subr.mxu0 0.0
    %189 = vmatpush1.xpose.msra.mxu0 0.0
    %190 = vmatprep.subr.mxu0 0.0
    %191 = vmatpush1.xpose.msra.mxu0 0.0
    %192 = vmatprep.subr.mxu0 0.0
    %193 = vmatpush1.xpose.msra.mxu0 0.0
    %194 = vmatprep.subr.mxu0 0.0
    %195 = vmatpush1.xpose.msra.mxu0 0.0
    %196 = vmatprep.subr.mxu0 0.0
    %197 = vmatpush1.xpose.msra.mxu0 0.0
    %198 = vmatprep.subr.mxu0 0.0
    %199 = vmatpush1.xpose.msra.mxu0 0.0
    %200 = vmatprep.subr.mxu0 0.0
    %201 = vmatpush1.xpose.msra.mxu0 0.0
    %202 = vmatprep.subr.mxu0 0.0
    %203 = vmatpush1.xpose.msra.mxu0 0.0
    %204 = vmatprep.subr.mxu0 0.0
    %205 = vmatpush1.xpose.msra.mxu0 0.0
    %206 = vmatprep.subr.mxu0 0.0
    %207 = vmatpush1.xpose.msra.mxu0 0.0
    %208 = vmatprep.subr.mxu0 0.0
    %209 = vmatpush1.xpose.msra.mxu0 0.0
    %210 = vmatprep.subr.mxu0 0.0
    %211 = vmatpush1.xpose.msra.mxu0 0.0
    %212 = vmatprep.subr.mxu0 0.0
    %213 = vmatpush1.xpose.msra.mxu0 0.0
    %214 = vmatprep.subr.mxu0 0.0
    %215 = vmatpush1.xpose.msra.mxu0 0.0
    %216 = vmatprep.subr.mxu0 0.0
    %217 = vmatpush1.xpose.msra.mxu0 0.0
    %218 = vmatprep.subr.mxu0 0.0
    %219 = vmatpush1.xpose.msra.mxu0 0.0
    %220 = vmatprep.subr.mxu0 0.0
    %221 = vmatpush1.xpose.msra.mxu0 0.0
    %222 = vmatprep.subr.mxu0 0.0
    %223 = vmatpush1.xpose.msra.mxu0 0.0
    %224 = vmatprep.subr.mxu0 0.0
    %225 = vmatpush1.xpose.msra.mxu0 0.0
    %226 = vmatprep.subr.mxu0 0.0
    %227 = vmatpush1.xpose.msra.mxu0 0.0
    %228 = vmatprep.subr.mxu0 0.0
    %229 = vmatpush1.xpose.msra.mxu0 0.0
    %230 = vmatprep.subr.mxu0 0.0
    %231 = vmatpush1.xpose.msra.mxu0 0.0
    %232 = vmatprep.subr.mxu0 0.0
    %233 = vmatpush1.xpose.msra.mxu0 0.0
    %234 = vmatprep.mubr.f32.mxu0 0.0
    %235 = vmatmul.mubr.f32.gmra.mrb[0].mxu0 %v156
    %v236 = vpop.f32.mrb[0].mxu0
    %v237 = vadd.f32 %v152, %v236
    %v238 = vpop.f32.mrb[0].mxu0
    %239 = vdwg.mxu0
    %v240 = vmax.f32 %v237, 0.0
    %v242 = vlaneseq
    %v243 = vshrl.u32 %v242, 7
    %v244 = vsub.s32 0, %v243
    %v245 = vrot.slane %v51, %v244
    %v248 = vsel %vm154, %v240, 0
    %v251 = vsel %vm154, %v50, 0
    %253 = vmatprep.subr.mxu0 0.0
    %254 = vmatpush1.xpose.msra.mxu0 %v251
    %255 = vmatprep.subr.mxu0 0.0
    %256 = vmatpush1.xpose.msra.mxu0 0.0
    %257 = vmatprep.subr.mxu0 0.0
    %258 = vmatpush1.xpose.msra.mxu0 0.0
    %259 = vmatprep.subr.mxu0 0.0
    %260 = vmatpush1.xpose.msra.mxu0 0.0
    %261 = vmatprep.subr.mxu0 0.0
    %262 = vmatpush1.xpose.msra.mxu0 0.0
    %263 = vmatprep.subr.mxu0 0.0
    %264 = vmatpush1.xpose.msra.mxu0 0.0
    %265 = vmatprep.subr.mxu0 0.0
    %266 = vmatpush1.xpose.msra.mxu0 0.0
    %267 = vmatprep.subr.mxu0 0.0
    %268 = vmatpush1.xpose.msra.mxu0 0.0
    %269 = vmatprep.subr.mxu0 0.0
    %270 = vmatpush1.xpose.msra.mxu0 0.0
    %271 = vmatprep.subr.mxu0 0.0
    %272 = vmatpush1.xpose.msra.mxu0 0.0
    %273 = vmatprep.subr.mxu0 0.0
    %274 = vmatpush1.xpose.msra.mxu0 0.0
    %275 = vmatprep.subr.mxu0 0.0
    %276 = vmatpush1.xpose.msra.mxu0 0.0
    %277 = vmatprep.subr.mxu0 0.0
    %278 = vmatpush1.xpose.msra.mxu0 0.0
    %279 = vmatprep.subr.mxu0 0.0
    %280 = vmatpush1.xpose.msra.mxu0 0.0
    %281 = vmatprep.subr.mxu0 0.0
    %282 = vmatpush1.xpose.msra.mxu0 0.0
    %283 = vmatprep.subr.mxu0 0.0
    %284 = vmatpush1.xpose.msra.mxu0 0.0
    %285 = vmatprep.subr.mxu0 0.0
    %286 = vmatpush1.xpose.msra.mxu0 0.0
    %287 = vmatprep.subr.mxu0 0.0
    %288 = vmatpush1.xpose.msra.mxu0 0.0
    %289 = vmatprep.subr.mxu0 0.0
    %290 = vmatpush1.xpose.msra.mxu0 0.0
    %291 = vmatprep.subr.mxu0 0.0
    %292 = vmatpush1.xpose.msra.mxu0 0.0
    %293 = vmatprep.subr.mxu0 0.0
    %294 = vmatpush1.xpose.msra.mxu0 0.0
    %295 = vmatprep.subr.mxu0 0.0
    %296 = vmatpush1.xpose.msra.mxu0 0.0
    %297 = vmatprep.subr.mxu0 0.0
    %298 = vmatpush1.xpose.msra.mxu0 0.0
    %299 = vmatprep.subr.mxu0 0.0
    %300 = vmatpush1.xpose.msra.mxu0 0.0
    %301 = vmatprep.subr.mxu0 0.0
    %302 = vmatpush1.xpose.msra.mxu0 0.0
    %303 = vmatprep.subr.mxu0 0.0
    %304 = vmatpush1.xpose.msra.mxu0 0.0
    %305 = vmatprep.subr.mxu0 0.0
    %306 = vmatpush1.xpose.msra.mxu0 0.0
    %307 = vmatprep.subr.mxu0 0.0
    %308 = vmatpush1.xpose.msra.mxu0 0.0
    %309 = vmatprep.subr.mxu0 0.0
    %310 = vmatpush1.xpose.msra.mxu0 0.0
    %311 = vmatprep.subr.mxu0 0.0
    %312 = vmatpush1.xpose.msra.mxu0 0.0
    %313 = vmatprep.subr.mxu0 0.0
    %314 = vmatpush1.xpose.msra.mxu0 0.0
    %315 = vmatprep.subr.mxu0 0.0
    %316 = vmatpush1.xpose.msra.mxu0 0.0
    %317 = vmatprep.mubr.f32.mxu0 0.0
    %318 = vmatmul.mubr.f32.gmra.mrb[0].mxu0 %v248
    %v319 = vpop.f32.mrb[0].mxu0
    %v320 = vadd.f32 %v245, %v319
    %v321 = vpop.f32.mrb[0].mxu0
    %322 = vdwg.mxu0
    %vm323 = vcmask 11264
    %v324 = vsel %vm323, %v320, -inf
    %325 = vmax.xlane.f32.xlu0 %v324
    %v326 = vpop.xlane.xlu0 %325
    %v327 = vsub.f32 %v320, %v326
    %v328 = vmul.f32 %v327, 1.442695
    %v329 = vpow.pop %v328
    %v330 = vsel %vm323, %v329, 0.0
    %331 = vadd.xlane.f32.xlu0 %v330
    %v332 = vpop.xlane.xlu0 %331
    %v333 = vrcp.pop %v332
    %v334 = vmul.f32 %v329, %v333
    %v335 = vsub.f32 %v334, %v53
    %v336 = vmul.f32 %v335, 0.25
    %v337 = vsel %vm323, %v336, 0.0
    %v338 = vrot.slane %v337, 4
    %v339 = vadd.f32 %v337, %v338
    %v340 = vrot.slane %v339, 2
    %v341 = vadd.f32 %v339, %v340
    %v342 = vrot.slane %v341, 1
    %v343 = vadd.f32 %v341, %v342
    %vm344 = vcmask 15360
    %v346 = vsel %vm344, %v336, 0
    %vm348 = vcmask 1041408
    %v349 = vsel %vm348, %v50, 0
    %351 = vmatprep.subr.mxu0 0.0
    %352 = vmatpush1.msra.mxu0 %v349
    %353 = vmatprep.subr.mxu0 0.0
    %354 = vmatpush1.msra.mxu0 0.0
    %355 = vmatprep.subr.mxu0 0.0
    %356 = vmatpush1.msra.mxu0 0.0
    %357 = vmatprep.subr.mxu0 0.0
    %358 = vmatpush1.msra.mxu0 0.0
    %359 = vmatprep.subr.mxu0 0.0
    %360 = vmatpush1.msra.mxu0 0.0
    %361 = vmatprep.subr.mxu0 0.0
    %362 = vmatpush1.msra.mxu0 0.0
    %363 = vmatprep.subr.mxu0 0.0
    %364 = vmatpush1.msra.mxu0 0.0
    %365 = vmatprep.subr.mxu0 0.0
    %366 = vmatpush1.msra.mxu0 0.0
    %367 = vmatprep.subr.mxu0 0.0
    %368 = vmatpush1.msra.mxu0 0.0
    %369 = vmatprep.subr.mxu0 0.0
    %370 = vmatpush1.msra.mxu0 0.0
    %371 = vmatprep.subr.mxu0 0.0
    %372 = vmatpush1.msra.mxu0 0.0
    %373 = vmatprep.subr.mxu0 0.0
    %374 = vmatpush1.msra.mxu0 0.0
    %375 = vmatprep.subr.mxu0 0.0
    %376 = vmatpush1.msra.mxu0 0.0
    %377 = vmatprep.subr.mxu0 0.0
    %378 = vmatpush1.msra.mxu0 0.0
    %379 = vmatprep.subr.mxu0 0.0
    %380 = vmatpush1.msra.mxu0 0.0
    %381 = vmatprep.subr.mxu0 0.0
    %382 = vmatpush1.msra.mxu0 0.0
    %383 = vmatprep.subr.mxu0 0.0
    %384 = vmatpush1.msra.mxu0 0.0
    %385 = vmatprep.subr.mxu0 0.0
    %386 = vmatpush1.msra.mxu0 0.0
    %387 = vmatprep.subr.mxu0 0.0
    %388 = vmatpush1.msra.mxu0 0.0
    %389 = vmatprep.subr.mxu0 0.0
    %390 = vmatpush1.msra.mxu0 0.0
    %391 = vmatprep.subr.mxu0 0.0
    %392 = vmatpush1.msra.mxu0 0.0
    %393 = vmatprep.subr.mxu0 0.0
    %394 = vmatpush1.msra.mxu0 0.0
    %395 = vmatprep.subr.mxu0 0.0
    %396 = vmatpush1.msra.mxu0 0.0
    %397 = vmatprep.subr.mxu0 0.0
    %398 = vmatpush1.msra.mxu0 0.0
    %399 = vmatprep.subr.mxu0 0.0
    %400 = vmatpush1.msra.mxu0 0.0
    %401 = vmatprep.subr.mxu0 0.0
    %402 = vmatpush1.msra.mxu0 0.0
    %403 = vmatprep.subr.mxu0 0.0
    %404 = vmatpush1.msra.mxu0 0.0
    %405 = vmatprep.subr.mxu0 0.0
    %406 = vmatpush1.msra.mxu0 0.0
    %407 = vmatprep.subr.mxu0 0.0
    %408 = vmatpush1.msra.mxu0 0.0
    %409 = vmatprep.subr.mxu0 0.0
    %410 = vmatpush1.msra.mxu0 0.0
    %411 = vmatprep.subr.mxu0 0.0
    %412 = vmatpush1.msra.mxu0 0.0
    %413 = vmatprep.subr.mxu0 0.0
    %414 = vmatpush1.msra.mxu0 0.0
    %415 = vmatprep.mubr.f32.mxu0 0.0
    %416 = vmatmul.mubr.f32.gmra.mrb[0].mxu0 %v346
    %v417 = vpop.f32.mrb[0].mxu0
    %v418 = vadd.f32 0.0, %v417
    %v419 = vpop.f32.mrb[0].mxu0
    %420 = vdwg.mxu0
    %vm421 = vcmp.gt.f32.partialorder %v240, 0.0
    %v422 = vsel %vm421, %v418, 0.0
    %vm423 = vcmask 257024
    %v424 = vsel %vm423, %v422, 0.0
    %v425 = vrot.slane %v424, 4
    %v426 = vadd.f32 %v424, %v425
    %v427 = vrot.slane %v426, 2
    %v428 = vadd.f32 %v426, %v427
    %v429 = vrot.slane %v428, 1
    %v430 = vadd.f32 %v428, %v429
    %v432 = vsel %vm154, %v422, 0
    %434 = vmatprep.subr.mxu0 0.0
    %435 = vmatpush1.msra.mxu0 %v45
    %436 = vmatprep.subr.mxu0 0.0
    %437 = vmatpush1.msra.mxu0 %v46
    %438 = vmatprep.subr.mxu0 0.0
    %439 = vmatpush1.msra.mxu0 %v47
    %440 = vmatprep.subr.mxu0 0.0
    %441 = vmatpush1.msra.mxu0 %v48
    %442 = vmatprep.subr.mxu0 0.0
    %443 = vmatpush1.msra.mxu0 0.0
    %444 = vmatprep.subr.mxu0 0.0
    %445 = vmatpush1.msra.mxu0 0.0
    %446 = vmatprep.subr.mxu0 0.0
    %447 = vmatpush1.msra.mxu0 0.0
    %448 = vmatprep.subr.mxu0 0.0
    %449 = vmatpush1.msra.mxu0 0.0
    %450 = vmatprep.subr.mxu0 0.0
    %451 = vmatpush1.msra.mxu0 0.0
    %452 = vmatprep.subr.mxu0 0.0
    %453 = vmatpush1.msra.mxu0 0.0
    %454 = vmatprep.subr.mxu0 0.0
    %455 = vmatpush1.msra.mxu0 0.0
    %456 = vmatprep.subr.mxu0 0.0
    %457 = vmatpush1.msra.mxu0 0.0
    %458 = vmatprep.subr.mxu0 0.0
    %459 = vmatpush1.msra.mxu0 0.0
    %460 = vmatprep.subr.mxu0 0.0
    %461 = vmatpush1.msra.mxu0 0.0
    %462 = vmatprep.subr.mxu0 0.0
    %463 = vmatpush1.msra.mxu0 0.0
    %464 = vmatprep.subr.mxu0 0.0
    %465 = vmatpush1.msra.mxu0 0.0
    %466 = vmatprep.subr.mxu0 0.0
    %467 = vmatpush1.msra.mxu0 0.0
    %468 = vmatprep.subr.mxu0 0.0
    %469 = vmatpush1.msra.mxu0 0.0
    %470 = vmatprep.subr.mxu0 0.0
    %471 = vmatpush1.msra.mxu0 0.0
    %472 = vmatprep.subr.mxu0 0.0
    %473 = vmatpush1.msra.mxu0 0.0
    %474 = vmatprep.subr.mxu0 0.0
    %475 = vmatpush1.msra.mxu0 0.0
    %476 = vmatprep.subr.mxu0 0.0
    %477 = vmatpush1.msra.mxu0 0.0
    %478 = vmatprep.subr.mxu0 0.0
    %479 = vmatpush1.msra.mxu0 0.0
    %480 = vmatprep.subr.mxu0 0.0
    %481 = vmatpush1.msra.mxu0 0.0
    %482 = vmatprep.subr.mxu0 0.0
    %483 = vmatpush1.msra.mxu0 0.0
    %484 = vmatprep.subr.mxu0 0.0
    %485 = vmatpush1.msra.mxu0 0.0
    %486 = vmatprep.subr.mxu0 0.0
    %487 = vmatpush1.msra.mxu0 0.0
    %488 = vmatprep.subr.mxu0 0.0
    %489 = vmatpush1.msra.mxu0 0.0
    %490 = vmatprep.subr.mxu0 0.0
    %491 = vmatpush1.msra.mxu0 0.0
    %492 = vmatprep.subr.mxu0 0.0
    %493 = vmatpush1.msra.mxu0 0.0
    %494 = vmatprep.subr.mxu0 0.0
    %495 = vmatpush1.msra.mxu0 0.0
    %496 = vmatprep.subr.mxu0 0.0
    %497 = vmatpush1.msra.mxu0 0.0
    %498 = vmatprep.mubr.f32.mxu0 0.0
    %499 = vmatmul.mubr.f32.gmra.mrb[0].mxu0 %v432
    %v500 = vpop.f32.mrb[0].mxu0
    %v501 = vadd.f32 0.0, %v500
    %v502 = vpop.f32.mrb[0].mxu0
    %503 = vdwg.mxu0
    %vm504 = vcmp.gt.f32.partialorder %v147, 0.0
    %v505 = vsel %vm504, %v501, 0.0
    %v506 = vsel %vm423, %v505, 0.0
    %v507 = vrot.slane %v506, 4
    %v508 = vadd.f32 %v506, %v507
    %v509 = vrot.slane %v508, 2
    %v510 = vadd.f32 %v508, %v509
    %v511 = vrot.slane %v510, 1
    %v512 = vadd.f32 %v510, %v511
    %v513 = vmul.f32 %v36, 0.0005
    %v514 = vmul.f32 %v37, 0.0005
    %v515 = vmul.f32 %v38, 0.0005
    %v516 = vmul.f32 %v39, 0.0005
    %v517 = vmul.f32 %v40, 0.0005
    %v518 = vmul.f32 %v41, 0.0005
    %v519 = vmul.f32 %v42, 0.0005
    %v520 = vmul.f32 %v43, 0.0005
    %521 = vxpose.xlu0.b32.start [1/16] %v505, 128
    %522 = vxpose.xlu0.b32.cont [2/16] 0.0, 128
    %523 = vxpose.xlu0.b32.cont [3/16] 0.0, 128
    %524 = vxpose.xlu0.b32.cont [4/16] 0.0, 128
    %525 = vxpose.xlu0.b32.cont [5/16] 0.0, 128
    %526 = vxpose.xlu0.b32.cont [6/16] 0.0, 128
    %527 = vxpose.xlu0.b32.cont [7/16] 0.0, 128
    %528 = vxpose.xlu0.b32.cont [8/16] 0.0, 128
    %529 = vxpose.xlu0.b32.cont [9/16] 0.0, 128
    %530 = vxpose.xlu0.b32.cont [10/16] 0.0, 128
    %531 = vxpose.xlu0.b32.cont [11/16] 0.0, 128
    %532 = vxpose.xlu0.b32.cont [12/16] 0.0, 128
    %533 = vxpose.xlu0.b32.cont [13/16] 0.0, 128
    %534 = vxpose.xlu0.b32.cont [14/16] 0.0, 128
    %535 = vxpose.xlu0.b32.cont [15/16] 0.0, 128
    %536 = vxpose.xlu0.b32.end [16/16] 0.0, 128
    %v537 = vpop.trf.xlu0
    %v538 = vpop.trf.xlu0
    %v539 = vpop.trf.xlu0
    %v540 = vpop.trf.xlu0
    %v541 = vpop.trf.xlu0
    %v542 = vpop.trf.xlu0
    %v543 = vpop.trf.xlu0
    %v544 = vpop.trf.xlu0
    %v545 = vpop.trf.xlu0
    %v546 = vpop.trf.xlu0
    %v547 = vpop.trf.xlu0
    %v548 = vpop.trf.xlu0
    %v549 = vpop.trf.xlu0
    %v550 = vpop.trf.xlu0
    %v551 = vpop.trf.xlu0
    %v552 = vpop.trf.xlu0
    %vm553 = vcmask 31744
    %v555 = vsel %vm553, %v537, 0
    %v558 = vsel %vm553, %v538, 0
    %v561 = vsel %vm553, %v539, 0
    %v564 = vsel %vm553, %v540, 0
    %vm566 = vcmask 1043456
    %v567 = vsel %vm566, %v52, 0
    %v569 = vsel %vm566, %v61, 0
    %571 = vmatprep.subr.mxu0 %v569
    %572 = vmatpush1.msra.mxu0 %v567
    %573 = vmatprep.subr.mxu0 0.0
    %574 = vmatpush1.msra.mxu0 0.0
    %575 = vmatprep.subr.mxu0 0.0
    %576 = vmatpush1.msra.mxu0 0.0
    %577 = vmatprep.subr.mxu0 0.0
    %578 = vmatpush1.msra.mxu0 0.0
    %579 = vmatprep.subr.mxu0 0.0
    %580 = vmatpush1.msra.mxu0 0.0
    %581 = vmatprep.subr.mxu0 0.0
    %582 = vmatpush1.msra.mxu0 0.0
    %583 = vmatprep.subr.mxu0 0.0
    %584 = vmatpush1.msra.mxu0 0.0
    %585 = vmatprep.subr.mxu0 0.0
    %586 = vmatpush1.msra.mxu0 0.0
    %587 = vmatprep.subr.mxu0 0.0
    %588 = vmatpush1.msra.mxu0 0.0
    %589 = vmatprep.subr.mxu0 0.0
    %590 = vmatpush1.msra.mxu0 0.0
    %591 = vmatprep.subr.mxu0 0.0
    %592 = vmatpush1.msra.mxu0 0.0
    %593 = vmatprep.subr.mxu0 0.0
    %594 = vmatpush1.msra.mxu0 0.0
    %595 = vmatprep.subr.mxu0 0.0
    %596 = vmatpush1.msra.mxu0 0.0
    %597 = vmatprep.subr.mxu0 0.0
    %598 = vmatpush1.msra.mxu0 0.0
    %599 = vmatprep.subr.mxu0 0.0
    %600 = vmatpush1.msra.mxu0 0.0
    %601 = vmatprep.subr.mxu0 0.0
    %602 = vmatpush1.msra.mxu0 0.0
    %603 = vmatprep.subr.mxu0 0.0
    %604 = vmatpush1.msra.mxu0 0.0
    %605 = vmatprep.subr.mxu0 0.0
    %606 = vmatpush1.msra.mxu0 0.0
    %607 = vmatprep.subr.mxu0 0.0
    %608 = vmatpush1.msra.mxu0 0.0
    %609 = vmatprep.subr.mxu0 0.0
    %610 = vmatpush1.msra.mxu0 0.0
    %611 = vmatprep.subr.mxu0 0.0
    %612 = vmatpush1.msra.mxu0 0.0
    %613 = vmatprep.subr.mxu0 0.0
    %614 = vmatpush1.msra.mxu0 0.0
    %615 = vmatprep.subr.mxu0 0.0
    %616 = vmatpush1.msra.mxu0 0.0
    %617 = vmatprep.subr.mxu0 0.0
    %618 = vmatpush1.msra.mxu0 0.0
    %619 = vmatprep.subr.mxu0 0.0
    %620 = vmatpush1.msra.mxu0 0.0
    %621 = vmatprep.subr.mxu0 0.0
    %622 = vmatpush1.msra.mxu0 0.0
    %623 = vmatprep.subr.mxu0 0.0
    %624 = vmatpush1.msra.mxu0 0.0
    %625 = vmatprep.subr.mxu0 0.0
    %626 = vmatpush1.msra.mxu0 0.0
    %627 = vmatprep.subr.mxu0 0.0
    %628 = vmatpush1.msra.mxu0 0.0
    %629 = vmatprep.subr.mxu0 0.0
    %630 = vmatpush1.msra.mxu0 0.0
    %631 = vmatprep.subr.mxu0 0.0
    %632 = vmatpush1.msra.mxu0 0.0
    %633 = vmatprep.subr.mxu0 0.0
    %634 = vmatpush1.msra.mxu0 0.0
    %635 = vmatprep.mubr.f32.mxu0 0.0
    %636 = vmatmul.mubr.f32.gmra.mrb[0].mxu0 %v555
    %v637 = vpop.f32.mrb[0].mxu0
    %v638 = vadd.f32 %v513, %v637
    %v639 = vpop.f32.mrb[0].mxu0
    %v640 = vadd.f32 %v514, %v639
    %641 = vmatprep.mubr.f32.mxu0 0.0
    %642 = vmatmul.mubr.f32.gmra.mrb[0].mxu0 %v558
    %v643 = vpop.f32.mrb[0].mxu0
    %v644 = vadd.f32 %v515, %v643
    %v645 = vpop.f32.mrb[0].mxu0
    %v646 = vadd.f32 %v516, %v645
    %647 = vmatprep.mubr.f32.mxu0 0.0
    %648 = vmatmul.mubr.f32.gmra.mrb[0].mxu0 %v561
    %v649 = vpop.f32.mrb[0].mxu0
    %v650 = vadd.f32 %v517, %v649
    %v651 = vpop.f32.mrb[0].mxu0
    %v652 = vadd.f32 %v518, %v651
    %653 = vmatprep.mubr.f32.mxu0 0.0
    %654 = vmatmul.mubr.f32.gmra.mrb[0].mxu0 %v564
    %v655 = vpop.f32.mrb[0].mxu0
    %v656 = vadd.f32 %v519, %v655
    %v657 = vpop.f32.mrb[0].mxu0
    %v658 = vadd.f32 %v520, %v657
    %659 = vdwg.mxu0
    %v660 = vadd.f32 %v638, 0.0
    %v661 = vadd.f32 %v640, 0.0
    %v662 = vadd.f32 %v644, 0.0
    %v663 = vadd.f32 %v646, 0.0
    %v664 = vadd.f32 %v650, 0.0
    %v665 = vadd.f32 %v652, 0.0
    %v666 = vadd.f32 %v656, 0.0
    %v667 = vadd.f32 %v658, 0.0
    %v668 = vmul.f32 %v660, 0.01
    %v669 = vmul.f32 %v661, 0.01
    %v670 = vmul.f32 %v662, 0.01
    %v671 = vmul.f32 %v663, 0.01
    %v672 = vmul.f32 %v664, 0.01
    %v673 = vmul.f32 %v665, 0.01
    %v674 = vmul.f32 %v666, 0.01
    %v675 = vmul.f32 %v667, 0.01
    %v676 = vsub.f32 %v36, %v668
    %v677 = vsub.f32 %v37, %v669
    %v678 = vsub.f32 %v38, %v670
    %v679 = vsub.f32 %v39, %v671
    %v680 = vsub.f32 %v40, %v672
    %v681 = vsub.f32 %v41, %v673
    %v682 = vsub.f32 %v42, %v674
    %v683 = vsub.f32 %v43, %v675
    %v684 = vmul.f32 %v44, 0.0005
    %v685 = vadd.f32 %v512, %v684
    %v686 = vadd.f32 %v685, 0.0
    %v687 = vmul.f32 %v686, 0.01
    %v688 = vsub.f32 %v44, %v687
    %v689 = vmul.f32 %v45, 0.0005
    %v690 = vmul.f32 %v46, 0.0005
    %v691 = vmul.f32 %v47, 0.0005
    %v692 = vmul.f32 %v48, 0.0005
    %693 = vxpose.xlu0.b32.start [1/16] %v422, 128
    %694 = vxpose.xlu0.b32.cont [2/16] 0.0, 128
    %695 = vxpose.xlu0.b32.cont [3/16] 0.0, 128
    %696 = vxpose.xlu0.b32.cont [4/16] 0.0, 128
    %697 = vxpose.xlu0.b32.cont [5/16] 0.0, 128
    %698 = vxpose.xlu0.b32.cont [6/16] 0.0, 128
    %699 = vxpose.xlu0.b32.cont [7/16] 0.0, 128
    %700 = vxpose.xlu0.b32.cont [8/16] 0.0, 128
    %701 = vxpose.xlu0.b32.cont [9/16] 0.0, 128
    %702 = vxpose.xlu0.b32.cont [10/16] 0.0, 128
    %703 = vxpose.xlu0.b32.cont [11/16] 0.0, 128
    %704 = vxpose.xlu0.b32.cont [12/16] 0.0, 128
    %705 = vxpose.xlu0.b32.cont [13/16] 0.0, 128
    %706 = vxpose.xlu0.b32.cont [14/16] 0.0, 128
    %707 = vxpose.xlu0.b32.cont [15/16] 0.0, 128
    %708 = vxpose.xlu0.b32.end [16/16] 0.0, 128
    %v709 = vpop.trf.xlu0
    %v710 = vpop.trf.xlu0
    %v711 = vpop.trf.xlu0
    %v712 = vpop.trf.xlu0
    %v713 = vpop.trf.xlu0
    %v714 = vpop.trf.xlu0
    %v715 = vpop.trf.xlu0
    %v716 = vpop.trf.xlu0
    %v717 = vpop.trf.xlu0
    %v718 = vpop.trf.xlu0
    %v719 = vpop.trf.xlu0
    %v720 = vpop.trf.xlu0
    %v721 = vpop.trf.xlu0
    %v722 = vpop.trf.xlu0
    %v723 = vpop.trf.xlu0
    %v724 = vpop.trf.xlu0
    %v726 = vsel %vm553, %v709, 0
    %v729 = vsel %vm553, %v710, 0
    %v732 = vsel %vm553, %v711, 0
    %v735 = vsel %vm553, %v712, 0
    %v737 = vsel %vm566, %v147, 0
    %739 = vmatprep.subr.mxu0 0.0
    %740 = vmatpush1.msra.mxu0 %v737
    %741 = vmatprep.subr.mxu0 0.0
    %742 = vmatpush1.msra.mxu0 0.0
    %743 = vmatprep.subr.mxu0 0.0
    %744 = vmatpush1.msra.mxu0 0.0
    %745 = vmatprep.subr.mxu0 0.0
    %746 = vmatpush1.msra.mxu0 0.0
    %747 = vmatprep.subr.mxu0 0.0
    %748 = vmatpush1.msra.mxu0 0.0
    %749 = vmatprep.subr.mxu0 0.0
    %750 = vmatpush1.msra.mxu0 0.0
    %751 = vmatprep.subr.mxu0 0.0
    %752 = vmatpush1.msra.mxu0 0.0
    %753 = vmatprep.subr.mxu0 0.0
    %754 = vmatpush1.msra.mxu0 0.0
    %755 = vmatprep.subr.mxu0 0.0
    %756 = vmatpush1.msra.mxu0 0.0
    %757 = vmatprep.subr.mxu0 0.0
    %758 = vmatpush1.msra.mxu0 0.0
    %759 = vmatprep.subr.mxu0 0.0
    %760 = vmatpush1.msra.mxu0 0.0
    %761 = vmatprep.subr.mxu0 0.0
    %762 = vmatpush1.msra.mxu0 0.0
    %763 = vmatprep.subr.mxu0 0.0
    %764 = vmatpush1.msra.mxu0 0.0
    %765 = vmatprep.subr.mxu0 0.0
    %766 = vmatpush1.msra.mxu0 0.0
    %767 = vmatprep.subr.mxu0 0.0
    %768 = vmatpush1.msra.mxu0 0.0
    %769 = vmatprep.subr.mxu0 0.0
    %770 = vmatpush1.msra.mxu0 0.0
    %771 = vmatprep.subr.mxu0 0.0
    %772 = vmatpush1.msra.mxu0 0.0
    %773 = vmatprep.subr.mxu0 0.0
    %774 = vmatpush1.msra.mxu0 0.0
    %775 = vmatprep.subr.mxu0 0.0
    %776 = vmatpush1.msra.mxu0 0.0
    %777 = vmatprep.subr.mxu0 0.0
    %778 = vmatpush1.msra.mxu0 0.0
    %779 = vmatprep.subr.mxu0 0.0
    %780 = vmatpush1.msra.mxu0 0.0
    %781 = vmatprep.subr.mxu0 0.0
    %782 = vmatpush1.msra.mxu0 0.0
    %783 = vmatprep.subr.mxu0 0.0
    %784 = vmatpush1.msra.mxu0 0.0
    %785 = vmatprep.subr.mxu0 0.0
    %786 = vmatpush1.msra.mxu0 0.0
    %787 = vmatprep.subr.mxu0 0.0
    %788 = vmatpush1.msra.mxu0 0.0
    %789 = vmatprep.subr.mxu0 0.0
    %790 = vmatpush1.msra.mxu0 0.0
    %791 = vmatprep.subr.mxu0 0.0
    %792 = vmatpush1.msra.mxu0 0.0
    %793 = vmatprep.subr.mxu0 0.0
    %794 = vmatpush1.msra.mxu0 0.0
    %795 = vmatprep.subr.mxu0 0.0
    %796 = vmatpush1.msra.mxu0 0.0
    %797 = vmatprep.subr.mxu0 0.0
    %798 = vmatpush1.msra.mxu0 0.0
    %799 = vmatprep.subr.mxu0 0.0
    %800 = vmatpush1.msra.mxu0 0.0
    %801 = vmatprep.subr.mxu0 0.0
    %802 = vmatpush1.msra.mxu0 0.0
    %803 = vmatprep.mubr.f32.mxu0 0.0
    %804 = vmatmul.mubr.f32.gmra.mrb[0].mxu0 %v726
    %v805 = vpop.f32.mrb[0].mxu0
    %v806 = vadd.f32 %v689, %v805
    %v807 = vpop.f32.mrb[0].mxu0
    %808 = vmatprep.mubr.f32.mxu0 0.0
    %809 = vmatmul.mubr.f32.gmra.mrb[0].mxu0 %v729
    %v810 = vpop.f32.mrb[0].mxu0
    %v811 = vadd.f32 %v690, %v810
    %v812 = vpop.f32.mrb[0].mxu0
    %813 = vmatprep.mubr.f32.mxu0 0.0
    %814 = vmatmul.mubr.f32.gmra.mrb[0].mxu0 %v732
    %v815 = vpop.f32.mrb[0].mxu0
    %v816 = vadd.f32 %v691, %v815
    %v817 = vpop.f32.mrb[0].mxu0
    %818 = vmatprep.mubr.f32.mxu0 0.0
    %819 = vmatmul.mubr.f32.gmra.mrb[0].mxu0 %v735
    %v820 = vpop.f32.mrb[0].mxu0
    %v821 = vadd.f32 %v692, %v820
    %v822 = vpop.f32.mrb[0].mxu0
    %823 = vdwg.mxu0
    %v824 = vadd.f32 %v806, 0.0
    %v825 = vadd.f32 %v811, 0.0
    %v826 = vadd.f32 %v816, 0.0
    %v827 = vadd.f32 %v821, 0.0
    %v828 = vmul.f32 %v824, 0.01
    %v829 = vmul.f32 %v825, 0.01
    %v830 = vmul.f32 %v826, 0.01
    %v831 = vmul.f32 %v827, 0.01
    %v832 = vsub.f32 %v45, %v828
    %v833 = vsub.f32 %v46, %v829
    %v834 = vsub.f32 %v47, %v830
    %v835 = vsub.f32 %v48, %v831
    %v836 = vmul.f32 %v49, 0.0005
    %v837 = vadd.f32 %v430, %v836
    %v838 = vadd.f32 %v837, 0.0
    %v839 = vmul.f32 %v838, 0.01
    %v840 = vsub.f32 %v49, %v839
    %v841 = vmul.f32 %v50, 0.0005
    %842 = vxpose.xlu0.b32.start [1/16] %v336, 128
    %843 = vxpose.xlu0.b32.cont [2/16] 0.0, 128
    %844 = vxpose.xlu0.b32.cont [3/16] 0.0, 128
    %845 = vxpose.xlu0.b32.cont [4/16] 0.0, 128
    %846 = vxpose.xlu0.b32.cont [5/16] 0.0, 128
    %847 = vxpose.xlu0.b32.cont [6/16] 0.0, 128
    %848 = vxpose.xlu0.b32.cont [7/16] 0.0, 128
    %849 = vxpose.xlu0.b32.cont [8/16] 0.0, 128
    %850 = vxpose.xlu0.b32.cont [9/16] 0.0, 128
    %851 = vxpose.xlu0.b32.cont [10/16] 0.0, 128
    %852 = vxpose.xlu0.b32.cont [11/16] 0.0, 128
    %853 = vxpose.xlu0.b32.cont [12/16] 0.0, 128
    %854 = vxpose.xlu0.b32.cont [13/16] 0.0, 128
    %855 = vxpose.xlu0.b32.cont [14/16] 0.0, 128
    %856 = vxpose.xlu0.b32.cont [15/16] 0.0, 128
    %857 = vxpose.xlu0.b32.end [16/16] 0.0, 128
    %v858 = vpop.trf.xlu0
    %v859 = vpop.trf.xlu0
    %v860 = vpop.trf.xlu0
    %v861 = vpop.trf.xlu0
    %v862 = vpop.trf.xlu0
    %v863 = vpop.trf.xlu0
    %v864 = vpop.trf.xlu0
    %v865 = vpop.trf.xlu0
    %v866 = vpop.trf.xlu0
    %v867 = vpop.trf.xlu0
    %v868 = vpop.trf.xlu0
    %v869 = vpop.trf.xlu0
    %v870 = vpop.trf.xlu0
    %v871 = vpop.trf.xlu0
    %v872 = vpop.trf.xlu0
    %v873 = vpop.trf.xlu0
    %v875 = vsel %vm553, %v858, 0
    %v877 = vsel %vm566, %v240, 0
    %879 = vmatprep.subr.mxu0 0.0
    %880 = vmatpush1.msra.mxu0 %v877
    %881 = vmatprep.subr.mxu0 0.0
    %882 = vmatpush1.msra.mxu0 0.0
    %883 = vmatprep.subr.mxu0 0.0
    %884 = vmatpush1.msra.mxu0 0.0
    %885 = vmatprep.subr.mxu0 0.0
    %886 = vmatpush1.msra.mxu0 0.0
    %887 = vmatprep.subr.mxu0 0.0
    %888 = vmatpush1.msra.mxu0 0.0
    %889 = vmatprep.subr.mxu0 0.0
    %890 = vmatpush1.msra.mxu0 0.0
    %891 = vmatprep.subr.mxu0 0.0
    %892 = vmatpush1.msra.mxu0 0.0
    %893 = vmatprep.subr.mxu0 0.0
    %894 = vmatpush1.msra.mxu0 0.0
    %895 = vmatprep.subr.mxu0 0.0
    %896 = vmatpush1.msra.mxu0 0.0
    %897 = vmatprep.subr.mxu0 0.0
    %898 = vmatpush1.msra.mxu0 0.0
    %899 = vmatprep.subr.mxu0 0.0
    %900 = vmatpush1.msra.mxu0 0.0
    %901 = vmatprep.subr.mxu0 0.0
    %902 = vmatpush1.msra.mxu0 0.0
    %903 = vmatprep.subr.mxu0 0.0
    %904 = vmatpush1.msra.mxu0 0.0
    %905 = vmatprep.subr.mxu0 0.0
    %906 = vmatpush1.msra.mxu0 0.0
    %907 = vmatprep.subr.mxu0 0.0
    %908 = vmatpush1.msra.mxu0 0.0
    %909 = vmatprep.subr.mxu0 0.0
    %910 = vmatpush1.msra.mxu0 0.0
    %911 = vmatprep.subr.mxu0 0.0
    %912 = vmatpush1.msra.mxu0 0.0
    %913 = vmatprep.subr.mxu0 0.0
    %914 = vmatpush1.msra.mxu0 0.0
    %915 = vmatprep.subr.mxu0 0.0
    %916 = vmatpush1.msra.mxu0 0.0
    %917 = vmatprep.subr.mxu0 0.0
    %918 = vmatpush1.msra.mxu0 0.0
    %919 = vmatprep.subr.mxu0 0.0
    %920 = vmatpush1.msra.mxu0 0.0
    %921 = vmatprep.subr.mxu0 0.0
    %922 = vmatpush1.msra.mxu0 0.0
    %923 = vmatprep.subr.mxu0 0.0
    %924 = vmatpush1.msra.mxu0 0.0
    %925 = vmatprep.subr.mxu0 0.0
    %926 = vmatpush1.msra.mxu0 0.0
    %927 = vmatprep.subr.mxu0 0.0
    %928 = vmatpush1.msra.mxu0 0.0
    %929 = vmatprep.subr.mxu0 0.0
    %930 = vmatpush1.msra.mxu0 0.0
    %931 = vmatprep.subr.mxu0 0.0
    %932 = vmatpush1.msra.mxu0 0.0
    %933 = vmatprep.subr.mxu0 0.0
    %934 = vmatpush1.msra.mxu0 0.0
    %935 = vmatprep.subr.mxu0 0.0
    %936 = vmatpush1.msra.mxu0 0.0
    %937 = vmatprep.subr.mxu0 0.0
    %938 = vmatpush1.msra.mxu0 0.0
    %939 = vmatprep.subr.mxu0 0.0
    %940 = vmatpush1.msra.mxu0 0.0
    %941 = vmatprep.subr.mxu0 0.0
    %942 = vmatpush1.msra.mxu0 0.0
    %943 = vmatprep.mubr.f32.mxu0 0.0
    %944 = vmatmul.mubr.f32.gmra.mrb[0].mxu0 %v875
    %v945 = vpop.f32.mrb[0].mxu0
    %v946 = vadd.f32 %v841, %v945
    %v947 = vpop.f32.mrb[0].mxu0
    %948 = vdwg.mxu0
    %v949 = vadd.f32 %v946, 0.0
    %v950 = vmul.f32 %v949, 0.01
    %v951 = vsub.f32 %v50, %v950
    %v952 = vmul.f32 %v51, 0.0005
    %v953 = vadd.f32 %v343, %v952
    %v954 = vadd.f32 %v953, 0.0
    %v955 = vmul.f32 %v954, 0.01
    %v956 = vsub.f32 %v51, %v955
    %s957 = scalar_lea.vmem %s0, 8
    %v958 = vld [vmem:[%s957] sm:$0xff]
    %s959 = scalar_lea.vmem %s1, 4
    %v960 = vld [vmem:[%s959] sm:$0xf]
    %v962 = vlaneseq
    %v963 = vshrl.u32 %v962, 7
    %v964 = vsub.s32 0, %v963
    %v965 = vrot.slane %v688, %v964
    %v968 = vcombine.high %v958, %v958
    %v969 = vsel %vm62, %v968, 0
    %v972 = vsel %vm62, %v677, 0
    %v975 = vsel %vm62, %v679, 0
    %v978 = vsel %vm62, %v681, 0
    %v981 = vsel %vm62, %v683, 0
    %983 = vmatprep.subr.mxu0 %v972
    %984 = vmatpush1.xpose.msra.mxu0 %v676
    %985 = vmatprep.subr.mxu0 %v975
    %986 = vmatpush1.xpose.msra.mxu0 %v678
    %987 = vmatprep.subr.mxu0 %v978
    %988 = vmatpush1.xpose.msra.mxu0 %v680
    %989 = vmatprep.subr.mxu0 %v981
    %990 = vmatpush1.xpose.msra.mxu0 %v682
    %991 = vmatprep.subr.mxu0 0.0
    %992 = vmatpush1.xpose.msra.mxu0 0.0
    %993 = vmatprep.subr.mxu0 0.0
    %994 = vmatpush1.xpose.msra.mxu0 0.0
    %995 = vmatprep.subr.mxu0 0.0
    %996 = vmatpush1.xpose.msra.mxu0 0.0
    %997 = vmatprep.subr.mxu0 0.0
    %998 = vmatpush1.xpose.msra.mxu0 0.0
    %999 = vmatprep.subr.mxu0 0.0
    %1000 = vmatpush1.xpose.msra.mxu0 0.0
    %1001 = vmatprep.subr.mxu0 0.0
    %1002 = vmatpush1.xpose.msra.mxu0 0.0
    %1003 = vmatprep.subr.mxu0 0.0
    %1004 = vmatpush1.xpose.msra.mxu0 0.0
    %1005 = vmatprep.subr.mxu0 0.0
    %1006 = vmatpush1.xpose.msra.mxu0 0.0
    %1007 = vmatprep.subr.mxu0 0.0
    %1008 = vmatpush1.xpose.msra.mxu0 0.0
    %1009 = vmatprep.subr.mxu0 0.0
    %1010 = vmatpush1.xpose.msra.mxu0 0.0
    %1011 = vmatprep.subr.mxu0 0.0
    %1012 = vmatpush1.xpose.msra.mxu0 0.0
    %1013 = vmatprep.subr.mxu0 0.0
    %1014 = vmatpush1.xpose.msra.mxu0 0.0
    %1015 = vmatprep.subr.mxu0 0.0
    %1016 = vmatpush1.xpose.msra.mxu0 0.0
    %1017 = vmatprep.subr.mxu0 0.0
    %1018 = vmatpush1.xpose.msra.mxu0 0.0
    %1019 = vmatprep.subr.mxu0 0.0
    %1020 = vmatpush1.xpose.msra.mxu0 0.0
    %1021 = vmatprep.subr.mxu0 0.0
    %1022 = vmatpush1.xpose.msra.mxu0 0.0
    %1023 = vmatprep.subr.mxu0 0.0
    %1024 = vmatpush1.xpose.msra.mxu0 0.0
    %1025 = vmatprep.subr.mxu0 0.0
    %1026 = vmatpush1.xpose.msra.mxu0 0.0
    %1027 = vmatprep.subr.mxu0 0.0
    %1028 = vmatpush1.xpose.msra.mxu0 0.0
    %1029 = vmatprep.subr.mxu0 0.0
    %1030 = vmatpush1.xpose.msra.mxu0 0.0
    %1031 = vmatprep.subr.mxu0 0.0
    %1032 = vmatpush1.xpose.msra.mxu0 0.0
    %1033 = vmatprep.subr.mxu0 0.0
    %1034 = vmatpush1.xpose.msra.mxu0 0.0
    %1035 = vmatprep.subr.mxu0 0.0
    %1036 = vmatpush1.xpose.msra.mxu0 0.0
    %1037 = vmatprep.subr.mxu0 0.0
    %1038 = vmatpush1.xpose.msra.mxu0 0.0
    %1039 = vmatprep.subr.mxu0 0.0
    %1040 = vmatpush1.xpose.msra.mxu0 0.0
    %1041 = vmatprep.subr.mxu0 0.0
    %1042 = vmatpush1.xpose.msra.mxu0 0.0
    %1043 = vmatprep.subr.mxu0 0.0
    %1044 = vmatpush1.xpose.msra.mxu0 0.0
    %1045 = vmatprep.subr.mxu0 0.0
    %1046 = vmatpush1.xpose.msra.mxu0 0.0
    %1047 = vmatprep.mubr.f32.mxu0 %v969
    %1048 = vmatmul.mubr.f32.gmra.mrb[0].mxu0 %v958
    %v1049 = vpop.f32.mrb[0].mxu0
    %v1050 = vadd.f32 %v965, %v1049
    %v1051 = vpop.f32.mrb[0].mxu0
    %1052 = vdwg.mxu0
    %v1053 = vmax.f32 %v1050, 0.0
    %v1055 = vlaneseq
    %v1056 = vshrl.u32 %v1055, 7
    %v1057 = vsub.s32 0, %v1056
    %v1058 = vrot.slane %v840, %v1057
    %v1061 = vsel %vm154, %v1053, 0
    %v1064 = vsel %vm154, %v832, 0
    %v1067 = vsel %vm154, %v833, 0
    %v1070 = vsel %vm154, %v834, 0
    %v1073 = vsel %vm154, %v835, 0
    %1075 = vmatprep.subr.mxu0 0.0
    %1076 = vmatpush1.xpose.msra.mxu0 %v1064
    %1077 = vmatprep.subr.mxu0 0.0
    %1078 = vmatpush1.xpose.msra.mxu0 %v1067
    %1079 = vmatprep.subr.mxu0 0.0
    %1080 = vmatpush1.xpose.msra.mxu0 %v1070
    %1081 = vmatprep.subr.mxu0 0.0
    %1082 = vmatpush1.xpose.msra.mxu0 %v1073
    %1083 = vmatprep.subr.mxu0 0.0
    %1084 = vmatpush1.xpose.msra.mxu0 0.0
    %1085 = vmatprep.subr.mxu0 0.0
    %1086 = vmatpush1.xpose.msra.mxu0 0.0
    %1087 = vmatprep.subr.mxu0 0.0
    %1088 = vmatpush1.xpose.msra.mxu0 0.0
    %1089 = vmatprep.subr.mxu0 0.0
    %1090 = vmatpush1.xpose.msra.mxu0 0.0
    %1091 = vmatprep.subr.mxu0 0.0
    %1092 = vmatpush1.xpose.msra.mxu0 0.0
    %1093 = vmatprep.subr.mxu0 0.0
    %1094 = vmatpush1.xpose.msra.mxu0 0.0
    %1095 = vmatprep.subr.mxu0 0.0
    %1096 = vmatpush1.xpose.msra.mxu0 0.0
    %1097 = vmatprep.subr.mxu0 0.0
    %1098 = vmatpush1.xpose.msra.mxu0 0.0
    %1099 = vmatprep.subr.mxu0 0.0
    %1100 = vmatpush1.xpose.msra.mxu0 0.0
    %1101 = vmatprep.subr.mxu0 0.0
    %1102 = vmatpush1.xpose.msra.mxu0 0.0
    %1103 = vmatprep.subr.mxu0 0.0
    %1104 = vmatpush1.xpose.msra.mxu0 0.0
    %1105 = vmatprep.subr.mxu0 0.0
    %1106 = vmatpush1.xpose.msra.mxu0 0.0
    %1107 = vmatprep.subr.mxu0 0.0
    %1108 = vmatpush1.xpose.msra.mxu0 0.0
    %1109 = vmatprep.subr.mxu0 0.0
    %1110 = vmatpush1.xpose.msra.mxu0 0.0
    %1111 = vmatprep.subr.mxu0 0.0
    %1112 = vmatpush1.xpose.msra.mxu0 0.0
    %1113 = vmatprep.subr.mxu0 0.0
    %1114 = vmatpush1.xpose.msra.mxu0 0.0
    %1115 = vmatprep.subr.mxu0 0.0
    %1116 = vmatpush1.xpose.msra.mxu0 0.0
    %1117 = vmatprep.subr.mxu0 0.0
    %1118 = vmatpush1.xpose.msra.mxu0 0.0
    %1119 = vmatprep.subr.mxu0 0.0
    %1120 = vmatpush1.xpose.msra.mxu0 0.0
    %1121 = vmatprep.subr.mxu0 0.0
    %1122 = vmatpush1.xpose.msra.mxu0 0.0
    %1123 = vmatprep.subr.mxu0 0.0
    %1124 = vmatpush1.xpose.msra.mxu0 0.0
    %1125 = vmatprep.subr.mxu0 0.0
    %1126 = vmatpush1.xpose.msra.mxu0 0.0
    %1127 = vmatprep.subr.mxu0 0.0
    %1128 = vmatpush1.xpose.msra.mxu0 0.0
    %1129 = vmatprep.subr.mxu0 0.0
    %1130 = vmatpush1.xpose.msra.mxu0 0.0
    %1131 = vmatprep.subr.mxu0 0.0
    %1132 = vmatpush1.xpose.msra.mxu0 0.0
    %1133 = vmatprep.subr.mxu0 0.0
    %1134 = vmatpush1.xpose.msra.mxu0 0.0
    %1135 = vmatprep.subr.mxu0 0.0
    %1136 = vmatpush1.xpose.msra.mxu0 0.0
    %1137 = vmatprep.subr.mxu0 0.0
    %1138 = vmatpush1.xpose.msra.mxu0 0.0
    %1139 = vmatprep.mubr.f32.mxu0 0.0
    %1140 = vmatmul.mubr.f32.gmra.mrb[0].mxu0 %v1061
    %v1141 = vpop.f32.mrb[0].mxu0
    %v1142 = vadd.f32 %v1058, %v1141
    %v1143 = vpop.f32.mrb[0].mxu0
    %1144 = vdwg.mxu0
    %v1145 = vmax.f32 %v1142, 0.0
    %v1147 = vlaneseq
    %v1148 = vshrl.u32 %v1147, 7
    %v1149 = vsub.s32 0, %v1148
    %v1150 = vrot.slane %v956, %v1149
    %v1153 = vsel %vm154, %v1145, 0
    %v1156 = vsel %vm154, %v951, 0
    %1158 = vmatprep.subr.mxu0 0.0
    %1159 = vmatpush1.xpose.msra.mxu0 %v1156
    %1160 = vmatprep.subr.mxu0 0.0
    %1161 = vmatpush1.xpose.msra.mxu0 0.0
    %1162 = vmatprep.subr.mxu0 0.0
    %1163 = vmatpush1.xpose.msra.mxu0 0.0
    %1164 = vmatprep.subr.mxu0 0.0
    %1165 = vmatpush1.xpose.msra.mxu0 0.0
    %1166 = vmatprep.subr.mxu0 0.0
    %1167 = vmatpush1.xpose.msra.mxu0 0.0
    %1168 = vmatprep.subr.mxu0 0.0
    %1169 = vmatpush1.xpose.msra.mxu0 0.0
    %1170 = vmatprep.subr.mxu0 0.0
    %1171 = vmatpush1.xpose.msra.mxu0 0.0
    %1172 = vmatprep.subr.mxu0 0.0
    %1173 = vmatpush1.xpose.msra.mxu0 0.0
    %1174 = vmatprep.subr.mxu0 0.0
    %1175 = vmatpush1.xpose.msra.mxu0 0.0
    %1176 = vmatprep.subr.mxu0 0.0
    %1177 = vmatpush1.xpose.msra.mxu0 0.0
    %1178 = vmatprep.subr.mxu0 0.0
    %1179 = vmatpush1.xpose.msra.mxu0 0.0
    %1180 = vmatprep.subr.mxu0 0.0
    %1181 = vmatpush1.xpose.msra.mxu0 0.0
    %1182 = vmatprep.subr.mxu0 0.0
    %1183 = vmatpush1.xpose.msra.mxu0 0.0
    %1184 = vmatprep.subr.mxu0 0.0
    %1185 = vmatpush1.xpose.msra.mxu0 0.0
    %1186 = vmatprep.subr.mxu0 0.0
    %1187 = vmatpush1.xpose.msra.mxu0 0.0
    %1188 = vmatprep.subr.mxu0 0.0
    %1189 = vmatpush1.xpose.msra.mxu0 0.0
    %1190 = vmatprep.subr.mxu0 0.0
    %1191 = vmatpush1.xpose.msra.mxu0 0.0
    %1192 = vmatprep.subr.mxu0 0.0
    %1193 = vmatpush1.xpose.msra.mxu0 0.0
    %1194 = vmatprep.subr.mxu0 0.0
    %1195 = vmatpush1.xpose.msra.mxu0 0.0
    %1196 = vmatprep.subr.mxu0 0.0
    %1197 = vmatpush1.xpose.msra.mxu0 0.0
    %1198 = vmatprep.subr.mxu0 0.0
    %1199 = vmatpush1.xpose.msra.mxu0 0.0
    %1200 = vmatprep.subr.mxu0 0.0
    %1201 = vmatpush1.xpose.msra.mxu0 0.0
    %1202 = vmatprep.subr.mxu0 0.0
    %1203 = vmatpush1.xpose.msra.mxu0 0.0
    %1204 = vmatprep.subr.mxu0 0.0
    %1205 = vmatpush1.xpose.msra.mxu0 0.0
    %1206 = vmatprep.subr.mxu0 0.0
    %1207 = vmatpush1.xpose.msra.mxu0 0.0
    %1208 = vmatprep.subr.mxu0 0.0
    %1209 = vmatpush1.xpose.msra.mxu0 0.0
    %1210 = vmatprep.subr.mxu0 0.0
    %1211 = vmatpush1.xpose.msra.mxu0 0.0
    %1212 = vmatprep.subr.mxu0 0.0
    %1213 = vmatpush1.xpose.msra.mxu0 0.0
    %1214 = vmatprep.subr.mxu0 0.0
    %1215 = vmatpush1.xpose.msra.mxu0 0.0
    %1216 = vmatprep.subr.mxu0 0.0
    %1217 = vmatpush1.xpose.msra.mxu0 0.0
    %1218 = vmatprep.subr.mxu0 0.0
    %1219 = vmatpush1.xpose.msra.mxu0 0.0
    %1220 = vmatprep.subr.mxu0 0.0
    %1221 = vmatpush1.xpose.msra.mxu0 0.0
    %1222 = vmatprep.mubr.f32.mxu0 0.0
    %1223 = vmatmul.mubr.f32.gmra.mrb[0].mxu0 %v1153
    %v1224 = vpop.f32.mrb[0].mxu0
    %v1225 = vadd.f32 %v1150, %v1224
    %v1226 = vpop.f32.mrb[0].mxu0
    %1227 = vdwg.mxu0
    %v1228 = vsel %vm323, %v1225, -inf
    %1229 = vmax.xlane.f32.xlu0 %v1228
    %v1230 = vpop.xlane.xlu0 %1229
    %v1231 = vsub.f32 %v1225, %v1230
    %v1232 = vmul.f32 %v1231, 1.442695
    %v1233 = vpow.pop %v1232
    %v1234 = vsel %vm323, %v1233, 0.0
    %1235 = vadd.xlane.f32.xlu0 %v1234
    %v1236 = vpop.xlane.xlu0 %1235
    %v1237 = vrcp.pop %v1236
    %v1238 = vmul.f32 %v1233, %v1237
    %v1239 = vsub.f32 %v1238, %v960
    %v1240 = vmul.f32 %v1239, 0.25
    %v1241 = vsel %vm323, %v1240, 0.0
    %v1242 = vrot.slane %v1241, 4
    %v1243 = vadd.f32 %v1241, %v1242
    %v1244 = vrot.slane %v1243, 2
    %v1245 = vadd.f32 %v1243, %v1244
    %v1246 = vrot.slane %v1245, 1
    %v1247 = vadd.f32 %v1245, %v1246
    %v1249 = vsel %vm344, %v1240, 0
    %v1251 = vsel %vm348, %v951, 0
    %1253 = vmatprep.subr.mxu0 0.0
    %1254 = vmatpush1.msra.mxu0 %v1251
    %1255 = vmatprep.subr.mxu0 0.0
    %1256 = vmatpush1.msra.mxu0 0.0
    %1257 = vmatprep.subr.mxu0 0.0
    %1258 = vmatpush1.msra.mxu0 0.0
    %1259 = vmatprep.subr.mxu0 0.0
    %1260 = vmatpush1.msra.mxu0 0.0
    %1261 = vmatprep.subr.mxu0 0.0
    %1262 = vmatpush1.msra.mxu0 0.0
    %1263 = vmatprep.subr.mxu0 0.0
    %1264 = vmatpush1.msra.mxu0 0.0
    %1265 = vmatprep.subr.mxu0 0.0
    %1266 = vmatpush1.msra.mxu0 0.0
    %1267 = vmatprep.subr.mxu0 0.0
    %1268 = vmatpush1.msra.mxu0 0.0
    %1269 = vmatprep.subr.mxu0 0.0
    %1270 = vmatpush1.msra.mxu0 0.0
    %1271 = vmatprep.subr.mxu0 0.0
    %1272 = vmatpush1.msra.mxu0 0.0
    %1273 = vmatprep.subr.mxu0 0.0
    %1274 = vmatpush1.msra.mxu0 0.0
    %1275 = vmatprep.subr.mxu0 0.0
    %1276 = vmatpush1.msra.mxu0 0.0
    %1277 = vmatprep.subr.mxu0 0.0
    %1278 = vmatpush1.msra.mxu0 0.0
    %1279 = vmatprep.subr.mxu0 0.0
    %1280 = vmatpush1.msra.mxu0 0.0
    %1281 = vmatprep.subr.mxu0 0.0
    %1282 = vmatpush1.msra.mxu0 0.0
    %1283 = vmatprep.subr.mxu0 0.0
    %1284 = vmatpush1.msra.mxu0 0.0
    %1285 = vmatprep.subr.mxu0 0.0
    %1286 = vmatpush1.msra.mxu0 0.0
    %1287 = vmatprep.subr.mxu0 0.0
    %1288 = vmatpush1.msra.mxu0 0.0
    %1289 = vmatprep.subr.mxu0 0.0
    %1290 = vmatpush1.msra.mxu0 0.0
    %1291 = vmatprep.subr.mxu0 0.0
    %1292 = vmatpush1.msra.mxu0 0.0
    %1293 = vmatprep.subr.mxu0 0.0
    %1294 = vmatpush1.msra.mxu0 0.0
    %1295 = vmatprep.subr.mxu0 0.0
    %1296 = vmatpush1.msra.mxu0 0.0
    %1297 = vmatprep.subr.mxu0 0.0
    %1298 = vmatpush1.msra.mxu0 0.0
    %1299 = vmatprep.subr.mxu0 0.0
    %1300 = vmatpush1.msra.mxu0 0.0
    %1301 = vmatprep.subr.mxu0 0.0
    %1302 = vmatpush1.msra.mxu0 0.0
    %1303 = vmatprep.subr.mxu0 0.0
    %1304 = vmatpush1.msra.mxu0 0.0
    %1305 = vmatprep.subr.mxu0 0.0
    %1306 = vmatpush1.msra.mxu0 0.0
    %1307 = vmatprep.subr.mxu0 0.0
    %1308 = vmatpush1.msra.mxu0 0.0
    %1309 = vmatprep.subr.mxu0 0.0
    %1310 = vmatpush1.msra.mxu0 0.0
    %1311 = vmatprep.subr.mxu0 0.0
    %1312 = vmatpush1.msra.mxu0 0.0
    %1313 = vmatprep.subr.mxu0 0.0
    %1314 = vmatpush1.msra.mxu0 0.0
    %1315 = vmatprep.subr.mxu0 0.0
    %1316 = vmatpush1.msra.mxu0 0.0
    %1317 = vmatprep.mubr.f32.mxu0 0.0
    %1318 = vmatmul.mubr.f32.gmra.mrb[0].mxu0 %v1249
    %v1319 = vpop.f32.mrb[0].mxu0
    %v1320 = vadd.f32 0.0, %v1319
    %v1321 = vpop.f32.mrb[0].mxu0
    %1322 = vdwg.mxu0
    %vm1323 = vcmp.gt.f32.partialorder %v1145, 0.0
    %v1324 = vsel %vm1323, %v1320, 0.0
    %v1325 = vsel %vm423, %v1324, 0.0
    %v1326 = vrot.slane %v1325, 4
    %v1327 = vadd.f32 %v1325, %v1326
    %v1328 = vrot.slane %v1327, 2
    %v1329 = vadd.f32 %v1327, %v1328
    %v1330 = vrot.slane %v1329, 1
    %v1331 = vadd.f32 %v1329, %v1330
    %v1333 = vsel %vm154, %v1324, 0
    %1335 = vmatprep.subr.mxu0 0.0
    %1336 = vmatpush1.msra.mxu0 %v832
    %1337 = vmatprep.subr.mxu0 0.0
    %1338 = vmatpush1.msra.mxu0 %v833
    %1339 = vmatprep.subr.mxu0 0.0
    %1340 = vmatpush1.msra.mxu0 %v834
    %1341 = vmatprep.subr.mxu0 0.0
    %1342 = vmatpush1.msra.mxu0 %v835
    %1343 = vmatprep.subr.mxu0 0.0
    %1344 = vmatpush1.msra.mxu0 0.0
    %1345 = vmatprep.subr.mxu0 0.0
    %1346 = vmatpush1.msra.mxu0 0.0
    %1347 = vmatprep.subr.mxu0 0.0
    %1348 = vmatpush1.msra.mxu0 0.0
    %1349 = vmatprep.subr.mxu0 0.0
    %1350 = vmatpush1.msra.mxu0 0.0
    %1351 = vmatprep.subr.mxu0 0.0
    %1352 = vmatpush1.msra.mxu0 0.0
    %1353 = vmatprep.subr.mxu0 0.0
    %1354 = vmatpush1.msra.mxu0 0.0
    %1355 = vmatprep.subr.mxu0 0.0
    %1356 = vmatpush1.msra.mxu0 0.0
    %1357 = vmatprep.subr.mxu0 0.0
    %1358 = vmatpush1.msra.mxu0 0.0
    %1359 = vmatprep.subr.mxu0 0.0
    %1360 = vmatpush1.msra.mxu0 0.0
    %1361 = vmatprep.subr.mxu0 0.0
    %1362 = vmatpush1.msra.mxu0 0.0
    %1363 = vmatprep.subr.mxu0 0.0
    %1364 = vmatpush1.msra.mxu0 0.0
    %1365 = vmatprep.subr.mxu0 0.0
    %1366 = vmatpush1.msra.mxu0 0.0
    %1367 = vmatprep.subr.mxu0 0.0
    %1368 = vmatpush1.msra.mxu0 0.0
    %1369 = vmatprep.subr.mxu0 0.0
    %1370 = vmatpush1.msra.mxu0 0.0
    %1371 = vmatprep.subr.mxu0 0.0
    %1372 = vmatpush1.msra.mxu0 0.0
    %1373 = vmatprep.subr.mxu0 0.0
    %1374 = vmatpush1.msra.mxu0 0.0
    %1375 = vmatprep.subr.mxu0 0.0
    %1376 = vmatpush1.msra.mxu0 0.0
    %1377 = vmatprep.subr.mxu0 0.0
    %1378 = vmatpush1.msra.mxu0 0.0
    %1379 = vmatprep.subr.mxu0 0.0
    %1380 = vmatpush1.msra.mxu0 0.0
    %1381 = vmatprep.subr.mxu0 0.0
    %1382 = vmatpush1.msra.mxu0 0.0
    %1383 = vmatprep.subr.mxu0 0.0
    %1384 = vmatpush1.msra.mxu0 0.0
    %1385 = vmatprep.subr.mxu0 0.0
    %1386 = vmatpush1.msra.mxu0 0.0
    %1387 = vmatprep.subr.mxu0 0.0
    %1388 = vmatpush1.msra.mxu0 0.0
    %1389 = vmatprep.subr.mxu0 0.0
    %1390 = vmatpush1.msra.mxu0 0.0
    %1391 = vmatprep.subr.mxu0 0.0
    %1392 = vmatpush1.msra.mxu0 0.0
    %1393 = vmatprep.subr.mxu0 0.0
    %1394 = vmatpush1.msra.mxu0 0.0
    %1395 = vmatprep.subr.mxu0 0.0
    %1396 = vmatpush1.msra.mxu0 0.0
    %1397 = vmatprep.subr.mxu0 0.0
    %1398 = vmatpush1.msra.mxu0 0.0
    %1399 = vmatprep.mubr.f32.mxu0 0.0
    %1400 = vmatmul.mubr.f32.gmra.mrb[0].mxu0 %v1333
    %v1401 = vpop.f32.mrb[0].mxu0
    %v1402 = vadd.f32 0.0, %v1401
    %v1403 = vpop.f32.mrb[0].mxu0
    %1404 = vdwg.mxu0
    %vm1405 = vcmp.gt.f32.partialorder %v1053, 0.0
    %v1406 = vsel %vm1405, %v1402, 0.0
    %v1407 = vsel %vm423, %v1406, 0.0
    %v1408 = vrot.slane %v1407, 4
    %v1409 = vadd.f32 %v1407, %v1408
    %v1410 = vrot.slane %v1409, 2
    %v1411 = vadd.f32 %v1409, %v1410
    %v1412 = vrot.slane %v1411, 1
    %v1413 = vadd.f32 %v1411, %v1412
    %v1414 = vmul.f32 %v676, 0.0005
    %v1415 = vmul.f32 %v677, 0.0005
    %v1416 = vmul.f32 %v678, 0.0005
    %v1417 = vmul.f32 %v679, 0.0005
    %v1418 = vmul.f32 %v680, 0.0005
    %v1419 = vmul.f32 %v681, 0.0005
    %v1420 = vmul.f32 %v682, 0.0005
    %v1421 = vmul.f32 %v683, 0.0005
    %1422 = vxpose.xlu0.b32.start [1/16] %v1406, 128
    %1423 = vxpose.xlu0.b32.cont [2/16] 0.0, 128
    %1424 = vxpose.xlu0.b32.cont [3/16] 0.0, 128
    %1425 = vxpose.xlu0.b32.cont [4/16] 0.0, 128
    %1426 = vxpose.xlu0.b32.cont [5/16] 0.0, 128
    %1427 = vxpose.xlu0.b32.cont [6/16] 0.0, 128
    %1428 = vxpose.xlu0.b32.cont [7/16] 0.0, 128
    %1429 = vxpose.xlu0.b32.cont [8/16] 0.0, 128
    %1430 = vxpose.xlu0.b32.cont [9/16] 0.0, 128
    %1431 = vxpose.xlu0.b32.cont [10/16] 0.0, 128
    %1432 = vxpose.xlu0.b32.cont [11/16] 0.0, 128
    %1433 = vxpose.xlu0.b32.cont [12/16] 0.0, 128
    %1434 = vxpose.xlu0.b32.cont [13/16] 0.0, 128
    %1435 = vxpose.xlu0.b32.cont [14/16] 0.0, 128
    %1436 = vxpose.xlu0.b32.cont [15/16] 0.0, 128
    %1437 = vxpose.xlu0.b32.end [16/16] 0.0, 128
    %v1438 = vpop.trf.xlu0
    %v1439 = vpop.trf.xlu0
    %v1440 = vpop.trf.xlu0
    %v1441 = vpop.trf.xlu0
    %v1442 = vpop.trf.xlu0
    %v1443 = vpop.trf.xlu0
    %v1444 = vpop.trf.xlu0
    %v1445 = vpop.trf.xlu0
    %v1446 = vpop.trf.xlu0
    %v1447 = vpop.trf.xlu0
    %v1448 = vpop.trf.xlu0
    %v1449 = vpop.trf.xlu0
    %v1450 = vpop.trf.xlu0
    %v1451 = vpop.trf.xlu0
    %v1452 = vpop.trf.xlu0
    %v1453 = vpop.trf.xlu0
    %v1455 = vsel %vm553, %v1438, 0
    %v1458 = vsel %vm553, %v1439, 0
    %v1461 = vsel %vm553, %v1440, 0
    %v1464 = vsel %vm553, %v1441, 0
    %v1466 = vsel %vm566, %v958, 0
    %v1468 = vsel %vm566, %v968, 0
    %1470 = vmatprep.subr.mxu0 %v1468
    %1471 = vmatpush1.msra.mxu0 %v1466
    %1472 = vmatprep.subr.mxu0 0.0
    %1473 = vmatpush1.msra.mxu0 0.0
    %1474 = vmatprep.subr.mxu0 0.0
    %1475 = vmatpush1.msra.mxu0 0.0
    %1476 = vmatprep.subr.mxu0 0.0
    %1477 = vmatpush1.msra.mxu0 0.0
    %1478 = vmatprep.subr.mxu0 0.0
    %1479 = vmatpush1.msra.mxu0 0.0
    %1480 = vmatprep.subr.mxu0 0.0
    %1481 = vmatpush1.msra.mxu0 0.0
    %1482 = vmatprep.subr.mxu0 0.0
    %1483 = vmatpush1.msra.mxu0 0.0
    %1484 = vmatprep.subr.mxu0 0.0
    %1485 = vmatpush1.msra.mxu0 0.0
    %1486 = vmatprep.subr.mxu0 0.0
    %1487 = vmatpush1.msra.mxu0 0.0
    %1488 = vmatprep.subr.mxu0 0.0
    %1489 = vmatpush1.msra.mxu0 0.0
    %1490 = vmatprep.subr.mxu0 0.0
    %1491 = vmatpush1.msra.mxu0 0.0
    %1492 = vmatprep.subr.mxu0 0.0
    %1493 = vmatpush1.msra.mxu0 0.0
    %1494 = vmatprep.subr.mxu0 0.0
    %1495 = vmatpush1.msra.mxu0 0.0
    %1496 = vmatprep.subr.mxu0 0.0
    %1497 = vmatpush1.msra.mxu0 0.0
    %1498 = vmatprep.subr.mxu0 0.0
    %1499 = vmatpush1.msra.mxu0 0.0
    %1500 = vmatprep.subr.mxu0 0.0
    %1501 = vmatpush1.msra.mxu0 0.0
    %1502 = vmatprep.subr.mxu0 0.0
    %1503 = vmatpush1.msra.mxu0 0.0
    %1504 = vmatprep.subr.mxu0 0.0
    %1505 = vmatpush1.msra.mxu0 0.0
    %1506 = vmatprep.subr.mxu0 0.0
    %1507 = vmatpush1.msra.mxu0 0.0
    %1508 = vmatprep.subr.mxu0 0.0
    %1509 = vmatpush1.msra.mxu0 0.0
    %1510 = vmatprep.subr.mxu0 0.0
    %1511 = vmatpush1.msra.mxu0 0.0
    %1512 = vmatprep.subr.mxu0 0.0
    %1513 = vmatpush1.msra.mxu0 0.0
    %1514 = vmatprep.subr.mxu0 0.0
    %1515 = vmatpush1.msra.mxu0 0.0
    %1516 = vmatprep.subr.mxu0 0.0
    %1517 = vmatpush1.msra.mxu0 0.0
    %1518 = vmatprep.subr.mxu0 0.0
    %1519 = vmatpush1.msra.mxu0 0.0
    %1520 = vmatprep.subr.mxu0 0.0
    %1521 = vmatpush1.msra.mxu0 0.0
    %1522 = vmatprep.subr.mxu0 0.0
    %1523 = vmatpush1.msra.mxu0 0.0
    %1524 = vmatprep.subr.mxu0 0.0
    %1525 = vmatpush1.msra.mxu0 0.0
    %1526 = vmatprep.subr.mxu0 0.0
    %1527 = vmatpush1.msra.mxu0 0.0
    %1528 = vmatprep.subr.mxu0 0.0
    %1529 = vmatpush1.msra.mxu0 0.0
    %1530 = vmatprep.subr.mxu0 0.0
    %1531 = vmatpush1.msra.mxu0 0.0
    %1532 = vmatprep.subr.mxu0 0.0
    %1533 = vmatpush1.msra.mxu0 0.0
    %1534 = vmatprep.mubr.f32.mxu0 0.0
    %1535 = vmatmul.mubr.f32.gmra.mrb[0].mxu0 %v1455
    %v1536 = vpop.f32.mrb[0].mxu0
    %v1537 = vadd.f32 %v1414, %v1536
    %v1538 = vpop.f32.mrb[0].mxu0
    %v1539 = vadd.f32 %v1415, %v1538
    %1540 = vmatprep.mubr.f32.mxu0 0.0
    %1541 = vmatmul.mubr.f32.gmra.mrb[0].mxu0 %v1458
    %v1542 = vpop.f32.mrb[0].mxu0
    %v1543 = vadd.f32 %v1416, %v1542
    %v1544 = vpop.f32.mrb[0].mxu0
    %v1545 = vadd.f32 %v1417, %v1544
    %1546 = vmatprep.mubr.f32.mxu0 0.0
    %1547 = vmatmul.mubr.f32.gmra.mrb[0].mxu0 %v1461
    %v1548 = vpop.f32.mrb[0].mxu0
    %v1549 = vadd.f32 %v1418, %v1548
    %v1550 = vpop.f32.mrb[0].mxu0
    %v1551 = vadd.f32 %v1419, %v1550
    %1552 = vmatprep.mubr.f32.mxu0 0.0
    %1553 = vmatmul.mubr.f32.gmra.mrb[0].mxu0 %v1464
    %v1554 = vpop.f32.mrb[0].mxu0
    %v1555 = vadd.f32 %v1420, %v1554
    %v1556 = vpop.f32.mrb[0].mxu0
    %v1557 = vadd.f32 %v1421, %v1556
    %1558 = vdwg.mxu0
    %v1559 = vmul.f32 %v660, 0.9
    %v1560 = vmul.f32 %v661, 0.9
    %v1561 = vmul.f32 %v662, 0.9
    %v1562 = vmul.f32 %v663, 0.9
    %v1563 = vmul.f32 %v664, 0.9
    %v1564 = vmul.f32 %v665, 0.9
    %v1565 = vmul.f32 %v666, 0.9
    %v1566 = vmul.f32 %v667, 0.9
    %v1567 = vadd.f32 %v1559, %v1537
    %v1568 = vadd.f32 %v1560, %v1539
    %v1569 = vadd.f32 %v1561, %v1543
    %v1570 = vadd.f32 %v1562, %v1545
    %v1571 = vadd.f32 %v1563, %v1549
    %v1572 = vadd.f32 %v1564, %v1551
    %v1573 = vadd.f32 %v1565, %v1555
    %v1574 = vadd.f32 %v1566, %v1557
    %v1575 = vmul.f32 %v1567, 0.01
    %v1576 = vmul.f32 %v1568, 0.01
    %v1577 = vmul.f32 %v1569, 0.01
    %v1578 = vmul.f32 %v1570, 0.01
    %v1579 = vmul.f32 %v1571, 0.01
    %v1580 = vmul.f32 %v1572, 0.01
    %v1581 = vmul.f32 %v1573, 0.01
    %v1582 = vmul.f32 %v1574, 0.01
    %v1583 = vsub.f32 %v676, %v1575
    %v1584 = vsub.f32 %v677, %v1576
    %v1585 = vsub.f32 %v678, %v1577
    %v1586 = vsub.f32 %v679, %v1578
    %v1587 = vsub.f32 %v680, %v1579
    %v1588 = vsub.f32 %v681, %v1580
    %v1589 = vsub.f32 %v682, %v1581
    %v1590 = vsub.f32 %v683, %v1582
    %v1591 = vmul.f32 %v688, 0.0005
    %v1592 = vadd.f32 %v1413, %v1591
    %v1593 = vmul.f32 %v686, 0.9
    %v1594 = vadd.f32 %v1593, %v1592
    %v1595 = vmul.f32 %v1594, 0.01
    %v1596 = vsub.f32 %v688, %v1595
    %v1597 = vmul.f32 %v832, 0.0005
    %v1598 = vmul.f32 %v833, 0.0005
    %v1599 = vmul.f32 %v834, 0.0005
    %v1600 = vmul.f32 %v835, 0.0005
    %1601 = vxpose.xlu0.b32.start [1/16] %v1324, 128
    %1602 = vxpose.xlu0.b32.cont [2/16] 0.0, 128
    %1603 = vxpose.xlu0.b32.cont [3/16] 0.0, 128
    %1604 = vxpose.xlu0.b32.cont [4/16] 0.0, 128
    %1605 = vxpose.xlu0.b32.cont [5/16] 0.0, 128
    %1606 = vxpose.xlu0.b32.cont [6/16] 0.0, 128
    %1607 = vxpose.xlu0.b32.cont [7/16] 0.0, 128
    %1608 = vxpose.xlu0.b32.cont [8/16] 0.0, 128
    %1609 = vxpose.xlu0.b32.cont [9/16] 0.0, 128
    %1610 = vxpose.xlu0.b32.cont [10/16] 0.0, 128
    %1611 = vxpose.xlu0.b32.cont [11/16] 0.0, 128
    %1612 = vxpose.xlu0.b32.cont [12/16] 0.0, 128
    %1613 = vxpose.xlu0.b32.cont [13/16] 0.0, 128
    %1614 = vxpose.xlu0.b32.cont [14/16] 0.0, 128
    %1615 = vxpose.xlu0.b32.cont [15/16] 0.0, 128
    %1616 = vxpose.xlu0.b32.end [16/16] 0.0, 128
    %v1617 = vpop.trf.xlu0
    %v1618 = vpop.trf.xlu0
    %v1619 = vpop.trf.xlu0
    %v1620 = vpop.trf.xlu0
    %v1621 = vpop.trf.xlu0
    %v1622 = vpop.trf.xlu0
    %v1623 = vpop.trf.xlu0
    %v1624 = vpop.trf.xlu0
    %v1625 = vpop.trf.xlu0
    %v1626 = vpop.trf.xlu0
    %v1627 = vpop.trf.xlu0
    %v1628 = vpop.trf.xlu0
    %v1629 = vpop.trf.xlu0
    %v1630 = vpop.trf.xlu0
    %v1631 = vpop.trf.xlu0
    %v1632 = vpop.trf.xlu0
    %v1634 = vsel %vm553, %v1617, 0
    %v1637 = vsel %vm553, %v1618, 0
    %v1640 = vsel %vm553, %v1619, 0
    %v1643 = vsel %vm553, %v1620, 0
    %v1645 = vsel %vm566, %v1053, 0
    %1647 = vmatprep.subr.mxu0 0.0
    %1648 = vmatpush1.msra.mxu0 %v1645
    %1649 = vmatprep.subr.mxu0 0.0
    %1650 = vmatpush1.msra.mxu0 0.0
    %1651 = vmatprep.subr.mxu0 0.0
    %1652 = vmatpush1.msra.mxu0 0.0
    %1653 = vmatprep.subr.mxu0 0.0
    %1654 = vmatpush1.msra.mxu0 0.0
    %1655 = vmatprep.subr.mxu0 0.0
    %1656 = vmatpush1.msra.mxu0 0.0
    %1657 = vmatprep.subr.mxu0 0.0
    %1658 = vmatpush1.msra.mxu0 0.0
    %1659 = vmatprep.subr.mxu0 0.0
    %1660 = vmatpush1.msra.mxu0 0.0
    %1661 = vmatprep.subr.mxu0 0.0
    %1662 = vmatpush1.msra.mxu0 0.0
    %1663 = vmatprep.subr.mxu0 0.0
    %1664 = vmatpush1.msra.mxu0 0.0
    %1665 = vmatprep.subr.mxu0 0.0
    %1666 = vmatpush1.msra.mxu0 0.0
    %1667 = vmatprep.subr.mxu0 0.0
    %1668 = vmatpush1.msra.mxu0 0.0
    %1669 = vmatprep.subr.mxu0 0.0
    %1670 = vmatpush1.msra.mxu0 0.0
    %1671 = vmatprep.subr.mxu0 0.0
    %1672 = vmatpush1.msra.mxu0 0.0
    %1673 = vmatprep.subr.mxu0 0.0
    %1674 = vmatpush1.msra.mxu0 0.0
    %1675 = vmatprep.subr.mxu0 0.0
    %1676 = vmatpush1.msra.mxu0 0.0
    %1677 = vmatprep.subr.mxu0 0.0
    %1678 = vmatpush1.msra.mxu0 0.0
    %1679 = vmatprep.subr.mxu0 0.0
    %1680 = vmatpush1.msra.mxu0 0.0
    %1681 = vmatprep.subr.mxu0 0.0
    %1682 = vmatpush1.msra.mxu0 0.0
    %1683 = vmatprep.subr.mxu0 0.0
    %1684 = vmatpush1.msra.mxu0 0.0
    %1685 = vmatprep.subr.mxu0 0.0
    %1686 = vmatpush1.msra.mxu0 0.0
    %1687 = vmatprep.subr.mxu0 0.0
    %1688 = vmatpush1.msra.mxu0 0.0
    %1689 = vmatprep.subr.mxu0 0.0
    %1690 = vmatpush1.msra.mxu0 0.0
    %1691 = vmatprep.subr.mxu0 0.0
    %1692 = vmatpush1.msra.mxu0 0.0
    %1693 = vmatprep.subr.mxu0 0.0
    %1694 = vmatpush1.msra.mxu0 0.0
    %1695 = vmatprep.subr.mxu0 0.0
    %1696 = vmatpush1.msra.mxu0 0.0
    %1697 = vmatprep.subr.mxu0 0.0
    %1698 = vmatpush1.msra.mxu0 0.0
    %1699 = vmatprep.subr.mxu0 0.0
    %1700 = vmatpush1.msra.mxu0 0.0
    %1701 = vmatprep.subr.mxu0 0.0
    %1702 = vmatpush1.msra.mxu0 0.0
    %1703 = vmatprep.subr.mxu0 0.0
    %1704 = vmatpush1.msra.mxu0 0.0
    %1705 = vmatprep.subr.mxu0 0.0
    %1706 = vmatpush1.msra.mxu0 0.0
    %1707 = vmatprep.subr.mxu0 0.0
    %1708 = vmatpush1.msra.mxu0 0.0
    %1709 = vmatprep.subr.mxu0 0.0
    %1710 = vmatpush1.msra.mxu0 0.0
    %1711 = vmatprep.mubr.f32.mxu0 0.0
    %1712 = vmatmul.mubr.f32.gmra.mrb[0].mxu0 %v1634
    %v1713 = vpop.f32.mrb[0].mxu0
    %v1714 = vadd.f32 %v1597, %v1713
    %v1715 = vpop.f32.mrb[0].mxu0
    %1716 = vmatprep.mubr.f32.mxu0 0.0
    %1717 = vmatmul.mubr.f32.gmra.mrb[0].mxu0 %v1637
    %v1718 = vpop.f32.mrb[0].mxu0
    %v1719 = vadd.f32 %v1598, %v1718
    %v1720 = vpop.f32.mrb[0].mxu0
    %1721 = vmatprep.mubr.f32.mxu0 0.0
    %1722 = vmatmul.mubr.f32.gmra.mrb[0].mxu0 %v1640
    %v1723 = vpop.f32.mrb[0].mxu0
    %v1724 = vadd.f32 %v1599, %v1723
    %v1725 = vpop.f32.mrb[0].mxu0
    %1726 = vmatprep.mubr.f32.mxu0 0.0
    %1727 = vmatmul.mubr.f32.gmra.mrb[0].mxu0 %v1643
    %v1728 = vpop.f32.mrb[0].mxu0
    %v1729 = vadd.f32 %v1600, %v1728
    %v1730 = vpop.f32.mrb[0].mxu0
    %1731 = vdwg.mxu0
    %v1732 = vmul.f32 %v824, 0.9
    %v1733 = vmul.f32 %v825, 0.9
    %v1734 = vmul.f32 %v826, 0.9
    %v1735 = vmul.f32 %v827, 0.9
    %v1736 = vadd.f32 %v1732, %v1714
    %v1737 = vadd.f32 %v1733, %v1719
    %v1738 = vadd.f32 %v1734, %v1724
    %v1739 = vadd.f32 %v1735, %v1729
    %v1740 = vmul.f32 %v1736, 0.01
    %v1741 = vmul.f32 %v1737, 0.01
    %v1742 = vmul.f32 %v1738, 0.01
    %v1743 = vmul.f32 %v1739, 0.01
    %v1744 = vsub.f32 %v832, %v1740
    %v1745 = vsub.f32 %v833, %v1741
    %v1746 = vsub.f32 %v834, %v1742
    %v1747 = vsub.f32 %v835, %v1743
    %v1748 = vmul.f32 %v840, 0.0005
    %v1749 = vadd.f32 %v1331, %v1748
    %v1750 = vmul.f32 %v838, 0.9
    %v1751 = vadd.f32 %v1750, %v1749
    %v1752 = vmul.f32 %v1751, 0.01
    %v1753 = vsub.f32 %v840, %v1752
    %v1754 = vmul.f32 %v951, 0.0005
    %1755 = vxpose.xlu0.b32.start [1/16] %v1240, 128
    %1756 = vxpose.xlu0.b32.cont [2/16] 0.0, 128
    %1757 = vxpose.xlu0.b32.cont [3/16] 0.0, 128
    %1758 = vxpose.xlu0.b32.cont [4/16] 0.0, 128
    %1759 = vxpose.xlu0.b32.cont [5/16] 0.0, 128
    %1760 = vxpose.xlu0.b32.cont [6/16] 0.0, 128
    %1761 = vxpose.xlu0.b32.cont [7/16] 0.0, 128
    %1762 = vxpose.xlu0.b32.cont [8/16] 0.0, 128
    %1763 = vxpose.xlu0.b32.cont [9/16] 0.0, 128
    %1764 = vxpose.xlu0.b32.cont [10/16] 0.0, 128
    %1765 = vxpose.xlu0.b32.cont [11/16] 0.0, 128
    %1766 = vxpose.xlu0.b32.cont [12/16] 0.0, 128
    %1767 = vxpose.xlu0.b32.cont [13/16] 0.0, 128
    %1768 = vxpose.xlu0.b32.cont [14/16] 0.0, 128
    %1769 = vxpose.xlu0.b32.cont [15/16] 0.0, 128
    %1770 = vxpose.xlu0.b32.end [16/16] 0.0, 128
    %v1771 = vpop.trf.xlu0
    %v1772 = vpop.trf.xlu0
    %v1773 = vpop.trf.xlu0
    %v1774 = vpop.trf.xlu0
    %v1775 = vpop.trf.xlu0
    %v1776 = vpop.trf.xlu0
    %v1777 = vpop.trf.xlu0
    %v1778 = vpop.trf.xlu0
    %v1779 = vpop.trf.xlu0
    %v1780 = vpop.trf.xlu0
    %v1781 = vpop.trf.xlu0
    %v1782 = vpop.trf.xlu0
    %v1783 = vpop.trf.xlu0
    %v1784 = vpop.trf.xlu0
    %v1785 = vpop.trf.xlu0
    %v1786 = vpop.trf.xlu0
    %v1788 = vsel %vm553, %v1771, 0
    %v1790 = vsel %vm566, %v1145, 0
    %1792 = vmatprep.subr.mxu0 0.0
    %1793 = vmatpush1.msra.mxu0 %v1790
    %1794 = vmatprep.subr.mxu0 0.0
    %1795 = vmatpush1.msra.mxu0 0.0
    %1796 = vmatprep.subr.mxu0 0.0
    %1797 = vmatpush1.msra.mxu0 0.0
    %1798 = vmatprep.subr.mxu0 0.0
    %1799 = vmatpush1.msra.mxu0 0.0
    %1800 = vmatprep.subr.mxu0 0.0
    %1801 = vmatpush1.msra.mxu0 0.0
    %1802 = vmatprep.subr.mxu0 0.0
    %1803 = vmatpush1.msra.mxu0 0.0
    %1804 = vmatprep.subr.mxu0 0.0
    %1805 = vmatpush1.msra.mxu0 0.0
    %1806 = vmatprep.subr.mxu0 0.0
    %1807 = vmatpush1.msra.mxu0 0.0
    %1808 = vmatprep.subr.mxu0 0.0
    %1809 = vmatpush1.msra.mxu0 0.0
    %1810 = vmatprep.subr.mxu0 0.0
    %1811 = vmatpush1.msra.mxu0 0.0
    %1812 = vmatprep.subr.mxu0 0.0
    %1813 = vmatpush1.msra.mxu0 0.0
    %1814 = vmatprep.subr.mxu0 0.0
    %1815 = vmatpush1.msra.mxu0 0.0
    %1816 = vmatprep.subr.mxu0 0.0
    %1817 = vmatpush1.msra.mxu0 0.0
    %1818 = vmatprep.subr.mxu0 0.0
    %1819 = vmatpush1.msra.mxu0 0.0
    %1820 = vmatprep.subr.mxu0 0.0
    %1821 = vmatpush1.msra.mxu0 0.0
    %1822 = vmatprep.subr.mxu0 0.0
    %1823 = vmatpush1.msra.mxu0 0.0
    %1824 = vmatprep.subr.mxu0 0.0
    %1825 = vmatpush1.msra.mxu0 0.0
    %1826 = vmatprep.subr.mxu0 0.0
    %1827 = vmatpush1.msra.mxu0 0.0
    %1828 = vmatprep.subr.mxu0 0.0
    %1829 = vmatpush1.msra.mxu0 0.0
    %1830 = vmatprep.subr.mxu0 0.0
    %1831 = vmatpush1.msra.mxu0 0.0
    %1832 = vmatprep.subr.mxu0 0.0
    %1833 = vmatpush1.msra.mxu0 0.0
    %1834 = vmatprep.subr.mxu0 0.0
    %1835 = vmatpush1.msra.mxu0 0.0
    %1836 = vmatprep.subr.mxu0 0.0
    %1837 = vmatpush1.msra.mxu0 0.0
    %1838 = vmatprep.subr.mxu0 0.0
    %1839 = vmatpush1.msra.mxu0 0.0
    %1840 = vmatprep.subr.mxu0 0.0
    %1841 = vmatpush1.msra.mxu0 0.0
    %1842 = vmatprep.subr.mxu0 0.0
    %1843 = vmatpush1.msra.mxu0 0.0
    %1844 = vmatprep.subr.mxu0 0.0
    %1845 = vmatpush1.msra.mxu0 0.0
    %1846 = vmatprep.subr.mxu0 0.0
    %1847 = vmatpush1.msra.mxu0 0.0
    %1848 = vmatprep.subr.mxu0 0.0
    %1849 = vmatpush1.msra.mxu0 0.0
    %1850 = vmatprep.subr.mxu0 0.0
    %1851 = vmatpush1.msra.mxu0 0.0
    %1852 = vmatprep.subr.mxu0 0.0
    %1853 = vmatpush1.msra.mxu0 0.0
    %1854 = vmatprep.subr.mxu0 0.0
    %1855 = vmatpush1.msra.mxu0 0.0
    %1856 = vmatprep.mubr.f32.mxu0 0.0
    %1857 = vmatmul.mubr.f32.gmra.mrb[0].mxu0 %v1788
    %v1858 = vpop.f32.mrb[0].mxu0
    %v1859 = vadd.f32 %v1754, %v1858
    %v1860 = vpop.f32.mrb[0].mxu0
    %1861 = vdwg.mxu0
    %v1862 = vmul.f32 %v949, 0.9
    %v1863 = vadd.f32 %v1862, %v1859
    %v1864 = vmul.f32 %v1863, 0.01
    %v1865 = vsub.f32 %v951, %v1864
    %v1866 = vmul.f32 %v956, 0.0005
    %v1867 = vadd.f32 %v1247, %v1866
    %v1868 = vmul.f32 %v954, 0.9
    %v1869 = vadd.f32 %v1868, %v1867
    %v1870 = vmul.f32 %v1869, 0.01
    %v1871 = vsub.f32 %v956, %v1870
    %s1872 = scalar_lea.vmem %s0, 16
    %v1873 = vld [vmem:[%s1872] sm:$0xff]
    %s1874 = scalar_lea.vmem %s1, 8
    %v1875 = vld [vmem:[%s1874] sm:$0xf]
    %v1877 = vlaneseq
    %v1878 = vshrl.u32 %v1877, 7
    %v1879 = vsub.s32 0, %v1878
    %v1880 = vrot.slane %v1596, %v1879
    %v1883 = vcombine.high %v1873, %v1873
    %v1884 = vsel %vm62, %v1883, 0
    %v1887 = vsel %vm62, %v1584, 0
    %v1890 = vsel %vm62, %v1586, 0
    %v1893 = vsel %vm62, %v1588, 0
    %v1896 = vsel %vm62, %v1590, 0
    %1898 = vmatprep.subr.mxu0 %v1887
    %1899 = vmatpush1.xpose.msra.mxu0 %v1583
    %1900 = vmatprep.subr.mxu0 %v1890
    %1901 = vmatpush1.xpose.msra.mxu0 %v1585
    %1902 = vmatprep.subr.mxu0 %v1893
    %1903 = vmatpush1.xpose.msra.mxu0 %v1587
    %1904 = vmatprep.subr.mxu0 %v1896
    %1905 = vmatpush1.xpose.msra.mxu0 %v1589
    %1906 = vmatprep.subr.mxu0 0.0
    %1907 = vmatpush1.xpose.msra.mxu0 0.0
    %1908 = vmatprep.subr.mxu0 0.0
    %1909 = vmatpush1.xpose.msra.mxu0 0.0
    %1910 = vmatprep.subr.mxu0 0.0
    %1911 = vmatpush1.xpose.msra.mxu0 0.0
    %1912 = vmatprep.subr.mxu0 0.0
    %1913 = vmatpush1.xpose.msra.mxu0 0.0
    %1914 = vmatprep.subr.mxu0 0.0
    %1915 = vmatpush1.xpose.msra.mxu0 0.0
    %1916 = vmatprep.subr.mxu0 0.0
    %1917 = vmatpush1.xpose.msra.mxu0 0.0
    %1918 = vmatprep.subr.mxu0 0.0
    %1919 = vmatpush1.xpose.msra.mxu0 0.0
    %1920 = vmatprep.subr.mxu0 0.0
    %1921 = vmatpush1.xpose.msra.mxu0 0.0
    %1922 = vmatprep.subr.mxu0 0.0
    %1923 = vmatpush1.xpose.msra.mxu0 0.0
    %1924 = vmatprep.subr.mxu0 0.0
    %1925 = vmatpush1.xpose.msra.mxu0 0.0
    %1926 = vmatprep.subr.mxu0 0.0
    %1927 = vmatpush1.xpose.msra.mxu0 0.0
    %1928 = vmatprep.subr.mxu0 0.0
    %1929 = vmatpush1.xpose.msra.mxu0 0.0
    %1930 = vmatprep.subr.mxu0 0.0
    %1931 = vmatpush1.xpose.msra.mxu0 0.0
    %1932 = vmatprep.subr.mxu0 0.0
    %1933 = vmatpush1.xpose.msra.mxu0 0.0
    %1934 = vmatprep.subr.mxu0 0.0
    %1935 = vmatpush1.xpose.msra.mxu0 0.0
    %1936 = vmatprep.subr.mxu0 0.0
    %1937 = vmatpush1.xpose.msra.mxu0 0.0
    %1938 = vmatprep.subr.mxu0 0.0
    %1939 = vmatpush1.xpose.msra.mxu0 0.0
    %1940 = vmatprep.subr.mxu0 0.0
    %1941 = vmatpush1.xpose.msra.mxu0 0.0
    %1942 = vmatprep.subr.mxu0 0.0
    %1943 = vmatpush1.xpose.msra.mxu0 0.0
    %1944 = vmatprep.subr.mxu0 0.0
    %1945 = vmatpush1.xpose.msra.mxu0 0.0
    %1946 = vmatprep.subr.mxu0 0.0
    %1947 = vmatpush1.xpose.msra.mxu0 0.0
    %1948 = vmatprep.subr.mxu0 0.0
    %1949 = vmatpush1.xpose.msra.mxu0 0.0
    %1950 = vmatprep.subr.mxu0 0.0
    %1951 = vmatpush1.xpose.msra.mxu0 0.0
    %1952 = vmatprep.subr.mxu0 0.0
    %1953 = vmatpush1.xpose.msra.mxu0 0.0
    %1954 = vmatprep.subr.mxu0 0.0
    %1955 = vmatpush1.xpose.msra.mxu0 0.0
    %1956 = vmatprep.subr.mxu0 0.0
    %1957 = vmatpush1.xpose.msra.mxu0 0.0
    %1958 = vmatprep.subr.mxu0 0.0
    %1959 = vmatpush1.xpose.msra.mxu0 0.0
    %1960 = vmatprep.subr.mxu0 0.0
    %1961 = vmatpush1.xpose.msra.mxu0 0.0
    %1962 = vmatprep.mubr.f32.mxu0 %v1884
    %1963 = vmatmul.mubr.f32.gmra.mrb[0].mxu0 %v1873
    %v1964 = vpop.f32.mrb[0].mxu0
    %v1965 = vadd.f32 %v1880, %v1964
    %v1966 = vpop.f32.mrb[0].mxu0
    %1967 = vdwg.mxu0
    %v1968 = vmax.f32 %v1965, 0.0
    %v1970 = vlaneseq
    %v1971 = vshrl.u32 %v1970, 7
    %v1972 = vsub.s32 0, %v1971
    %v1973 = vrot.slane %v1753, %v1972
    %v1976 = vsel %vm154, %v1968, 0
    %v1979 = vsel %vm154, %v1744, 0
    %v1982 = vsel %vm154, %v1745, 0
    %v1985 = vsel %vm154, %v1746, 0
    %v1988 = vsel %vm154, %v1747, 0
    %1990 = vmatprep.subr.mxu0 0.0
    %1991 = vmatpush1.xpose.msra.mxu0 %v1979
    %1992 = vmatprep.subr.mxu0 0.0
    %1993 = vmatpush1.xpose.msra.mxu0 %v1982
    %1994 = vmatprep.subr.mxu0 0.0
    %1995 = vmatpush1.xpose.msra.mxu0 %v1985
    %1996 = vmatprep.subr.mxu0 0.0
    %1997 = vmatpush1.xpose.msra.mxu0 %v1988
    %1998 = vmatprep.subr.mxu0 0.0
    %1999 = vmatpush1.xpose.msra.mxu0 0.0
    %2000 = vmatprep.subr.mxu0 0.0
    %2001 = vmatpush1.xpose.msra.mxu0 0.0
    %2002 = vmatprep.subr.mxu0 0.0
    %2003 = vmatpush1.xpose.msra.mxu0 0.0
    %2004 = vmatprep.subr.mxu0 0.0
    %2005 = vmatpush1.xpose.msra.mxu0 0.0
    %2006 = vmatprep.subr.mxu0 0.0
    %2007 = vmatpush1.xpose.msra.mxu0 0.0
    %2008 = vmatprep.subr.mxu0 0.0
    %2009 = vmatpush1.xpose.msra.mxu0 0.0
    %2010 = vmatprep.subr.mxu0 0.0
    %2011 = vmatpush1.xpose.msra.mxu0 0.0
    %2012 = vmatprep.subr.mxu0 0.0
    %2013 = vmatpush1.xpose.msra.mxu0 0.0
    %2014 = vmatprep.subr.mxu0 0.0
    %2015 = vmatpush1.xpose.msra.mxu0 0.0
    %2016 = vmatprep.subr.mxu0 0.0
    %2017 = vmatpush1.xpose.msra.mxu0 0.0
    %2018 = vmatprep.subr.mxu0 0.0
    %2019 = vmatpush1.xpose.msra.mxu0 0.0
    %2020 = vmatprep.subr.mxu0 0.0
    %2021 = vmatpush1.xpose.msra.mxu0 0.0
    %2022 = vmatprep.subr.mxu0 0.0
    %2023 = vmatpush1.xpose.msra.mxu0 0.0
    %2024 = vmatprep.subr.mxu0 0.0
    %2025 = vmatpush1.xpose.msra.mxu0 0.0
    %2026 = vmatprep.subr.mxu0 0.0
    %2027 = vmatpush1.xpose.msra.mxu0 0.0
    %2028 = vmatprep.subr.mxu0 0.0
    %2029 = vmatpush1.xpose.msra.mxu0 0.0
    %2030 = vmatprep.subr.mxu0 0.0
    %2031 = vmatpush1.xpose.msra.mxu0 0.0
    %2032 = vmatprep.subr.mxu0 0.0
    %2033 = vmatpush1.xpose.msra.mxu0 0.0
    %2034 = vmatprep.subr.mxu0 0.0
    %2035 = vmatpush1.xpose.msra.mxu0 0.0
    %2036 = vmatprep.subr.mxu0 0.0
    %2037 = vmatpush1.xpose.msra.mxu0 0.0
    %2038 = vmatprep.subr.mxu0 0.0
    %2039 = vmatpush1.xpose.msra.mxu0 0.0
    %2040 = vmatprep.subr.mxu0 0.0
    %2041 = vmatpush1.xpose.msra.mxu0 0.0
    %2042 = vmatprep.subr.mxu0 0.0
    %2043 = vmatpush1.xpose.msra.mxu0 0.0
    %2044 = vmatprep.subr.mxu0 0.0
    %2045 = vmatpush1.xpose.msra.mxu0 0.0
    %2046 = vmatprep.subr.mxu0 0.0
    %2047 = vmatpush1.xpose.msra.mxu0 0.0
    %2048 = vmatprep.subr.mxu0 0.0
    %2049 = vmatpush1.xpose.msra.mxu0 0.0
    %2050 = vmatprep.subr.mxu0 0.0
    %2051 = vmatpush1.xpose.msra.mxu0 0.0
    %2052 = vmatprep.subr.mxu0 0.0
    %2053 = vmatpush1.xpose.msra.mxu0 0.0
    %2054 = vmatprep.mubr.f32.mxu0 0.0
    %2055 = vmatmul.mubr.f32.gmra.mrb[0].mxu0 %v1976
    %v2056 = vpop.f32.mrb[0].mxu0
    %v2057 = vadd.f32 %v1973, %v2056
    %v2058 = vpop.f32.mrb[0].mxu0
    %2059 = vdwg.mxu0
    %v2060 = vmax.f32 %v2057, 0.0
    %v2062 = vlaneseq
    %v2063 = vshrl.u32 %v2062, 7
    %v2064 = vsub.s32 0, %v2063
    %v2065 = vrot.slane %v1871, %v2064
    %v2068 = vsel %vm154, %v2060, 0
    %v2071 = vsel %vm154, %v1865, 0
    %2073 = vmatprep.subr.mxu0 0.0
    %2074 = vmatpush1.xpose.msra.mxu0 %v2071
    %2075 = vmatprep.subr.mxu0 0.0
    %2076 = vmatpush1.xpose.msra.mxu0 0.0
    %2077 = vmatprep.subr.mxu0 0.0
    %2078 = vmatpush1.xpose.msra.mxu0 0.0
    %2079 = vmatprep.subr.mxu0 0.0
    %2080 = vmatpush1.xpose.msra.mxu0 0.0
    %2081 = vmatprep.subr.mxu0 0.0
    %2082 = vmatpush1.xpose.msra.mxu0 0.0
    %2083 = vmatprep.subr.mxu0 0.0
    %2084 = vmatpush1.xpose.msra.mxu0 0.0
    %2085 = vmatprep.subr.mxu0 0.0
    %2086 = vmatpush1.xpose.msra.mxu0 0.0
    %2087 = vmatprep.subr.mxu0 0.0
    %2088 = vmatpush1.xpose.msra.mxu0 0.0
    %2089 = vmatprep.subr.mxu0 0.0
    %2090 = vmatpush1.xpose.msra.mxu0 0.0
    %2091 = vmatprep.subr.mxu0 0.0
    %2092 = vmatpush1.xpose.msra.mxu0 0.0
    %2093 = vmatprep.subr.mxu0 0.0
    %2094 = vmatpush1.xpose.msra.mxu0 0.0
    %2095 = vmatprep.subr.mxu0 0.0
    %2096 = vmatpush1.xpose.msra.mxu0 0.0
    %2097 = vmatprep.subr.mxu0 0.0
    %2098 = vmatpush1.xpose.msra.mxu0 0.0
    %2099 = vmatprep.subr.mxu0 0.0
    %2100 = vmatpush1.xpose.msra.mxu0 0.0
    %2101 = vmatprep.subr.mxu0 0.0
    %2102 = vmatpush1.xpose.msra.mxu0 0.0
    %2103 = vmatprep.subr.mxu0 0.0
    %2104 = vmatpush1.xpose.msra.mxu0 0.0
    %2105 = vmatprep.subr.mxu0 0.0
    %2106 = vmatpush1.xpose.msra.mxu0 0.0
    %2107 = vmatprep.subr.mxu0 0.0
    %2108 = vmatpush1.xpose.msra.mxu0 0.0
    %2109 = vmatprep.subr.mxu0 0.0
    %2110 = vmatpush1.xpose.msra.mxu0 0.0
    %2111 = vmatprep.subr.mxu0 0.0
    %2112 = vmatpush1.xpose.msra.mxu0 0.0
    %2113 = vmatprep.subr.mxu0 0.0
    %2114 = vmatpush1.xpose.msra.mxu0 0.0
    %2115 = vmatprep.subr.mxu0 0.0
    %2116 = vmatpush1.xpose.msra.mxu0 0.0
    %2117 = vmatprep.subr.mxu0 0.0
    %2118 = vmatpush1.xpose.msra.mxu0 0.0
    %2119 = vmatprep.subr.mxu0 0.0
    %2120 = vmatpush1.xpose.msra.mxu0 0.0
    %2121 = vmatprep.subr.mxu0 0.0
    %2122 = vmatpush1.xpose.msra.mxu0 0.0
    %2123 = vmatprep.subr.mxu0 0.0
    %2124 = vmatpush1.xpose.msra.mxu0 0.0
    %2125 = vmatprep.subr.mxu0 0.0
    %2126 = vmatpush1.xpose.msra.mxu0 0.0
    %2127 = vmatprep.subr.mxu0 0.0
    %2128 = vmatpush1.xpose.msra.mxu0 0.0
    %2129 = vmatprep.subr.mxu0 0.0
    %2130 = vmatpush1.xpose.msra.mxu0 0.0
    %2131 = vmatprep.subr.mxu0 0.0
    %2132 = vmatpush1.xpose.msra.mxu0 0.0
    %2133 = vmatprep.subr.mxu0 0.0
    %2134 = vmatpush1.xpose.msra.mxu0 0.0
    %2135 = vmatprep.subr.mxu0 0.0
    %2136 = vmatpush1.xpose.msra.mxu0 0.0
    %2137 = vmatprep.mubr.f32.mxu0 0.0
    %2138 = vmatmul.mubr.f32.gmra.mrb[0].mxu0 %v2068
    %v2139 = vpop.f32.mrb[0].mxu0
    %v2140 = vadd.f32 %v2065, %v2139
    %v2141 = vpop.f32.mrb[0].mxu0
    %2142 = vdwg.mxu0
    %v2143 = vsel %vm323, %v2140, -inf
    %2144 = vmax.xlane.f32.xlu0 %v2143
    %v2145 = vpop.xlane.xlu0 %2144
    %v2146 = vsub.f32 %v2140, %v2145
    %v2147 = vmul.f32 %v2146, 1.442695
    %v2148 = vpow.pop %v2147
    %v2149 = vsel %vm323, %v2148, 0.0
    %2150 = vadd.xlane.f32.xlu0 %v2149
    %v2151 = vpop.xlane.xlu0 %2150
    %v2152 = vrcp.pop %v2151
    %v2153 = vmul.f32 %v2148, %v2152
    %v2154 = vsub.f32 %v2153, %v1875
    %v2155 = vmul.f32 %v2154, 0.25
    %v2156 = vsel %vm323, %v2155, 0.0
    %v2157 = vrot.slane %v2156, 4
    %v2158 = vadd.f32 %v2156, %v2157
    %v2159 = vrot.slane %v2158, 2
    %v2160 = vadd.f32 %v2158, %v2159
    %v2161 = vrot.slane %v2160, 1
    %v2162 = vadd.f32 %v2160, %v2161
    %v2164 = vsel %vm344, %v2155, 0
    %v2166 = vsel %vm348, %v1865, 0
    %2168 = vmatprep.subr.mxu0 0.0
    %2169 = vmatpush1.msra.mxu0 %v2166
    %2170 = vmatprep.subr.mxu0 0.0
    %2171 = vmatpush1.msra.mxu0 0.0
    %2172 = vmatprep.subr.mxu0 0.0
    %2173 = vmatpush1.msra.mxu0 0.0
    %2174 = vmatprep.subr.mxu0 0.0
    %2175 = vmatpush1.msra.mxu0 0.0
    %2176 = vmatprep.subr.mxu0 0.0
    %2177 = vmatpush1.msra.mxu0 0.0
    %2178 = vmatprep.subr.mxu0 0.0
    %2179 = vmatpush1.msra.mxu0 0.0
    %2180 = vmatprep.subr.mxu0 0.0
    %2181 = vmatpush1.msra.mxu0 0.0
    %2182 = vmatprep.subr.mxu0 0.0
    %2183 = vmatpush1.msra.mxu0 0.0
    %2184 = vmatprep.subr.mxu0 0.0
    %2185 = vmatpush1.msra.mxu0 0.0
    %2186 = vmatprep.subr.mxu0 0.0
    %2187 = vmatpush1.msra.mxu0 0.0
    %2188 = vmatprep.subr.mxu0 0.0
    %2189 = vmatpush1.msra.mxu0 0.0
    %2190 = vmatprep.subr.mxu0 0.0
    %2191 = vmatpush1.msra.mxu0 0.0
    %2192 = vmatprep.subr.mxu0 0.0
    %2193 = vmatpush1.msra.mxu0 0.0
    %2194 = vmatprep.subr.mxu0 0.0
    %2195 = vmatpush1.msra.mxu0 0.0
    %2196 = vmatprep.subr.mxu0 0.0
    %2197 = vmatpush1.msra.mxu0 0.0
    %2198 = vmatprep.subr.mxu0 0.0
    %2199 = vmatpush1.msra.mxu0 0.0
    %2200 = vmatprep.subr.mxu0 0.0
    %2201 = vmatpush1.msra.mxu0 0.0
    %2202 = vmatprep.subr.mxu0 0.0
    %2203 = vmatpush1.msra.mxu0 0.0
    %2204 = vmatprep.subr.mxu0 0.0
    %2205 = vmatpush1.msra.mxu0 0.0
    %2206 = vmatprep.subr.mxu0 0.0
    %2207 = vmatpush1.msra.mxu0 0.0
    %2208 = vmatprep.subr.mxu0 0.0
    %2209 = vmatpush1.msra.mxu0 0.0
    %2210 = vmatprep.subr.mxu0 0.0
    %2211 = vmatpush1.msra.mxu0 0.0
    %2212 = vmatprep.subr.mxu0 0.0
    %2213 = vmatpush1.msra.mxu0 0.0
    %2214 = vmatprep.subr.mxu0 0.0
    %2215 = vmatpush1.msra.mxu0 0.0
    %2216 = vmatprep.subr.mxu0 0.0
    %2217 = vmatpush1.msra.mxu0 0.0
    %2218 = vmatprep.subr.mxu0 0.0
    %2219 = vmatpush1.msra.mxu0 0.0
    %2220 = vmatprep.subr.mxu0 0.0
    %2221 = vmatpush1.msra.mxu0 0.0
    %2222 = vmatprep.subr.mxu0 0.0
    %2223 = vmatpush1.msra.mxu0 0.0
    %2224 = vmatprep.subr.mxu0 0.0
    %2225 = vmatpush1.msra.mxu0 0.0
    %2226 = vmatprep.subr.mxu0 0.0
    %2227 = vmatpush1.msra.mxu0 0.0
    %2228 = vmatprep.subr.mxu0 0.0
    %2229 = vmatpush1.msra.mxu0 0.0
    %2230 = vmatprep.subr.mxu0 0.0
    %2231 = vmatpush1.msra.mxu0 0.0
    %2232 = vmatprep.mubr.f32.mxu0 0.0
    %2233 = vmatmul.mubr.f32.gmra.mrb[0].mxu0 %v2164
    %v2234 = vpop.f32.mrb[0].mxu0
    %v2235 = vadd.f32 0.0, %v2234
    %v2236 = vpop.f32.mrb[0].mxu0
    %2237 = vdwg.mxu0
    %vm2238 = vcmp.gt.f32.partialorder %v2060, 0.0
    %v2239 = vsel %vm2238, %v2235, 0.0
    %v2240 = vsel %vm423, %v2239, 0.0
    %v2241 = vrot.slane %v2240, 4
    %v2242 = vadd.f32 %v2240, %v2241
    %v2243 = vrot.slane %v2242, 2
    %v2244 = vadd.f32 %v2242, %v2243
    %v2245 = vrot.slane %v2244, 1
    %v2246 = vadd.f32 %v2244, %v2245
    %v2248 = vsel %vm154, %v2239, 0
    %2250 = vmatprep.subr.mxu0 0.0
    %2251 = vmatpush1.msra.mxu0 %v1744
    %2252 = vmatprep.subr.mxu0 0.0
    %2253 = vmatpush1.msra.mxu0 %v1745
    %2254 = vmatprep.subr.mxu0 0.0
    %2255 = vmatpush1.msra.mxu0 %v1746
    %2256 = vmatprep.subr.mxu0 0.0
    %2257 = vmatpush1.msra.mxu0 %v1747
    %2258 = vmatprep.subr.mxu0 0.0
    %2259 = vmatpush1.msra.mxu0 0.0
    %2260 = vmatprep.subr.mxu0 0.0
    %2261 = vmatpush1.msra.mxu0 0.0
    %2262 = vmatprep.subr.mxu0 0.0
    %2263 = vmatpush1.msra.mxu0 0.0
    %2264 = vmatprep.subr.mxu0 0.0
    %2265 = vmatpush1.msra.mxu0 0.0
    %2266 = vmatprep.subr.mxu0 0.0
    %2267 = vmatpush1.msra.mxu0 0.0
    %2268 = vmatprep.subr.mxu0 0.0
    %2269 = vmatpush1.msra.mxu0 0.0
    %2270 = vmatprep.subr.mxu0 0.0
    %2271 = vmatpush1.msra.mxu0 0.0
    %2272 = vmatprep.subr.mxu0 0.0
    %2273 = vmatpush1.msra.mxu0 0.0
    %2274 = vmatprep.subr.mxu0 0.0
    %2275 = vmatpush1.msra.mxu0 0.0
    %2276 = vmatprep.subr.mxu0 0.0
    %2277 = vmatpush1.msra.mxu0 0.0
    %2278 = vmatprep.subr.mxu0 0.0
    %2279 = vmatpush1.msra.mxu0 0.0
    %2280 = vmatprep.subr.mxu0 0.0
    %2281 = vmatpush1.msra.mxu0 0.0
    %2282 = vmatprep.subr.mxu0 0.0
    %2283 = vmatpush1.msra.mxu0 0.0
    %2284 = vmatprep.subr.mxu0 0.0
    %2285 = vmatpush1.msra.mxu0 0.0
    %2286 = vmatprep.subr.mxu0 0.0
    %2287 = vmatpush1.msra.mxu0 0.0
    %2288 = vmatprep.subr.mxu0 0.0
    %2289 = vmatpush1.msra.mxu0 0.0
    %2290 = vmatprep.subr.mxu0 0.0
    %2291 = vmatpush1.msra.mxu0 0.0
    %2292 = vmatprep.subr.mxu0 0.0
    %2293 = vmatpush1.msra.mxu0 0.0
    %2294 = vmatprep.subr.mxu0 0.0
    %2295 = vmatpush1.msra.mxu0 0.0
    %2296 = vmatprep.subr.mxu0 0.0
    %2297 = vmatpush1.msra.mxu0 0.0
    %2298 = vmatprep.subr.mxu0 0.0
    %2299 = vmatpush1.msra.mxu0 0.0
    %2300 = vmatprep.subr.mxu0 0.0
    %2301 = vmatpush1.msra.mxu0 0.0
    %2302 = vmatprep.subr.mxu0 0.0
    %2303 = vmatpush1.msra.mxu0 0.0
    %2304 = vmatprep.subr.mxu0 0.0
    %2305 = vmatpush1.msra.mxu0 0.0
    %2306 = vmatprep.subr.mxu0 0.0
    %2307 = vmatpush1.msra.mxu0 0.0
    %2308 = vmatprep.subr.mxu0 0.0
    %2309 = vmatpush1.msra.mxu0 0.0
    %2310 = vmatprep.subr.mxu0 0.0
    %2311 = vmatpush1.msra.mxu0 0.0
    %2312 = vmatprep.subr.mxu0 0.0
    %2313 = vmatpush1.msra.mxu0 0.0
    %2314 = vmatprep.mubr.f32.mxu0 0.0
    %2315 = vmatmul.mubr.f32.gmra.mrb[0].mxu0 %v2248
    %v2316 = vpop.f32.mrb[0].mxu0
    %v2317 = vadd.f32 0.0, %v2316
    %v2318 = vpop.f32.mrb[0].mxu0
    %2319 = vdwg.mxu0
    %vm2320 = vcmp.gt.f32.partialorder %v1968, 0.0
    %v2321 = vsel %vm2320, %v2317, 0.0
    %v2322 = vsel %vm423, %v2321, 0.0
    %v2323 = vrot.slane %v2322, 4
    %v2324 = vadd.f32 %v2322, %v2323
    %v2325 = vrot.slane %v2324, 2
    %v2326 = vadd.f32 %v2324, %v2325
    %v2327 = vrot.slane %v2326, 1
    %v2328 = vadd.f32 %v2326, %v2327
    %v2329 = vmul.f32 %v1583, 0.0005
    %v2330 = vmul.f32 %v1584, 0.0005
    %v2331 = vmul.f32 %v1585, 0.0005
    %v2332 = vmul.f32 %v1586, 0.0005
    %v2333 = vmul.f32 %v1587, 0.0005
    %v2334 = vmul.f32 %v1588, 0.0005
    %v2335 = vmul.f32 %v1589, 0.0005
    %v2336 = vmul.f32 %v1590, 0.0005
    %2337 = vxpose.xlu0.b32.start [1/16] %v2321, 128
    %2338 = vxpose.xlu0.b32.cont [2/16] 0.0, 128
    %2339 = vxpose.xlu0.b32.cont [3/16] 0.0, 128
    %2340 = vxpose.xlu0.b32.cont [4/16] 0.0, 128
    %2341 = vxpose.xlu0.b32.cont [5/16] 0.0, 128
    %2342 = vxpose.xlu0.b32.cont [6/16] 0.0, 128
    %2343 = vxpose.xlu0.b32.cont [7/16] 0.0, 128
    %2344 = vxpose.xlu0.b32.cont [8/16] 0.0, 128
    %2345 = vxpose.xlu0.b32.cont [9/16] 0.0, 128
    %2346 = vxpose.xlu0.b32.cont [10/16] 0.0, 128
    %2347 = vxpose.xlu0.b32.cont [11/16] 0.0, 128
    %2348 = vxpose.xlu0.b32.cont [12/16] 0.0, 128
    %2349 = vxpose.xlu0.b32.cont [13/16] 0.0, 128
    %2350 = vxpose.xlu0.b32.cont [14/16] 0.0, 128
    %2351 = vxpose.xlu0.b32.cont [15/16] 0.0, 128
    %2352 = vxpose.xlu0.b32.end [16/16] 0.0, 128
    %v2353 = vpop.trf.xlu0
    %v2354 = vpop.trf.xlu0
    %v2355 = vpop.trf.xlu0
    %v2356 = vpop.trf.xlu0
    %v2357 = vpop.trf.xlu0
    %v2358 = vpop.trf.xlu0
    %v2359 = vpop.trf.xlu0
    %v2360 = vpop.trf.xlu0
    %v2361 = vpop.trf.xlu0
    %v2362 = vpop.trf.xlu0
    %v2363 = vpop.trf.xlu0
    %v2364 = vpop.trf.xlu0
    %v2365 = vpop.trf.xlu0
    %v2366 = vpop.trf.xlu0
    %v2367 = vpop.trf.xlu0
    %v2368 = vpop.trf.xlu0
    %v2370 = vsel %vm553, %v2353, 0
    %v2373 = vsel %vm553, %v2354, 0
    %v2376 = vsel %vm553, %v2355, 0
    %v2379 = vsel %vm553, %v2356, 0
    %v2381 = vsel %vm566, %v1873, 0
    %v2383 = vsel %vm566, %v1883, 0
    %2385 = vmatprep.subr.mxu0 %v2383
    %2386 = vmatpush1.msra.mxu0 %v2381
    %2387 = vmatprep.subr.mxu0 0.0
    %2388 = vmatpush1.msra.mxu0 0.0
    %2389 = vmatprep.subr.mxu0 0.0
    %2390 = vmatpush1.msra.mxu0 0.0
    %2391 = vmatprep.subr.mxu0 0.0
    %2392 = vmatpush1.msra.mxu0 0.0
    %2393 = vmatprep.subr.mxu0 0.0
    %2394 = vmatpush1.msra.mxu0 0.0
    %2395 = vmatprep.subr.mxu0 0.0
    %2396 = vmatpush1.msra.mxu0 0.0
    %2397 = vmatprep.subr.mxu0 0.0
    %2398 = vmatpush1.msra.mxu0 0.0
    %2399 = vmatprep.subr.mxu0 0.0
    %2400 = vmatpush1.msra.mxu0 0.0
    %2401 = vmatprep.subr.mxu0 0.0
    %2402 = vmatpush1.msra.mxu0 0.0
    %2403 = vmatprep.subr.mxu0 0.0
    %2404 = vmatpush1.msra.mxu0 0.0
    %2405 = vmatprep.subr.mxu0 0.0
    %2406 = vmatpush1.msra.mxu0 0.0
    %2407 = vmatprep.subr.mxu0 0.0
    %2408 = vmatpush1.msra.mxu0 0.0
    %2409 = vmatprep.subr.mxu0 0.0
    %2410 = vmatpush1.msra.mxu0 0.0
    %2411 = vmatprep.subr.mxu0 0.0
    %2412 = vmatpush1.msra.mxu0 0.0
    %2413 = vmatprep.subr.mxu0 0.0
    %2414 = vmatpush1.msra.mxu0 0.0
    %2415 = vmatprep.subr.mxu0 0.0
    %2416 = vmatpush1.msra.mxu0 0.0
    %2417 = vmatprep.subr.mxu0 0.0
    %2418 = vmatpush1.msra.mxu0 0.0
    %2419 = vmatprep.subr.mxu0 0.0
    %2420 = vmatpush1.msra.mxu0 0.0
    %2421 = vmatprep.subr.mxu0 0.0
    %2422 = vmatpush1.msra.mxu0 0.0
    %2423 = vmatprep.subr.mxu0 0.0
    %2424 = vmatpush1.msra.mxu0 0.0
    %2425 = vmatprep.subr.mxu0 0.0
    %2426 = vmatpush1.msra.mxu0 0.0
    %2427 = vmatprep.subr.mxu0 0.0
    %2428 = vmatpush1.msra.mxu0 0.0
    %2429 = vmatprep.subr.mxu0 0.0
    %2430 = vmatpush1.msra.mxu0 0.0
    %2431 = vmatprep.subr.mxu0 0.0
    %2432 = vmatpush1.msra.mxu0 0.0
    %2433 = vmatprep.subr.mxu0 0.0
    %2434 = vmatpush1.msra.mxu0 0.0
    %2435 = vmatprep.subr.mxu0 0.0
    %2436 = vmatpush1.msra.mxu0 0.0
    %2437 = vmatprep.subr.mxu0 0.0
    %2438 = vmatpush1.msra.mxu0 0.0
    %2439 = vmatprep.subr.mxu0 0.0
    %2440 = vmatpush1.msra.mxu0 0.0
    %2441 = vmatprep.subr.mxu0 0.0
    %2442 = vmatpush1.msra.mxu0 0.0
    %2443 = vmatprep.subr.mxu0 0.0
    %2444 = vmatpush1.msra.mxu0 0.0
    %2445 = vmatprep.subr.mxu0 0.0
    %2446 = vmatpush1.msra.mxu0 0.0
    %2447 = vmatprep.subr.mxu0 0.0
    %2448 = vmatpush1.msra.mxu0 0.0
    %2449 = vmatprep.mubr.f32.mxu0 0.0
    %2450 = vmatmul.mubr.f32.gmra.mrb[0].mxu0 %v2370
    %v2451 = vpop.f32.mrb[0].mxu0
    %v2452 = vadd.f32 %v2329, %v2451
    %v2453 = vpop.f32.mrb[0].mxu0
    %v2454 = vadd.f32 %v2330, %v2453
    %2455 = vmatprep.mubr.f32.mxu0 0.0
    %2456 = vmatmul.mubr.f32.gmra.mrb[0].mxu0 %v2373
    %v2457 = vpop.f32.mrb[0].mxu0
    %v2458 = vadd.f32 %v2331, %v2457
    %v2459 = vpop.f32.mrb[0].mxu0
    %v2460 = vadd.f32 %v2332, %v2459
    %2461 = vmatprep.mubr.f32.mxu0 0.0
    %2462 = vmatmul.mubr.f32.gmra.mrb[0].mxu0 %v2376
    %v2463 = vpop.f32.mrb[0].mxu0
    %v2464 = vadd.f32 %v2333, %v2463
    %v2465 = vpop.f32.mrb[0].mxu0
    %v2466 = vadd.f32 %v2334, %v2465
    %2467 = vmatprep.mubr.f32.mxu0 0.0
    %2468 = vmatmul.mubr.f32.gmra.mrb[0].mxu0 %v2379
    %v2469 = vpop.f32.mrb[0].mxu0
    %v2470 = vadd.f32 %v2335, %v2469
    %v2471 = vpop.f32.mrb[0].mxu0
    %v2472 = vadd.f32 %v2336, %v2471
    %2473 = vdwg.mxu0
    %v2474 = vmul.f32 %v1567, 0.9
    %v2475 = vmul.f32 %v1568, 0.9
    %v2476 = vmul.f32 %v1569, 0.9
    %v2477 = vmul.f32 %v1570, 0.9
    %v2478 = vmul.f32 %v1571, 0.9
    %v2479 = vmul.f32 %v1572, 0.9
    %v2480 = vmul.f32 %v1573, 0.9
    %v2481 = vmul.f32 %v1574, 0.9
    %v2482 = vadd.f32 %v2474, %v2452
    %v2483 = vadd.f32 %v2475, %v2454
    %v2484 = vadd.f32 %v2476, %v2458
    %v2485 = vadd.f32 %v2477, %v2460
    %v2486 = vadd.f32 %v2478, %v2464
    %v2487 = vadd.f32 %v2479, %v2466
    %v2488 = vadd.f32 %v2480, %v2470
    %v2489 = vadd.f32 %v2481, %v2472
    %v2490 = vmul.f32 %v2482, 0.01
    %v2491 = vmul.f32 %v2483, 0.01
    %v2492 = vmul.f32 %v2484, 0.01
    %v2493 = vmul.f32 %v2485, 0.01
    %v2494 = vmul.f32 %v2486, 0.01
    %v2495 = vmul.f32 %v2487, 0.01
    %v2496 = vmul.f32 %v2488, 0.01
    %v2497 = vmul.f32 %v2489, 0.01
    %v2498 = vsub.f32 %v1583, %v2490
    %v2499 = vsub.f32 %v1584, %v2491
    %v2500 = vsub.f32 %v1585, %v2492
    %v2501 = vsub.f32 %v1586, %v2493
    %v2502 = vsub.f32 %v1587, %v2494
    %v2503 = vsub.f32 %v1588, %v2495
    %v2504 = vsub.f32 %v1589, %v2496
    %v2505 = vsub.f32 %v1590, %v2497
    %v2506 = vmul.f32 %v1596, 0.0005
    %v2507 = vadd.f32 %v2328, %v2506
    %v2508 = vmul.f32 %v1594, 0.9
    %v2509 = vadd.f32 %v2508, %v2507
    %v2510 = vmul.f32 %v2509, 0.01
    %v2511 = vsub.f32 %v1596, %v2510
    %v2512 = vmul.f32 %v1744, 0.0005
    %v2513 = vmul.f32 %v1745, 0.0005
    %v2514 = vmul.f32 %v1746, 0.0005
    %v2515 = vmul.f32 %v1747, 0.0005
    %2516 = vxpose.xlu0.b32.start [1/16] %v2239, 128
    %2517 = vxpose.xlu0.b32.cont [2/16] 0.0, 128
    %2518 = vxpose.xlu0.b32.cont [3/16] 0.0, 128
    %2519 = vxpose.xlu0.b32.cont [4/16] 0.0, 128
    %2520 = vxpose.xlu0.b32.cont [5/16] 0.0, 128
    %2521 = vxpose.xlu0.b32.cont [6/16] 0.0, 128
    %2522 = vxpose.xlu0.b32.cont [7/16] 0.0, 128
    %2523 = vxpose.xlu0.b32.cont [8/16] 0.0, 128
    %2524 = vxpose.xlu0.b32.cont [9/16] 0.0, 128
    %2525 = vxpose.xlu0.b32.cont [10/16] 0.0, 128
    %2526 = vxpose.xlu0.b32.cont [11/16] 0.0, 128
    %2527 = vxpose.xlu0.b32.cont [12/16] 0.0, 128
    %2528 = vxpose.xlu0.b32.cont [13/16] 0.0, 128
    %2529 = vxpose.xlu0.b32.cont [14/16] 0.0, 128
    %2530 = vxpose.xlu0.b32.cont [15/16] 0.0, 128
    %2531 = vxpose.xlu0.b32.end [16/16] 0.0, 128
    %v2532 = vpop.trf.xlu0
    %v2533 = vpop.trf.xlu0
    %v2534 = vpop.trf.xlu0
    %v2535 = vpop.trf.xlu0
    %v2536 = vpop.trf.xlu0
    %v2537 = vpop.trf.xlu0
    %v2538 = vpop.trf.xlu0
    %v2539 = vpop.trf.xlu0
    %v2540 = vpop.trf.xlu0
    %v2541 = vpop.trf.xlu0
    %v2542 = vpop.trf.xlu0
    %v2543 = vpop.trf.xlu0
    %v2544 = vpop.trf.xlu0
    %v2545 = vpop.trf.xlu0
    %v2546 = vpop.trf.xlu0
    %v2547 = vpop.trf.xlu0
    %v2549 = vsel %vm553, %v2532, 0
    %v2552 = vsel %vm553, %v2533, 0
    %v2555 = vsel %vm553, %v2534, 0
    %v2558 = vsel %vm553, %v2535, 0
    %v2560 = vsel %vm566, %v1968, 0
    %2562 = vmatprep.subr.mxu0 0.0
    %2563 = vmatpush1.msra.mxu0 %v2560
    %2564 = vmatprep.subr.mxu0 0.0
    %2565 = vmatpush1.msra.mxu0 0.0
    %2566 = vmatprep.subr.mxu0 0.0
    %2567 = vmatpush1.msra.mxu0 0.0
    %2568 = vmatprep.subr.mxu0 0.0
    %2569 = vmatpush1.msra.mxu0 0.0
    %2570 = vmatprep.subr.mxu0 0.0
    %2571 = vmatpush1.msra.mxu0 0.0
    %2572 = vmatprep.subr.mxu0 0.0
    %2573 = vmatpush1.msra.mxu0 0.0
    %2574 = vmatprep.subr.mxu0 0.0
    %2575 = vmatpush1.msra.mxu0 0.0
    %2576 = vmatprep.subr.mxu0 0.0
    %2577 = vmatpush1.msra.mxu0 0.0
    %2578 = vmatprep.subr.mxu0 0.0
    %2579 = vmatpush1.msra.mxu0 0.0
    %2580 = vmatprep.subr.mxu0 0.0
    %2581 = vmatpush1.msra.mxu0 0.0
    %2582 = vmatprep.subr.mxu0 0.0
    %2583 = vmatpush1.msra.mxu0 0.0
    %2584 = vmatprep.subr.mxu0 0.0
    %2585 = vmatpush1.msra.mxu0 0.0
    %2586 = vmatprep.subr.mxu0 0.0
    %2587 = vmatpush1.msra.mxu0 0.0
    %2588 = vmatprep.subr.mxu0 0.0
    %2589 = vmatpush1.msra.mxu0 0.0
    %2590 = vmatprep.subr.mxu0 0.0
    %2591 = vmatpush1.msra.mxu0 0.0
    %2592 = vmatprep.subr.mxu0 0.0
    %2593 = vmatpush1.msra.mxu0 0.0
    %2594 = vmatprep.subr.mxu0 0.0
    %2595 = vmatpush1.msra.mxu0 0.0
    %2596 = vmatprep.subr.mxu0 0.0
    %2597 = vmatpush1.msra.mxu0 0.0
    %2598 = vmatprep.subr.mxu0 0.0
    %2599 = vmatpush1.msra.mxu0 0.0
    %2600 = vmatprep.subr.mxu0 0.0
    %2601 = vmatpush1.msra.mxu0 0.0
    %2602 = vmatprep.subr.mxu0 0.0
    %2603 = vmatpush1.msra.mxu0 0.0
    %2604 = vmatprep.subr.mxu0 0.0
    %2605 = vmatpush1.msra.mxu0 0.0
    %2606 = vmatprep.subr.mxu0 0.0
    %2607 = vmatpush1.msra.mxu0 0.0
    %2608 = vmatprep.subr.mxu0 0.0
    %2609 = vmatpush1.msra.mxu0 0.0
    %2610 = vmatprep.subr.mxu0 0.0
    %2611 = vmatpush1.msra.mxu0 0.0
    %2612 = vmatprep.subr.mxu0 0.0
    %2613 = vmatpush1.msra.mxu0 0.0
    %2614 = vmatprep.subr.mxu0 0.0
    %2615 = vmatpush1.msra.mxu0 0.0
    %2616 = vmatprep.subr.mxu0 0.0
    %2617 = vmatpush1.msra.mxu0 0.0
    %2618 = vmatprep.subr.mxu0 0.0
    %2619 = vmatpush1.msra.mxu0 0.0
    %2620 = vmatprep.subr.mxu0 0.0
    %2621 = vmatpush1.msra.mxu0 0.0
    %2622 = vmatprep.subr.mxu0 0.0
    %2623 = vmatpush1.msra.mxu0 0.0
    %2624 = vmatprep.subr.mxu0 0.0
    %2625 = vmatpush1.msra.mxu0 0.0
    %2626 = vmatprep.mubr.f32.mxu0 0.0
    %2627 = vmatmul.mubr.f32.gmra.mrb[0].mxu0 %v2549
    %v2628 = vpop.f32.mrb[0].mxu0
    %v2629 = vadd.f32 %v2512, %v2628
    %v2630 = vpop.f32.mrb[0].mxu0
    %2631 = vmatprep.mubr.f32.mxu0 0.0
    %2632 = vmatmul.mubr.f32.gmra.mrb[0].mxu0 %v2552
    %v2633 = vpop.f32.mrb[0].mxu0
    %v2634 = vadd.f32 %v2513, %v2633
    %v2635 = vpop.f32.mrb[0].mxu0
    %2636 = vmatprep.mubr.f32.mxu0 0.0
    %2637 = vmatmul.mubr.f32.gmra.mrb[0].mxu0 %v2555
    %v2638 = vpop.f32.mrb[0].mxu0
    %v2639 = vadd.f32 %v2514, %v2638
    %v2640 = vpop.f32.mrb[0].mxu0
    %2641 = vmatprep.mubr.f32.mxu0 0.0
    %2642 = vmatmul.mubr.f32.gmra.mrb[0].mxu0 %v2558
    %v2643 = vpop.f32.mrb[0].mxu0
    %v2644 = vadd.f32 %v2515, %v2643
    %v2645 = vpop.f32.mrb[0].mxu0
    %2646 = vdwg.mxu0
    %v2647 = vmul.f32 %v1736, 0.9
    %v2648 = vmul.f32 %v1737, 0.9
    %v2649 = vmul.f32 %v1738, 0.9
    %v2650 = vmul.f32 %v1739, 0.9
    %v2651 = vadd.f32 %v2647, %v2629
    %v2652 = vadd.f32 %v2648, %v2634
    %v2653 = vadd.f32 %v2649, %v2639
    %v2654 = vadd.f32 %v2650, %v2644
    %v2655 = vmul.f32 %v2651, 0.01
    %v2656 = vmul.f32 %v2652, 0.01
    %v2657 = vmul.f32 %v2653, 0.01
    %v2658 = vmul.f32 %v2654, 0.01
    %v2659 = vsub.f32 %v1744, %v2655
    %v2660 = vsub.f32 %v1745, %v2656
    %v2661 = vsub.f32 %v1746, %v2657
    %v2662 = vsub.f32 %v1747, %v2658
    %v2663 = vmul.f32 %v1753, 0.0005
    %v2664 = vadd.f32 %v2246, %v2663
    %v2665 = vmul.f32 %v1751, 0.9
    %v2666 = vadd.f32 %v2665, %v2664
    %v2667 = vmul.f32 %v2666, 0.01
    %v2668 = vsub.f32 %v1753, %v2667
    %v2669 = vmul.f32 %v1865, 0.0005
    %2670 = vxpose.xlu0.b32.start [1/16] %v2155, 128
    %2671 = vxpose.xlu0.b32.cont [2/16] 0.0, 128
    %2672 = vxpose.xlu0.b32.cont [3/16] 0.0, 128
    %2673 = vxpose.xlu0.b32.cont [4/16] 0.0, 128
    %2674 = vxpose.xlu0.b32.cont [5/16] 0.0, 128
    %2675 = vxpose.xlu0.b32.cont [6/16] 0.0, 128
    %2676 = vxpose.xlu0.b32.cont [7/16] 0.0, 128
    %2677 = vxpose.xlu0.b32.cont [8/16] 0.0, 128
    %2678 = vxpose.xlu0.b32.cont [9/16] 0.0, 128
    %2679 = vxpose.xlu0.b32.cont [10/16] 0.0, 128
    %2680 = vxpose.xlu0.b32.cont [11/16] 0.0, 128
    %2681 = vxpose.xlu0.b32.cont [12/16] 0.0, 128
    %2682 = vxpose.xlu0.b32.cont [13/16] 0.0, 128
    %2683 = vxpose.xlu0.b32.cont [14/16] 0.0, 128
    %2684 = vxpose.xlu0.b32.cont [15/16] 0.0, 128
    %2685 = vxpose.xlu0.b32.end [16/16] 0.0, 128
    %v2686 = vpop.trf.xlu0
    %v2687 = vpop.trf.xlu0
    %v2688 = vpop.trf.xlu0
    %v2689 = vpop.trf.xlu0
    %v2690 = vpop.trf.xlu0
    %v2691 = vpop.trf.xlu0
    %v2692 = vpop.trf.xlu0
    %v2693 = vpop.trf.xlu0
    %v2694 = vpop.trf.xlu0
    %v2695 = vpop.trf.xlu0
    %v2696 = vpop.trf.xlu0
    %v2697 = vpop.trf.xlu0
    %v2698 = vpop.trf.xlu0
    %v2699 = vpop.trf.xlu0
    %v2700 = vpop.trf.xlu0
    %v2701 = vpop.trf.xlu0
    %v2703 = vsel %vm553, %v2686, 0
    %v2705 = vsel %vm566, %v2060, 0
    %2707 = vmatprep.subr.mxu0 0.0
    %2708 = vmatpush1.msra.mxu0 %v2705
    %2709 = vmatprep.subr.mxu0 0.0
    %2710 = vmatpush1.msra.mxu0 0.0
    %2711 = vmatprep.subr.mxu0 0.0
    %2712 = vmatpush1.msra.mxu0 0.0
    %2713 = vmatprep.subr.mxu0 0.0
    %2714 = vmatpush1.msra.mxu0 0.0
    %2715 = vmatprep.subr.mxu0 0.0
    %2716 = vmatpush1.msra.mxu0 0.0
    %2717 = vmatprep.subr.mxu0 0.0
    %2718 = vmatpush1.msra.mxu0 0.0
    %2719 = vmatprep.subr.mxu0 0.0
    %2720 = vmatpush1.msra.mxu0 0.0
    %2721 = vmatprep.subr.mxu0 0.0
    %2722 = vmatpush1.msra.mxu0 0.0
    %2723 = vmatprep.subr.mxu0 0.0
    %2724 = vmatpush1.msra.mxu0 0.0
    %2725 = vmatprep.subr.mxu0 0.0
    %2726 = vmatpush1.msra.mxu0 0.0
    %2727 = vmatprep.subr.mxu0 0.0
    %2728 = vmatpush1.msra.mxu0 0.0
    %2729 = vmatprep.subr.mxu0 0.0
    %2730 = vmatpush1.msra.mxu0 0.0
    %2731 = vmatprep.subr.mxu0 0.0
    %2732 = vmatpush1.msra.mxu0 0.0
    %2733 = vmatprep.subr.mxu0 0.0
    %2734 = vmatpush1.msra.mxu0 0.0
    %2735 = vmatprep.subr.mxu0 0.0
    %2736 = vmatpush1.msra.mxu0 0.0
    %2737 = vmatprep.subr.mxu0 0.0
    %2738 = vmatpush1.msra.mxu0 0.0
    %2739 = vmatprep.subr.mxu0 0.0
    %2740 = vmatpush1.msra.mxu0 0.0
    %2741 = vmatprep.subr.mxu0 0.0
    %2742 = vmatpush1.msra.mxu0 0.0
    %2743 = vmatprep.subr.mxu0 0.0
    %2744 = vmatpush1.msra.mxu0 0.0
    %2745 = vmatprep.subr.mxu0 0.0
    %2746 = vmatpush1.msra.mxu0 0.0
    %2747 = vmatprep.subr.mxu0 0.0
    %2748 = vmatpush1.msra.mxu0 0.0
    %2749 = vmatprep.subr.mxu0 0.0
    %2750 = vmatpush1.msra.mxu0 0.0
    %2751 = vmatprep.subr.mxu0 0.0
    %2752 = vmatpush1.msra.mxu0 0.0
    %2753 = vmatprep.subr.mxu0 0.0
    %2754 = vmatpush1.msra.mxu0 0.0
    %2755 = vmatprep.subr.mxu0 0.0
    %2756 = vmatpush1.msra.mxu0 0.0
    %2757 = vmatprep.subr.mxu0 0.0
    %2758 = vmatpush1.msra.mxu0 0.0
    %2759 = vmatprep.subr.mxu0 0.0
    %2760 = vmatpush1.msra.mxu0 0.0
    %2761 = vmatprep.subr.mxu0 0.0
    %2762 = vmatpush1.msra.mxu0 0.0
    %2763 = vmatprep.subr.mxu0 0.0
    %2764 = vmatpush1.msra.mxu0 0.0
    %2765 = vmatprep.subr.mxu0 0.0
    %2766 = vmatpush1.msra.mxu0 0.0
    %2767 = vmatprep.subr.mxu0 0.0
    %2768 = vmatpush1.msra.mxu0 0.0
    %2769 = vmatprep.subr.mxu0 0.0
    %2770 = vmatpush1.msra.mxu0 0.0
    %2771 = vmatprep.mubr.f32.mxu0 0.0
    %2772 = vmatmul.mubr.f32.gmra.mrb[0].mxu0 %v2703
    %v2773 = vpop.f32.mrb[0].mxu0
    %v2774 = vadd.f32 %v2669, %v2773
    %v2775 = vpop.f32.mrb[0].mxu0
    %2776 = vdwg.mxu0
    %v2777 = vmul.f32 %v1863, 0.9
    %v2778 = vadd.f32 %v2777, %v2774
    %v2779 = vmul.f32 %v2778, 0.01
    %v2780 = vsub.f32 %v1865, %v2779
    %v2781 = vmul.f32 %v1871, 0.0005
    %v2782 = vadd.f32 %v2162, %v2781
    %v2783 = vmul.f32 %v1869, 0.9
    %v2784 = vadd.f32 %v2783, %v2782
    %v2785 = vmul.f32 %v2784, 0.01
    %v2786 = vsub.f32 %v1871, %v2785
    %s2787 = scalar_lea.vmem %s0, 24
    %v2788 = vld [vmem:[%s2787] sm:$0xff]
    %s2789 = scalar_lea.vmem %s1, 12
    %v2790 = vld [vmem:[%s2789] sm:$0xf]
    %v2792 = vlaneseq
    %v2793 = vshrl.u32 %v2792, 7
    %v2794 = vsub.s32 0, %v2793
    %v2795 = vrot.slane %v2511, %v2794
    %v2798 = vcombine.high %v2788, %v2788
    %v2799 = vsel %vm62, %v2798, 0
    %v2802 = vsel %vm62, %v2499, 0
    %v2805 = vsel %vm62, %v2501, 0
    %v2808 = vsel %vm62, %v2503, 0
    %v2811 = vsel %vm62, %v2505, 0
    %2813 = vmatprep.subr.mxu0 %v2802
    %2814 = vmatpush1.xpose.msra.mxu0 %v2498
    %2815 = vmatprep.subr.mxu0 %v2805
    %2816 = vmatpush1.xpose.msra.mxu0 %v2500
    %2817 = vmatprep.subr.mxu0 %v2808
    %2818 = vmatpush1.xpose.msra.mxu0 %v2502
    %2819 = vmatprep.subr.mxu0 %v2811
    %2820 = vmatpush1.xpose.msra.mxu0 %v2504
    %2821 = vmatprep.subr.mxu0 0.0
    %2822 = vmatpush1.xpose.msra.mxu0 0.0
    %2823 = vmatprep.subr.mxu0 0.0
    %2824 = vmatpush1.xpose.msra.mxu0 0.0
    %2825 = vmatprep.subr.mxu0 0.0
    %2826 = vmatpush1.xpose.msra.mxu0 0.0
    %2827 = vmatprep.subr.mxu0 0.0
    %2828 = vmatpush1.xpose.msra.mxu0 0.0
    %2829 = vmatprep.subr.mxu0 0.0
    %2830 = vmatpush1.xpose.msra.mxu0 0.0
    %2831 = vmatprep.subr.mxu0 0.0
    %2832 = vmatpush1.xpose.msra.mxu0 0.0
    %2833 = vmatprep.subr.mxu0 0.0
    %2834 = vmatpush1.xpose.msra.mxu0 0.0
    %2835 = vmatprep.subr.mxu0 0.0
    %2836 = vmatpush1.xpose.msra.mxu0 0.0
    %2837 = vmatprep.subr.mxu0 0.0
    %2838 = vmatpush1.xpose.msra.mxu0 0.0
    %2839 = vmatprep.subr.mxu0 0.0
    %2840 = vmatpush1.xpose.msra.mxu0 0.0
    %2841 = vmatprep.subr.mxu0 0.0
    %2842 = vmatpush1.xpose.msra.mxu0 0.0
    %2843 = vmatprep.subr.mxu0 0.0
    %2844 = vmatpush1.xpose.msra.mxu0 0.0
    %2845 = vmatprep.subr.mxu0 0.0
    %2846 = vmatpush1.xpose.msra.mxu0 0.0
    %2847 = vmatprep.subr.mxu0 0.0
    %2848 = vmatpush1.xpose.msra.mxu0 0.0
    %2849 = vmatprep.subr.mxu0 0.0
    %2850 = vmatpush1.xpose.msra.mxu0 0.0
    %2851 = vmatprep.subr.mxu0 0.0
    %2852 = vmatpush1.xpose.msra.mxu0 0.0
    %2853 = vmatprep.subr.mxu0 0.0
    %2854 = vmatpush1.xpose.msra.mxu0 0.0
    %2855 = vmatprep.subr.mxu0 0.0
    %2856 = vmatpush1.xpose.msra.mxu0 0.0
    %2857 = vmatprep.subr.mxu0 0.0
    %2858 = vmatpush1.xpose.msra.mxu0 0.0
    %2859 = vmatprep.subr.mxu0 0.0
    %2860 = vmatpush1.xpose.msra.mxu0 0.0
    %2861 = vmatprep.subr.mxu0 0.0
    %2862 = vmatpush1.xpose.msra.mxu0 0.0
    %2863 = vmatprep.subr.mxu0 0.0
    %2864 = vmatpush1.xpose.msra.mxu0 0.0
    %2865 = vmatprep.subr.mxu0 0.0
    %2866 = vmatpush1.xpose.msra.mxu0 0.0
    %2867 = vmatprep.subr.mxu0 0.0
    %2868 = vmatpush1.xpose.msra.mxu0 0.0
    %2869 = vmatprep.subr.mxu0 0.0
    %2870 = vmatpush1.xpose.msra.mxu0 0.0
    %2871 = vmatprep.subr.mxu0 0.0
    %2872 = vmatpush1.xpose.msra.mxu0 0.0
    %2873 = vmatprep.subr.mxu0 0.0
    %2874 = vmatpush1.xpose.msra.mxu0 0.0
    %2875 = vmatprep.subr.mxu0 0.0
    %2876 = vmatpush1.xpose.msra.mxu0 0.0
    %2877 = vmatprep.mubr.f32.mxu0 %v2799
    %2878 = vmatmul.mubr.f32.gmra.mrb[0].mxu0 %v2788
    %v2879 = vpop.f32.mrb[0].mxu0
    %v2880 = vadd.f32 %v2795, %v2879
    %v2881 = vpop.f32.mrb[0].mxu0
    %2882 = vdwg.mxu0
    %v2883 = vmax.f32 %v2880, 0.0
    %v2885 = vlaneseq
    %v2886 = vshrl.u32 %v2885, 7
    %v2887 = vsub.s32 0, %v2886
    %v2888 = vrot.slane %v2668, %v2887
    %v2891 = vsel %vm154, %v2883, 0
    %v2894 = vsel %vm154, %v2659, 0
    %v2897 = vsel %vm154, %v2660, 0
    %v2900 = vsel %vm154, %v2661, 0
    %v2903 = vsel %vm154, %v2662, 0
    %2905 = vmatprep.subr.mxu0 0.0
    %2906 = vmatpush1.xpose.msra.mxu0 %v2894
    %2907 = vmatprep.subr.mxu0 0.0
    %2908 = vmatpush1.xpose.msra.mxu0 %v2897
    %2909 = vmatprep.subr.mxu0 0.0
    %2910 = vmatpush1.xpose.msra.mxu0 %v2900
    %2911 = vmatprep.subr.mxu0 0.0
    %2912 = vmatpush1.xpose.msra.mxu0 %v2903
    %2913 = vmatprep.subr.mxu0 0.0
    %2914 = vmatpush1.xpose.msra.mxu0 0.0
    %2915 = vmatprep.subr.mxu0 0.0
    %2916 = vmatpush1.xpose.msra.mxu0 0.0
    %2917 = vmatprep.subr.mxu0 0.0
    %2918 = vmatpush1.xpose.msra.mxu0 0.0
    %2919 = vmatprep.subr.mxu0 0.0
    %2920 = vmatpush1.xpose.msra.mxu0 0.0
    %2921 = vmatprep.subr.mxu0 0.0
    %2922 = vmatpush1.xpose.msra.mxu0 0.0
    %2923 = vmatprep.subr.mxu0 0.0
    %2924 = vmatpush1.xpose.msra.mxu0 0.0
    %2925 = vmatprep.subr.mxu0 0.0
    %2926 = vmatpush1.xpose.msra.mxu0 0.0
    %2927 = vmatprep.subr.mxu0 0.0
    %2928 = vmatpush1.xpose.msra.mxu0 0.0
    %2929 = vmatprep.subr.mxu0 0.0
    %2930 = vmatpush1.xpose.msra.mxu0 0.0
    %2931 = vmatprep.subr.mxu0 0.0
    %2932 = vmatpush1.xpose.msra.mxu0 0.0
    %2933 = vmatprep.subr.mxu0 0.0
    %2934 = vmatpush1.xpose.msra.mxu0 0.0
    %2935 = vmatprep.subr.mxu0 0.0
    %2936 = vmatpush1.xpose.msra.mxu0 0.0
    %2937 = vmatprep.subr.mxu0 0.0
    %2938 = vmatpush1.xpose.msra.mxu0 0.0
    %2939 = vmatprep.subr.mxu0 0.0
    %2940 = vmatpush1.xpose.msra.mxu0 0.0
    %2941 = vmatprep.subr.mxu0 0.0
    %2942 = vmatpush1.xpose.msra.mxu0 0.0
    %2943 = vmatprep.subr.mxu0 0.0
    %2944 = vmatpush1.xpose.msra.mxu0 0.0
    %2945 = vmatprep.subr.mxu0 0.0
    %2946 = vmatpush1.xpose.msra.mxu0 0.0
    %2947 = vmatprep.subr.mxu0 0.0
    %2948 = vmatpush1.xpose.msra.mxu0 0.0
    %2949 = vmatprep.subr.mxu0 0.0
    %2950 = vmatpush1.xpose.msra.mxu0 0.0
    %2951 = vmatprep.subr.mxu0 0.0
    %2952 = vmatpush1.xpose.msra.mxu0 0.0
    %2953 = vmatprep.subr.mxu0 0.0
    %2954 = vmatpush1.xpose.msra.mxu0 0.0
    %2955 = vmatprep.subr.mxu0 0.0
    %2956 = vmatpush1.xpose.msra.mxu0 0.0
    %2957 = vmatprep.subr.mxu0 0.0
    %2958 = vmatpush1.xpose.msra.mxu0 0.0
    %2959 = vmatprep.subr.mxu0 0.0
    %2960 = vmatpush1.xpose.msra.mxu0 0.0
    %2961 = vmatprep.subr.mxu0 0.0
    %2962 = vmatpush1.xpose.msra.mxu0 0.0
    %2963 = vmatprep.subr.mxu0 0.0
    %2964 = vmatpush1.xpose.msra.mxu0 0.0
    %2965 = vmatprep.subr.mxu0 0.0
    %2966 = vmatpush1.xpose.msra.mxu0 0.0
    %2967 = vmatprep.subr.mxu0 0.0
    %2968 = vmatpush1.xpose.msra.mxu0 0.0
    %2969 = vmatprep.mubr.f32.mxu0 0.0
    %2970 = vmatmul.mubr.f32.gmra.mrb[0].mxu0 %v2891
    %v2971 = vpop.f32.mrb[0].mxu0
    %v2972 = vadd.f32 %v2888, %v2971
    %v2973 = vpop.f32.mrb[0].mxu0
    %2974 = vdwg.mxu0
    %v2975 = vmax.f32 %v2972, 0.0
    %v2977 = vlaneseq
    %v2978 = vshrl.u32 %v2977, 7
    %v2979 = vsub.s32 0, %v2978
    %v2980 = vrot.slane %v2786, %v2979
    %v2983 = vsel %vm154, %v2975, 0
    %v2986 = vsel %vm154, %v2780, 0
    %2988 = vmatprep.subr.mxu0 0.0
    %2989 = vmatpush1.xpose.msra.mxu0 %v2986
    %2990 = vmatprep.subr.mxu0 0.0
    %2991 = vmatpush1.xpose.msra.mxu0 0.0
    %2992 = vmatprep.subr.mxu0 0.0
    %2993 = vmatpush1.xpose.msra.mxu0 0.0
    %2994 = vmatprep.subr.mxu0 0.0
    %2995 = vmatpush1.xpose.msra.mxu0 0.0
    %2996 = vmatprep.subr.mxu0 0.0
    %2997 = vmatpush1.xpose.msra.mxu0 0.0
    %2998 = vmatprep.subr.mxu0 0.0
    %2999 = vmatpush1.xpose.msra.mxu0 0.0
    %3000 = vmatprep.subr.mxu0 0.0
    %3001 = vmatpush1.xpose.msra.mxu0 0.0
    %3002 = vmatprep.subr.mxu0 0.0
    %3003 = vmatpush1.xpose.msra.mxu0 0.0
    %3004 = vmatprep.subr.mxu0 0.0
    %3005 = vmatpush1.xpose.msra.mxu0 0.0
    %3006 = vmatprep.subr.mxu0 0.0
    %3007 = vmatpush1.xpose.msra.mxu0 0.0
    %3008 = vmatprep.subr.mxu0 0.0
    %3009 = vmatpush1.xpose.msra.mxu0 0.0
    %3010 = vmatprep.subr.mxu0 0.0
    %3011 = vmatpush1.xpose.msra.mxu0 0.0
    %3012 = vmatprep.subr.mxu0 0.0
    %3013 = vmatpush1.xpose.msra.mxu0 0.0
    %3014 = vmatprep.subr.mxu0 0.0
    %3015 = vmatpush1.xpose.msra.mxu0 0.0
    %3016 = vmatprep.subr.mxu0 0.0
    %3017 = vmatpush1.xpose.msra.mxu0 0.0
    %3018 = vmatprep.subr.mxu0 0.0
    %3019 = vmatpush1.xpose.msra.mxu0 0.0
    %3020 = vmatprep.subr.mxu0 0.0
    %3021 = vmatpush1.xpose.msra.mxu0 0.0
    %3022 = vmatprep.subr.mxu0 0.0
    %3023 = vmatpush1.xpose.msra.mxu0 0.0
    %3024 = vmatprep.subr.mxu0 0.0
    %3025 = vmatpush1.xpose.msra.mxu0 0.0
    %3026 = vmatprep.subr.mxu0 0.0
    %3027 = vmatpush1.xpose.msra.mxu0 0.0
    %3028 = vmatprep.subr.mxu0 0.0
    %3029 = vmatpush1.xpose.msra.mxu0 0.0
    %3030 = vmatprep.subr.mxu0 0.0
    %3031 = vmatpush1.xpose.msra.mxu0 0.0
    %3032 = vmatprep.subr.mxu0 0.0
    %3033 = vmatpush1.xpose.msra.mxu0 0.0
    %3034 = vmatprep.subr.mxu0 0.0
    %3035 = vmatpush1.xpose.msra.mxu0 0.0
    %3036 = vmatprep.subr.mxu0 0.0
    %3037 = vmatpush1.xpose.msra.mxu0 0.0
    %3038 = vmatprep.subr.mxu0 0.0
    %3039 = vmatpush1.xpose.msra.mxu0 0.0
    %3040 = vmatprep.subr.mxu0 0.0
    %3041 = vmatpush1.xpose.msra.mxu0 0.0
    %3042 = vmatprep.subr.mxu0 0.0
    %3043 = vmatpush1.xpose.msra.mxu0 0.0
    %3044 = vmatprep.subr.mxu0 0.0
    %3045 = vmatpush1.xpose.msra.mxu0 0.0
    %3046 = vmatprep.subr.mxu0 0.0
    %3047 = vmatpush1.xpose.msra.mxu0 0.0
    %3048 = vmatprep.subr.mxu0 0.0
    %3049 = vmatpush1.xpose.msra.mxu0 0.0
    %3050 = vmatprep.subr.mxu0 0.0
    %3051 = vmatpush1.xpose.msra.mxu0 0.0
    %3052 = vmatprep.mubr.f32.mxu0 0.0
    %3053 = vmatmul.mubr.f32.gmra.mrb[0].mxu0 %v2983
    %v3054 = vpop.f32.mrb[0].mxu0
    %v3055 = vadd.f32 %v2980, %v3054
    %v3056 = vpop.f32.mrb[0].mxu0
    %3057 = vdwg.mxu0
    %v3058 = vsel %vm323, %v3055, -inf
    %3059 = vmax.xlane.f32.xlu0 %v3058
    %v3060 = vpop.xlane.xlu0 %3059
    %v3061 = vsub.f32 %v3055, %v3060
    %v3062 = vmul.f32 %v3061, 1.442695
    %v3063 = vpow.pop %v3062
    %v3064 = vsel %vm323, %v3063, 0.0
    %3065 = vadd.xlane.f32.xlu0 %v3064
    %v3066 = vpop.xlane.xlu0 %3065
    %v3067 = vrcp.pop %v3066
    %v3068 = vmul.f32 %v3063, %v3067
    %v3069 = vsub.f32 %v3068, %v2790
    %v3070 = vmul.f32 %v3069, 0.25
    %v3071 = vsel %vm323, %v3070, 0.0
    %v3072 = vrot.slane %v3071, 4
    %v3073 = vadd.f32 %v3071, %v3072
    %v3074 = vrot.slane %v3073, 2
    %v3075 = vadd.f32 %v3073, %v3074
    %v3076 = vrot.slane %v3075, 1
    %v3077 = vadd.f32 %v3075, %v3076
    %v3079 = vsel %vm344, %v3070, 0
    %v3081 = vsel %vm348, %v2780, 0
    %3083 = vmatprep.subr.mxu0 0.0
    %3084 = vmatpush1.msra.mxu0 %v3081
    %3085 = vmatprep.subr.mxu0 0.0
    %3086 = vmatpush1.msra.mxu0 0.0
    %3087 = vmatprep.subr.mxu0 0.0
    %3088 = vmatpush1.msra.mxu0 0.0
    %3089 = vmatprep.subr.mxu0 0.0
    %3090 = vmatpush1.msra.mxu0 0.0
    %3091 = vmatprep.subr.mxu0 0.0
    %3092 = vmatpush1.msra.mxu0 0.0
    %3093 = vmatprep.subr.mxu0 0.0
    %3094 = vmatpush1.msra.mxu0 0.0
    %3095 = vmatprep.subr.mxu0 0.0
    %3096 = vmatpush1.msra.mxu0 0.0
    %3097 = vmatprep.subr.mxu0 0.0
    %3098 = vmatpush1.msra.mxu0 0.0
    %3099 = vmatprep.subr.mxu0 0.0
    %3100 = vmatpush1.msra.mxu0 0.0
    %3101 = vmatprep.subr.mxu0 0.0
    %3102 = vmatpush1.msra.mxu0 0.0
    %3103 = vmatprep.subr.mxu0 0.0
    %3104 = vmatpush1.msra.mxu0 0.0
    %3105 = vmatprep.subr.mxu0 0.0
    %3106 = vmatpush1.msra.mxu0 0.0
    %3107 = vmatprep.subr.mxu0 0.0
    %3108 = vmatpush1.msra.mxu0 0.0
    %3109 = vmatprep.subr.mxu0 0.0
    %3110 = vmatpush1.msra.mxu0 0.0
    %3111 = vmatprep.subr.mxu0 0.0
    %3112 = vmatpush1.msra.mxu0 0.0
    %3113 = vmatprep.subr.mxu0 0.0
    %3114 = vmatpush1.msra.mxu0 0.0
    %3115 = vmatprep.subr.mxu0 0.0
    %3116 = vmatpush1.msra.mxu0 0.0
    %3117 = vmatprep.subr.mxu0 0.0
    %3118 = vmatpush1.msra.mxu0 0.0
    %3119 = vmatprep.subr.mxu0 0.0
    %3120 = vmatpush1.msra.mxu0 0.0
    %3121 = vmatprep.subr.mxu0 0.0
    %3122 = vmatpush1.msra.mxu0 0.0
    %3123 = vmatprep.subr.mxu0 0.0
    %3124 = vmatpush1.msra.mxu0 0.0
    %3125 = vmatprep.subr.mxu0 0.0
    %3126 = vmatpush1.msra.mxu0 0.0
    %3127 = vmatprep.subr.mxu0 0.0
    %3128 = vmatpush1.msra.mxu0 0.0
    %3129 = vmatprep.subr.mxu0 0.0
    %3130 = vmatpush1.msra.mxu0 0.0
    %3131 = vmatprep.subr.mxu0 0.0
    %3132 = vmatpush1.msra.mxu0 0.0
    %3133 = vmatprep.subr.mxu0 0.0
    %3134 = vmatpush1.msra.mxu0 0.0
    %3135 = vmatprep.subr.mxu0 0.0
    %3136 = vmatpush1.msra.mxu0 0.0
    %3137 = vmatprep.subr.mxu0 0.0
    %3138 = vmatpush1.msra.mxu0 0.0
    %3139 = vmatprep.subr.mxu0 0.0
    %3140 = vmatpush1.msra.mxu0 0.0
    %3141 = vmatprep.subr.mxu0 0.0
    %3142 = vmatpush1.msra.mxu0 0.0
    %3143 = vmatprep.subr.mxu0 0.0
    %3144 = vmatpush1.msra.mxu0 0.0
    %3145 = vmatprep.subr.mxu0 0.0
    %3146 = vmatpush1.msra.mxu0 0.0
    %3147 = vmatprep.mubr.f32.mxu0 0.0
    %3148 = vmatmul.mubr.f32.gmra.mrb[0].mxu0 %v3079
    %v3149 = vpop.f32.mrb[0].mxu0
    %v3150 = vadd.f32 0.0, %v3149
    %v3151 = vpop.f32.mrb[0].mxu0
    %3152 = vdwg.mxu0
    %vm3153 = vcmp.gt.f32.partialorder %v2975, 0.0
    %v3154 = vsel %vm3153, %v3150, 0.0
    %v3155 = vsel %vm423, %v3154, 0.0
    %v3156 = vrot.slane %v3155, 4
    %v3157 = vadd.f32 %v3155, %v3156
    %v3158 = vrot.slane %v3157, 2
    %v3159 = vadd.f32 %v3157, %v3158
    %v3160 = vrot.slane %v3159, 1
    %v3161 = vadd.f32 %v3159, %v3160
    %v3163 = vsel %vm154, %v3154, 0
    %3165 = vmatprep.subr.mxu0 0.0
    %3166 = vmatpush1.msra.mxu0 %v2659
    %3167 = vmatprep.subr.mxu0 0.0
    %3168 = vmatpush1.msra.mxu0 %v2660
    %3169 = vmatprep.subr.mxu0 0.0
    %3170 = vmatpush1.msra.mxu0 %v2661
    %3171 = vmatprep.subr.mxu0 0.0
    %3172 = vmatpush1.msra.mxu0 %v2662
    %3173 = vmatprep.subr.mxu0 0.0
    %3174 = vmatpush1.msra.mxu0 0.0
    %3175 = vmatprep.subr.mxu0 0.0
    %3176 = vmatpush1.msra.mxu0 0.0
    %3177 = vmatprep.subr.mxu0 0.0
    %3178 = vmatpush1.msra.mxu0 0.0
    %3179 = vmatprep.subr.mxu0 0.0
    %3180 = vmatpush1.msra.mxu0 0.0
    %3181 = vmatprep.subr.mxu0 0.0
    %3182 = vmatpush1.msra.mxu0 0.0
    %3183 = vmatprep.subr.mxu0 0.0
    %3184 = vmatpush1.msra.mxu0 0.0
    %3185 = vmatprep.subr.mxu0 0.0
    %3186 = vmatpush1.msra.mxu0 0.0
    %3187 = vmatprep.subr.mxu0 0.0
    %3188 = vmatpush1.msra.mxu0 0.0
    %3189 = vmatprep.subr.mxu0 0.0
    %3190 = vmatpush1.msra.mxu0 0.0
    %3191 = vmatprep.subr.mxu0 0.0
    %3192 = vmatpush1.msra.mxu0 0.0
    %3193 = vmatprep.subr.mxu0 0.0
    %3194 = vmatpush1.msra.mxu0 0.0
    %3195 = vmatprep.subr.mxu0 0.0
    %3196 = vmatpush1.msra.mxu0 0.0
    %3197 = vmatprep.subr.mxu0 0.0
    %3198 = vmatpush1.msra.mxu0 0.0
    %3199 = vmatprep.subr.mxu0 0.0
    %3200 = vmatpush1.msra.mxu0 0.0
    %3201 = vmatprep.subr.mxu0 0.0
    %3202 = vmatpush1.msra.mxu0 0.0
    %3203 = vmatprep.subr.mxu0 0.0
    %3204 = vmatpush1.msra.mxu0 0.0
    %3205 = vmatprep.subr.mxu0 0.0
    %3206 = vmatpush1.msra.mxu0 0.0
    %3207 = vmatprep.subr.mxu0 0.0
    %3208 = vmatpush1.msra.mxu0 0.0
    %3209 = vmatprep.subr.mxu0 0.0
    %3210 = vmatpush1.msra.mxu0 0.0
    %3211 = vmatprep.subr.mxu0 0.0
    %3212 = vmatpush1.msra.mxu0 0.0
    %3213 = vmatprep.subr.mxu0 0.0
    %3214 = vmatpush1.msra.mxu0 0.0
    %3215 = vmatprep.subr.mxu0 0.0
    %3216 = vmatpush1.msra.mxu0 0.0
    %3217 = vmatprep.subr.mxu0 0.0
    %3218 = vmatpush1.msra.mxu0 0.0
    %3219 = vmatprep.subr.mxu0 0.0
    %3220 = vmatpush1.msra.mxu0 0.0
    %3221 = vmatprep.subr.mxu0 0.0
    %3222 = vmatpush1.msra.mxu0 0.0
    %3223 = vmatprep.subr.mxu0 0.0
    %3224 = vmatpush1.msra.mxu0 0.0
    %3225 = vmatprep.subr.mxu0 0.0
    %3226 = vmatpush1.msra.mxu0 0.0
    %3227 = vmatprep.subr.mxu0 0.0
    %3228 = vmatpush1.msra.mxu0 0.0
    %3229 = vmatprep.mubr.f32.mxu0 0.0
    %3230 = vmatmul.mubr.f32.gmra.mrb[0].mxu0 %v3163
    %v3231 = vpop.f32.mrb[0].mxu0
    %v3232 = vadd.f32 0.0, %v3231
    %v3233 = vpop.f32.mrb[0].mxu0
    %3234 = vdwg.mxu0
    %vm3235 = vcmp.gt.f32.partialorder %v2883, 0.0
    %v3236 = vsel %vm3235, %v3232, 0.0
    %v3237 = vsel %vm423, %v3236, 0.0
    %v3238 = vrot.slane %v3237, 4
    %v3239 = vadd.f32 %v3237, %v3238
    %v3240 = vrot.slane %v3239, 2
    %v3241 = vadd.f32 %v3239, %v3240
    %v3242 = vrot.slane %v3241, 1
    %v3243 = vadd.f32 %v3241, %v3242
    %v3244 = vmul.f32 %v2498, 0.0005
    %v3245 = vmul.f32 %v2499, 0.0005
    %v3246 = vmul.f32 %v2500, 0.0005
    %v3247 = vmul.f32 %v2501, 0.0005
    %v3248 = vmul.f32 %v2502, 0.0005
    %v3249 = vmul.f32 %v2503, 0.0005
    %v3250 = vmul.f32 %v2504, 0.0005
    %v3251 = vmul.f32 %v2505, 0.0005
    %3252 = vxpose.xlu0.b32.start [1/16] %v3236, 128
    %3253 = vxpose.xlu0.b32.cont [2/16] 0.0, 128
    %3254 = vxpose.xlu0.b32.cont [3/16] 0.0, 128
    %3255 = vxpose.xlu0.b32.cont [4/16] 0.0, 128
    %3256 = vxpose.xlu0.b32.cont [5/16] 0.0, 128
    %3257 = vxpose.xlu0.b32.cont [6/16] 0.0, 128
    %3258 = vxpose.xlu0.b32.cont [7/16] 0.0, 128
    %3259 = vxpose.xlu0.b32.cont [8/16] 0.0, 128
    %3260 = vxpose.xlu0.b32.cont [9/16] 0.0, 128
    %3261 = vxpose.xlu0.b32.cont [10/16] 0.0, 128
    %3262 = vxpose.xlu0.b32.cont [11/16] 0.0, 128
    %3263 = vxpose.xlu0.b32.cont [12/16] 0.0, 128
    %3264 = vxpose.xlu0.b32.cont [13/16] 0.0, 128
    %3265 = vxpose.xlu0.b32.cont [14/16] 0.0, 128
    %3266 = vxpose.xlu0.b32.cont [15/16] 0.0, 128
    %3267 = vxpose.xlu0.b32.end [16/16] 0.0, 128
    %v3268 = vpop.trf.xlu0
    %v3269 = vpop.trf.xlu0
    %v3270 = vpop.trf.xlu0
    %v3271 = vpop.trf.xlu0
    %v3272 = vpop.trf.xlu0
    %v3273 = vpop.trf.xlu0
    %v3274 = vpop.trf.xlu0
    %v3275 = vpop.trf.xlu0
    %v3276 = vpop.trf.xlu0
    %v3277 = vpop.trf.xlu0
    %v3278 = vpop.trf.xlu0
    %v3279 = vpop.trf.xlu0
    %v3280 = vpop.trf.xlu0
    %v3281 = vpop.trf.xlu0
    %v3282 = vpop.trf.xlu0
    %v3283 = vpop.trf.xlu0
    %v3285 = vsel %vm553, %v3268, 0
    %v3288 = vsel %vm553, %v3269, 0
    %v3291 = vsel %vm553, %v3270, 0
    %v3294 = vsel %vm553, %v3271, 0
    %v3296 = vsel %vm566, %v2788, 0
    %v3298 = vsel %vm566, %v2798, 0
    %3300 = vmatprep.subr.mxu0 %v3298
    %3301 = vmatpush1.msra.mxu0 %v3296
    %3302 = vmatprep.subr.mxu0 0.0
    %3303 = vmatpush1.msra.mxu0 0.0
    %3304 = vmatprep.subr.mxu0 0.0
    %3305 = vmatpush1.msra.mxu0 0.0
    %3306 = vmatprep.subr.mxu0 0.0
    %3307 = vmatpush1.msra.mxu0 0.0
    %3308 = vmatprep.subr.mxu0 0.0
    %3309 = vmatpush1.msra.mxu0 0.0
    %3310 = vmatprep.subr.mxu0 0.0
    %3311 = vmatpush1.msra.mxu0 0.0
    %3312 = vmatprep.subr.mxu0 0.0
    %3313 = vmatpush1.msra.mxu0 0.0
    %3314 = vmatprep.subr.mxu0 0.0
    %3315 = vmatpush1.msra.mxu0 0.0
    %3316 = vmatprep.subr.mxu0 0.0
    %3317 = vmatpush1.msra.mxu0 0.0
    %3318 = vmatprep.subr.mxu0 0.0
    %3319 = vmatpush1.msra.mxu0 0.0
    %3320 = vmatprep.subr.mxu0 0.0
    %3321 = vmatpush1.msra.mxu0 0.0
    %3322 = vmatprep.subr.mxu0 0.0
    %3323 = vmatpush1.msra.mxu0 0.0
    %3324 = vmatprep.subr.mxu0 0.0
    %3325 = vmatpush1.msra.mxu0 0.0
    %3326 = vmatprep.subr.mxu0 0.0
    %3327 = vmatpush1.msra.mxu0 0.0
    %3328 = vmatprep.subr.mxu0 0.0
    %3329 = vmatpush1.msra.mxu0 0.0
    %3330 = vmatprep.subr.mxu0 0.0
    %3331 = vmatpush1.msra.mxu0 0.0
    %3332 = vmatprep.subr.mxu0 0.0
    %3333 = vmatpush1.msra.mxu0 0.0
    %3334 = vmatprep.subr.mxu0 0.0
    %3335 = vmatpush1.msra.mxu0 0.0
    %3336 = vmatprep.subr.mxu0 0.0
    %3337 = vmatpush1.msra.mxu0 0.0
    %3338 = vmatprep.subr.mxu0 0.0
    %3339 = vmatpush1.msra.mxu0 0.0
    %3340 = vmatprep.subr.mxu0 0.0
    %3341 = vmatpush1.msra.mxu0 0.0
    %3342 = vmatprep.subr.mxu0 0.0
    %3343 = vmatpush1.msra.mxu0 0.0
    %3344 = vmatprep.subr.mxu0 0.0
    %3345 = vmatpush1.msra.mxu0 0.0
    %3346 = vmatprep.subr.mxu0 0.0
    %3347 = vmatpush1.msra.mxu0 0.0
    %3348 = vmatprep.subr.mxu0 0.0
    %3349 = vmatpush1.msra.mxu0 0.0
    %3350 = vmatprep.subr.mxu0 0.0
    %3351 = vmatpush1.msra.mxu0 0.0
    %3352 = vmatprep.subr.mxu0 0.0
    %3353 = vmatpush1.msra.mxu0 0.0
    %3354 = vmatprep.subr.mxu0 0.0
    %3355 = vmatpush1.msra.mxu0 0.0
    %3356 = vmatprep.subr.mxu0 0.0
    %3357 = vmatpush1.msra.mxu0 0.0
    %3358 = vmatprep.subr.mxu0 0.0
    %3359 = vmatpush1.msra.mxu0 0.0
    %3360 = vmatprep.subr.mxu0 0.0
    %3361 = vmatpush1.msra.mxu0 0.0
    %3362 = vmatprep.subr.mxu0 0.0
    %3363 = vmatpush1.msra.mxu0 0.0
    %3364 = vmatprep.mubr.f32.mxu0 0.0
    %3365 = vmatmul.mubr.f32.gmra.mrb[0].mxu0 %v3285
    %v3366 = vpop.f32.mrb[0].mxu0
    %v3367 = vadd.f32 %v3244, %v3366
    %v3368 = vpop.f32.mrb[0].mxu0
    %v3369 = vadd.f32 %v3245, %v3368
    %3370 = vmatprep.mubr.f32.mxu0 0.0
    %3371 = vmatmul.mubr.f32.gmra.mrb[0].mxu0 %v3288
    %v3372 = vpop.f32.mrb[0].mxu0
    %v3373 = vadd.f32 %v3246, %v3372
    %v3374 = vpop.f32.mrb[0].mxu0
    %v3375 = vadd.f32 %v3247, %v3374
    %3376 = vmatprep.mubr.f32.mxu0 0.0
    %3377 = vmatmul.mubr.f32.gmra.mrb[0].mxu0 %v3291
    %v3378 = vpop.f32.mrb[0].mxu0
    %v3379 = vadd.f32 %v3248, %v3378
    %v3380 = vpop.f32.mrb[0].mxu0
    %v3381 = vadd.f32 %v3249, %v3380
    %3382 = vmatprep.mubr.f32.mxu0 0.0
    %3383 = vmatmul.mubr.f32.gmra.mrb[0].mxu0 %v3294
    %v3384 = vpop.f32.mrb[0].mxu0
    %v3385 = vadd.f32 %v3250, %v3384
    %v3386 = vpop.f32.mrb[0].mxu0
    %v3387 = vadd.f32 %v3251, %v3386
    %3388 = vdwg.mxu0
    %v3389 = vmul.f32 %v2482, 0.9
    %v3390 = vmul.f32 %v2483, 0.9
    %v3391 = vmul.f32 %v2484, 0.9
    %v3392 = vmul.f32 %v2485, 0.9
    %v3393 = vmul.f32 %v2486, 0.9
    %v3394 = vmul.f32 %v2487, 0.9
    %v3395 = vmul.f32 %v2488, 0.9
    %v3396 = vmul.f32 %v2489, 0.9
    %v3397 = vadd.f32 %v3389, %v3367
    %v3398 = vadd.f32 %v3390, %v3369
    %v3399 = vadd.f32 %v3391, %v3373
    %v3400 = vadd.f32 %v3392, %v3375
    %v3401 = vadd.f32 %v3393, %v3379
    %v3402 = vadd.f32 %v3394, %v3381
    %v3403 = vadd.f32 %v3395, %v3385
    %v3404 = vadd.f32 %v3396, %v3387
    %v3405 = vmul.f32 %v3397, 0.01
    %v3406 = vmul.f32 %v3398, 0.01
    %v3407 = vmul.f32 %v3399, 0.01
    %v3408 = vmul.f32 %v3400, 0.01
    %v3409 = vmul.f32 %v3401, 0.01
    %v3410 = vmul.f32 %v3402, 0.01
    %v3411 = vmul.f32 %v3403, 0.01
    %v3412 = vmul.f32 %v3404, 0.01
    %v3413 = vsub.f32 %v2498, %v3405
    %v3414 = vsub.f32 %v2499, %v3406
    %v3415 = vsub.f32 %v2500, %v3407
    %v3416 = vsub.f32 %v2501, %v3408
    %v3417 = vsub.f32 %v2502, %v3409
    %v3418 = vsub.f32 %v2503, %v3410
    %v3419 = vsub.f32 %v2504, %v3411
    %v3420 = vsub.f32 %v2505, %v3412
    %v3421 = vmul.f32 %v2511, 0.0005
    %v3422 = vadd.f32 %v3243, %v3421
    %v3423 = vmul.f32 %v2509, 0.9
    %v3424 = vadd.f32 %v3423, %v3422
    %v3425 = vmul.f32 %v3424, 0.01
    %v3426 = vsub.f32 %v2511, %v3425
    %v3427 = vmul.f32 %v2659, 0.0005
    %v3428 = vmul.f32 %v2660, 0.0005
    %v3429 = vmul.f32 %v2661, 0.0005
    %v3430 = vmul.f32 %v2662, 0.0005
    %3431 = vxpose.xlu0.b32.start [1/16] %v3154, 128
    %3432 = vxpose.xlu0.b32.cont [2/16] 0.0, 128
    %3433 = vxpose.xlu0.b32.cont [3/16] 0.0, 128
    %3434 = vxpose.xlu0.b32.cont [4/16] 0.0, 128
    %3435 = vxpose.xlu0.b32.cont [5/16] 0.0, 128
    %3436 = vxpose.xlu0.b32.cont [6/16] 0.0, 128
    %3437 = vxpose.xlu0.b32.cont [7/16] 0.0, 128
    %3438 = vxpose.xlu0.b32.cont [8/16] 0.0, 128
    %3439 = vxpose.xlu0.b32.cont [9/16] 0.0, 128
    %3440 = vxpose.xlu0.b32.cont [10/16] 0.0, 128
    %3441 = vxpose.xlu0.b32.cont [11/16] 0.0, 128
    %3442 = vxpose.xlu0.b32.cont [12/16] 0.0, 128
    %3443 = vxpose.xlu0.b32.cont [13/16] 0.0, 128
    %3444 = vxpose.xlu0.b32.cont [14/16] 0.0, 128
    %3445 = vxpose.xlu0.b32.cont [15/16] 0.0, 128
    %3446 = vxpose.xlu0.b32.end [16/16] 0.0, 128
    %v3447 = vpop.trf.xlu0
    %v3448 = vpop.trf.xlu0
    %v3449 = vpop.trf.xlu0
    %v3450 = vpop.trf.xlu0
    %v3451 = vpop.trf.xlu0
    %v3452 = vpop.trf.xlu0
    %v3453 = vpop.trf.xlu0
    %v3454 = vpop.trf.xlu0
    %v3455 = vpop.trf.xlu0
    %v3456 = vpop.trf.xlu0
    %v3457 = vpop.trf.xlu0
    %v3458 = vpop.trf.xlu0
    %v3459 = vpop.trf.xlu0
    %v3460 = vpop.trf.xlu0
    %v3461 = vpop.trf.xlu0
    %v3462 = vpop.trf.xlu0
    %v3464 = vsel %vm553, %v3447, 0
    %v3467 = vsel %vm553, %v3448, 0
    %v3470 = vsel %vm553, %v3449, 0
    %v3473 = vsel %vm553, %v3450, 0
    %v3475 = vsel %vm566, %v2883, 0
    %3477 = vmatprep.subr.mxu0 0.0
    %3478 = vmatpush1.msra.mxu0 %v3475
    %3479 = vmatprep.subr.mxu0 0.0
    %3480 = vmatpush1.msra.mxu0 0.0
    %3481 = vmatprep.subr.mxu0 0.0
    %3482 = vmatpush1.msra.mxu0 0.0
    %3483 = vmatprep.subr.mxu0 0.0
    %3484 = vmatpush1.msra.mxu0 0.0
    %3485 = vmatprep.subr.mxu0 0.0
    %3486 = vmatpush1.msra.mxu0 0.0
    %3487 = vmatprep.subr.mxu0 0.0
    %3488 = vmatpush1.msra.mxu0 0.0
    %3489 = vmatprep.subr.mxu0 0.0
    %3490 = vmatpush1.msra.mxu0 0.0
    %3491 = vmatprep.subr.mxu0 0.0
    %3492 = vmatpush1.msra.mxu0 0.0
    %3493 = vmatprep.subr.mxu0 0.0
    %3494 = vmatpush1.msra.mxu0 0.0
    %3495 = vmatprep.subr.mxu0 0.0
    %3496 = vmatpush1.msra.mxu0 0.0
    %3497 = vmatprep.subr.mxu0 0.0
    %3498 = vmatpush1.msra.mxu0 0.0
    %3499 = vmatprep.subr.mxu0 0.0
    %3500 = vmatpush1.msra.mxu0 0.0
    %3501 = vmatprep.subr.mxu0 0.0
    %3502 = vmatpush1.msra.mxu0 0.0
    %3503 = vmatprep.subr.mxu0 0.0
    %3504 = vmatpush1.msra.mxu0 0.0
    %3505 = vmatprep.subr.mxu0 0.0
    %3506 = vmatpush1.msra.mxu0 0.0
    %3507 = vmatprep.subr.mxu0 0.0
    %3508 = vmatpush1.msra.mxu0 0.0
    %3509 = vmatprep.subr.mxu0 0.0
    %3510 = vmatpush1.msra.mxu0 0.0
    %3511 = vmatprep.subr.mxu0 0.0
    %3512 = vmatpush1.msra.mxu0 0.0
    %3513 = vmatprep.subr.mxu0 0.0
    %3514 = vmatpush1.msra.mxu0 0.0
    %3515 = vmatprep.subr.mxu0 0.0
    %3516 = vmatpush1.msra.mxu0 0.0
    %3517 = vmatprep.subr.mxu0 0.0
    %3518 = vmatpush1.msra.mxu0 0.0
    %3519 = vmatprep.subr.mxu0 0.0
    %3520 = vmatpush1.msra.mxu0 0.0
    %3521 = vmatprep.subr.mxu0 0.0
    %3522 = vmatpush1.msra.mxu0 0.0
    %3523 = vmatprep.subr.mxu0 0.0
    %3524 = vmatpush1.msra.mxu0 0.0
    %3525 = vmatprep.subr.mxu0 0.0
    %3526 = vmatpush1.msra.mxu0 0.0
    %3527 = vmatprep.subr.mxu0 0.0
    %3528 = vmatpush1.msra.mxu0 0.0
    %3529 = vmatprep.subr.mxu0 0.0
    %3530 = vmatpush1.msra.mxu0 0.0
    %3531 = vmatprep.subr.mxu0 0.0
    %3532 = vmatpush1.msra.mxu0 0.0
    %3533 = vmatprep.subr.mxu0 0.0
    %3534 = vmatpush1.msra.mxu0 0.0
    %3535 = vmatprep.subr.mxu0 0.0
    %3536 = vmatpush1.msra.mxu0 0.0
    %3537 = vmatprep.subr.mxu0 0.0
    %3538 = vmatpush1.msra.mxu0 0.0
    %3539 = vmatprep.subr.mxu0 0.0
    %3540 = vmatpush1.msra.mxu0 0.0
    %3541 = vmatprep.mubr.f32.mxu0 0.0
    %3542 = vmatmul.mubr.f32.gmra.mrb[0].mxu0 %v3464
    %v3543 = vpop.f32.mrb[0].mxu0
    %v3544 = vadd.f32 %v3427, %v3543
    %v3545 = vpop.f32.mrb[0].mxu0
    %3546 = vmatprep.mubr.f32.mxu0 0.0
    %3547 = vmatmul.mubr.f32.gmra.mrb[0].mxu0 %v3467
    %v3548 = vpop.f32.mrb[0].mxu0
    %v3549 = vadd.f32 %v3428, %v3548
    %v3550 = vpop.f32.mrb[0].mxu0
    %3551 = vmatprep.mubr.f32.mxu0 0.0
    %3552 = vmatmul.mubr.f32.gmra.mrb[0].mxu0 %v3470
    %v3553 = vpop.f32.mrb[0].mxu0
    %v3554 = vadd.f32 %v3429, %v3553
    %v3555 = vpop.f32.mrb[0].mxu0
    %3556 = vmatprep.mubr.f32.mxu0 0.0
    %3557 = vmatmul.mubr.f32.gmra.mrb[0].mxu0 %v3473
    %v3558 = vpop.f32.mrb[0].mxu0
    %v3559 = vadd.f32 %v3430, %v3558
    %v3560 = vpop.f32.mrb[0].mxu0
    %3561 = vdwg.mxu0
    %v3562 = vmul.f32 %v2651, 0.9
    %v3563 = vmul.f32 %v2652, 0.9
    %v3564 = vmul.f32 %v2653, 0.9
    %v3565 = vmul.f32 %v2654, 0.9
    %v3566 = vadd.f32 %v3562, %v3544
    %v3567 = vadd.f32 %v3563, %v3549
    %v3568 = vadd.f32 %v3564, %v3554
    %v3569 = vadd.f32 %v3565, %v3559
    %v3570 = vmul.f32 %v3566, 0.01
    %v3571 = vmul.f32 %v3567, 0.01
    %v3572 = vmul.f32 %v3568, 0.01
    %v3573 = vmul.f32 %v3569, 0.01
    %v3574 = vsub.f32 %v2659, %v3570
    %v3575 = vsub.f32 %v2660, %v3571
    %v3576 = vsub.f32 %v2661, %v3572
    %v3577 = vsub.f32 %v2662, %v3573
    %v3578 = vmul.f32 %v2668, 0.0005
    %v3579 = vadd.f32 %v3161, %v3578
    %v3580 = vmul.f32 %v2666, 0.9
    %v3581 = vadd.f32 %v3580, %v3579
    %v3582 = vmul.f32 %v3581, 0.01
    %v3583 = vsub.f32 %v2668, %v3582
    %v3584 = vmul.f32 %v2780, 0.0005
    %3585 = vxpose.xlu0.b32.start [1/16] %v3070, 128
    %3586 = vxpose.xlu0.b32.cont [2/16] 0.0, 128
    %3587 = vxpose.xlu0.b32.cont [3/16] 0.0, 128
    %3588 = vxpose.xlu0.b32.cont [4/16] 0.0, 128
    %3589 = vxpose.xlu0.b32.cont [5/16] 0.0, 128
    %3590 = vxpose.xlu0.b32.cont [6/16] 0.0, 128
    %3591 = vxpose.xlu0.b32.cont [7/16] 0.0, 128
    %3592 = vxpose.xlu0.b32.cont [8/16] 0.0, 128
    %3593 = vxpose.xlu0.b32.cont [9/16] 0.0, 128
    %3594 = vxpose.xlu0.b32.cont [10/16] 0.0, 128
    %3595 = vxpose.xlu0.b32.cont [11/16] 0.0, 128
    %3596 = vxpose.xlu0.b32.cont [12/16] 0.0, 128
    %3597 = vxpose.xlu0.b32.cont [13/16] 0.0, 128
    %3598 = vxpose.xlu0.b32.cont [14/16] 0.0, 128
    %3599 = vxpose.xlu0.b32.cont [15/16] 0.0, 128
    %3600 = vxpose.xlu0.b32.end [16/16] 0.0, 128
    %v3601 = vpop.trf.xlu0
    %v3602 = vpop.trf.xlu0
    %v3603 = vpop.trf.xlu0
    %v3604 = vpop.trf.xlu0
    %v3605 = vpop.trf.xlu0
    %v3606 = vpop.trf.xlu0
    %v3607 = vpop.trf.xlu0
    %v3608 = vpop.trf.xlu0
    %v3609 = vpop.trf.xlu0
    %v3610 = vpop.trf.xlu0
    %v3611 = vpop.trf.xlu0
    %v3612 = vpop.trf.xlu0
    %v3613 = vpop.trf.xlu0
    %v3614 = vpop.trf.xlu0
    %v3615 = vpop.trf.xlu0
    %v3616 = vpop.trf.xlu0
    %v3618 = vsel %vm553, %v3601, 0
    %v3620 = vsel %vm566, %v2975, 0
    %3622 = vmatprep.subr.mxu0 0.0
    %3623 = vmatpush1.msra.mxu0 %v3620
    %3624 = vmatprep.subr.mxu0 0.0
    %3625 = vmatpush1.msra.mxu0 0.0
    %3626 = vmatprep.subr.mxu0 0.0
    %3627 = vmatpush1.msra.mxu0 0.0
    %3628 = vmatprep.subr.mxu0 0.0
    %3629 = vmatpush1.msra.mxu0 0.0
    %3630 = vmatprep.subr.mxu0 0.0
    %3631 = vmatpush1.msra.mxu0 0.0
    %3632 = vmatprep.subr.mxu0 0.0
    %3633 = vmatpush1.msra.mxu0 0.0
    %3634 = vmatprep.subr.mxu0 0.0
    %3635 = vmatpush1.msra.mxu0 0.0
    %3636 = vmatprep.subr.mxu0 0.0
    %3637 = vmatpush1.msra.mxu0 0.0
    %3638 = vmatprep.subr.mxu0 0.0
    %3639 = vmatpush1.msra.mxu0 0.0
    %3640 = vmatprep.subr.mxu0 0.0
    %3641 = vmatpush1.msra.mxu0 0.0
    %3642 = vmatprep.subr.mxu0 0.0
    %3643 = vmatpush1.msra.mxu0 0.0
    %3644 = vmatprep.subr.mxu0 0.0
    %3645 = vmatpush1.msra.mxu0 0.0
    %3646 = vmatprep.subr.mxu0 0.0
    %3647 = vmatpush1.msra.mxu0 0.0
    %3648 = vmatprep.subr.mxu0 0.0
    %3649 = vmatpush1.msra.mxu0 0.0
    %3650 = vmatprep.subr.mxu0 0.0
    %3651 = vmatpush1.msra.mxu0 0.0
    %3652 = vmatprep.subr.mxu0 0.0
    %3653 = vmatpush1.msra.mxu0 0.0
    %3654 = vmatprep.subr.mxu0 0.0
    %3655 = vmatpush1.msra.mxu0 0.0
    %3656 = vmatprep.subr.mxu0 0.0
    %3657 = vmatpush1.msra.mxu0 0.0
    %3658 = vmatprep.subr.mxu0 0.0
    %3659 = vmatpush1.msra.mxu0 0.0
    %3660 = vmatprep.subr.mxu0 0.0
    %3661 = vmatpush1.msra.mxu0 0.0
    %3662 = vmatprep.subr.mxu0 0.0
    %3663 = vmatpush1.msra.mxu0 0.0
    %3664 = vmatprep.subr.mxu0 0.0
    %3665 = vmatpush1.msra.mxu0 0.0
    %3666 = vmatprep.subr.mxu0 0.0
    %3667 = vmatpush1.msra.mxu0 0.0
    %3668 = vmatprep.subr.mxu0 0.0
    %3669 = vmatpush1.msra.mxu0 0.0
    %3670 = vmatprep.subr.mxu0 0.0
    %3671 = vmatpush1.msra.mxu0 0.0
    %3672 = vmatprep.subr.mxu0 0.0
    %3673 = vmatpush1.msra.mxu0 0.0
    %3674 = vmatprep.subr.mxu0 0.0
    %3675 = vmatpush1.msra.mxu0 0.0
    %3676 = vmatprep.subr.mxu0 0.0
    %3677 = vmatpush1.msra.mxu0 0.0
    %3678 = vmatprep.subr.mxu0 0.0
    %3679 = vmatpush1.msra.mxu0 0.0
    %3680 = vmatprep.subr.mxu0 0.0
    %3681 = vmatpush1.msra.mxu0 0.0
    %3682 = vmatprep.subr.mxu0 0.0
    %3683 = vmatpush1.msra.mxu0 0.0
    %3684 = vmatprep.subr.mxu0 0.0
    %3685 = vmatpush1.msra.mxu0 0.0
    %3686 = vmatprep.mubr.f32.mxu0 0.0
    %3687 = vmatmul.mubr.f32.gmra.mrb[0].mxu0 %v3618
    %v3688 = vpop.f32.mrb[0].mxu0
    %v3689 = vadd.f32 %v3584, %v3688
    %v3690 = vpop.f32.mrb[0].mxu0
    %3691 = vdwg.mxu0
    %v3692 = vmul.f32 %v2778, 0.9
    %v3693 = vadd.f32 %v3692, %v3689
    %v3694 = vmul.f32 %v3693, 0.01
    %v3695 = vsub.f32 %v2780, %v3694
    %v3696 = vmul.f32 %v2786, 0.0005
    %v3697 = vadd.f32 %v3077, %v3696
    %v3698 = vmul.f32 %v2784, 0.9
    %v3699 = vadd.f32 %v3698, %v3697
    %v3700 = vmul.f32 %v3699, 0.01
    %v3701 = vsub.f32 %v2786, %v3700
    %v3702 = vld [vmem:[%s2] sm:$0xf]
    %v3704 = vlaneseq
    %v3705 = vshrl.u32 %v3704, 7
    %v3706 = vsub.s32 0, %v3705
    %v3707 = vrot.slane %v3426, %v3706
    %v3711 = vunpack.c.l.s4 1983009808
    %v3712 = vunpack.c.0.s8 %v3711
    %v3713 = vlaneseq
    %v3714 = vshrl.u32 %v3713, 7
    %v3715 = vsub.s32 %v3712, %v3714
    %v3716 = vrot.slane %v3702, %v3715
    %v3717 = vcombine.high %v3716, %v3716
    %v3719 = vsel %vm62, %v3717, 0
    %v3722 = vsel %vm62, %v3414, 0
    %v3725 = vsel %vm62, %v3416, 0
    %v3728 = vsel %vm62, %v3418, 0
    %v3731 = vsel %vm62, %v3420, 0
    %3733 = vmatprep.subr.mxu0 %v3722
    %3734 = vmatpush1.xpose.msra.mxu0 %v3413
    %3735 = vmatprep.subr.mxu0 %v3725
    %3736 = vmatpush1.xpose.msra.mxu0 %v3415
    %3737 = vmatprep.subr.mxu0 %v3728
    %3738 = vmatpush1.xpose.msra.mxu0 %v3417
    %3739 = vmatprep.subr.mxu0 %v3731
    %3740 = vmatpush1.xpose.msra.mxu0 %v3419
    %3741 = vmatprep.subr.mxu0 0.0
    %3742 = vmatpush1.xpose.msra.mxu0 0.0
    %3743 = vmatprep.subr.mxu0 0.0
    %3744 = vmatpush1.xpose.msra.mxu0 0.0
    %3745 = vmatprep.subr.mxu0 0.0
    %3746 = vmatpush1.xpose.msra.mxu0 0.0
    %3747 = vmatprep.subr.mxu0 0.0
    %3748 = vmatpush1.xpose.msra.mxu0 0.0
    %3749 = vmatprep.subr.mxu0 0.0
    %3750 = vmatpush1.xpose.msra.mxu0 0.0
    %3751 = vmatprep.subr.mxu0 0.0
    %3752 = vmatpush1.xpose.msra.mxu0 0.0
    %3753 = vmatprep.subr.mxu0 0.0
    %3754 = vmatpush1.xpose.msra.mxu0 0.0
    %3755 = vmatprep.subr.mxu0 0.0
    %3756 = vmatpush1.xpose.msra.mxu0 0.0
    %3757 = vmatprep.subr.mxu0 0.0
    %3758 = vmatpush1.xpose.msra.mxu0 0.0
    %3759 = vmatprep.subr.mxu0 0.0
    %3760 = vmatpush1.xpose.msra.mxu0 0.0
    %3761 = vmatprep.subr.mxu0 0.0
    %3762 = vmatpush1.xpose.msra.mxu0 0.0
    %3763 = vmatprep.subr.mxu0 0.0
    %3764 = vmatpush1.xpose.msra.mxu0 0.0
    %3765 = vmatprep.subr.mxu0 0.0
    %3766 = vmatpush1.xpose.msra.mxu0 0.0
    %3767 = vmatprep.subr.mxu0 0.0
    %3768 = vmatpush1.xpose.msra.mxu0 0.0
    %3769 = vmatprep.subr.mxu0 0.0
    %3770 = vmatpush1.xpose.msra.mxu0 0.0
    %3771 = vmatprep.subr.mxu0 0.0
    %3772 = vmatpush1.xpose.msra.mxu0 0.0
    %3773 = vmatprep.subr.mxu0 0.0
    %3774 = vmatpush1.xpose.msra.mxu0 0.0
    %3775 = vmatprep.subr.mxu0 0.0
    %3776 = vmatpush1.xpose.msra.mxu0 0.0
    %3777 = vmatprep.subr.mxu0 0.0
    %3778 = vmatpush1.xpose.msra.mxu0 0.0
    %3779 = vmatprep.subr.mxu0 0.0
    %3780 = vmatpush1.xpose.msra.mxu0 0.0
    %3781 = vmatprep.subr.mxu0 0.0
    %3782 = vmatpush1.xpose.msra.mxu0 0.0
    %3783 = vmatprep.subr.mxu0 0.0
    %3784 = vmatpush1.xpose.msra.mxu0 0.0
    %3785 = vmatprep.subr.mxu0 0.0
    %3786 = vmatpush1.xpose.msra.mxu0 0.0
    %3787 = vmatprep.subr.mxu0 0.0
    %3788 = vmatpush1.xpose.msra.mxu0 0.0
    %3789 = vmatprep.subr.mxu0 0.0
    %3790 = vmatpush1.xpose.msra.mxu0 0.0
    %3791 = vmatprep.subr.mxu0 0.0
    %3792 = vmatpush1.xpose.msra.mxu0 0.0
    %3793 = vmatprep.subr.mxu0 0.0
    %3794 = vmatpush1.xpose.msra.mxu0 0.0
    %3795 = vmatprep.subr.mxu0 0.0
    %3796 = vmatpush1.xpose.msra.mxu0 0.0
    %3797 = vmatprep.mubr.f32.mxu0 %v3719
    %3798 = vmatmul.mubr.f32.gmra.mrb[0].mxu0 %v3716
    %v3799 = vpop.f32.mrb[0].mxu0
    %v3800 = vadd.f32 %v3707, %v3799
    %v3801 = vpop.f32.mrb[0].mxu0
    %3802 = vdwg.mxu0
    %v3803 = vmax.f32 %v3800, 0.0
    %v3805 = vlaneseq
    %v3806 = vshrl.u32 %v3805, 7
    %v3807 = vsub.s32 0, %v3806
    %v3808 = vrot.slane %v3583, %v3807
    %v3811 = vsel %vm154, %v3803, 0
    %v3814 = vsel %vm154, %v3574, 0
    %v3817 = vsel %vm154, %v3575, 0
    %v3820 = vsel %vm154, %v3576, 0
    %v3823 = vsel %vm154, %v3577, 0
    %3825 = vmatprep.subr.mxu0 0.0
    %3826 = vmatpush1.xpose.msra.mxu0 %v3814
    %3827 = vmatprep.subr.mxu0 0.0
    %3828 = vmatpush1.xpose.msra.mxu0 %v3817
    %3829 = vmatprep.subr.mxu0 0.0
    %3830 = vmatpush1.xpose.msra.mxu0 %v3820
    %3831 = vmatprep.subr.mxu0 0.0
    %3832 = vmatpush1.xpose.msra.mxu0 %v3823
    %3833 = vmatprep.subr.mxu0 0.0
    %3834 = vmatpush1.xpose.msra.mxu0 0.0
    %3835 = vmatprep.subr.mxu0 0.0
    %3836 = vmatpush1.xpose.msra.mxu0 0.0
    %3837 = vmatprep.subr.mxu0 0.0
    %3838 = vmatpush1.xpose.msra.mxu0 0.0
    %3839 = vmatprep.subr.mxu0 0.0
    %3840 = vmatpush1.xpose.msra.mxu0 0.0
    %3841 = vmatprep.subr.mxu0 0.0
    %3842 = vmatpush1.xpose.msra.mxu0 0.0
    %3843 = vmatprep.subr.mxu0 0.0
    %3844 = vmatpush1.xpose.msra.mxu0 0.0
    %3845 = vmatprep.subr.mxu0 0.0
    %3846 = vmatpush1.xpose.msra.mxu0 0.0
    %3847 = vmatprep.subr.mxu0 0.0
    %3848 = vmatpush1.xpose.msra.mxu0 0.0
    %3849 = vmatprep.subr.mxu0 0.0
    %3850 = vmatpush1.xpose.msra.mxu0 0.0
    %3851 = vmatprep.subr.mxu0 0.0
    %3852 = vmatpush1.xpose.msra.mxu0 0.0
    %3853 = vmatprep.subr.mxu0 0.0
    %3854 = vmatpush1.xpose.msra.mxu0 0.0
    %3855 = vmatprep.subr.mxu0 0.0
    %3856 = vmatpush1.xpose.msra.mxu0 0.0
    %3857 = vmatprep.subr.mxu0 0.0
    %3858 = vmatpush1.xpose.msra.mxu0 0.0
    %3859 = vmatprep.subr.mxu0 0.0
    %3860 = vmatpush1.xpose.msra.mxu0 0.0
    %3861 = vmatprep.subr.mxu0 0.0
    %3862 = vmatpush1.xpose.msra.mxu0 0.0
    %3863 = vmatprep.subr.mxu0 0.0
    %3864 = vmatpush1.xpose.msra.mxu0 0.0
    %3865 = vmatprep.subr.mxu0 0.0
    %3866 = vmatpush1.xpose.msra.mxu0 0.0
    %3867 = vmatprep.subr.mxu0 0.0
    %3868 = vmatpush1.xpose.msra.mxu0 0.0
    %3869 = vmatprep.subr.mxu0 0.0
    %3870 = vmatpush1.xpose.msra.mxu0 0.0
    %3871 = vmatprep.subr.mxu0 0.0
    %3872 = vmatpush1.xpose.msra.mxu0 0.0
    %3873 = vmatprep.subr.mxu0 0.0
    %3874 = vmatpush1.xpose.msra.mxu0 0.0
    %3875 = vmatprep.subr.mxu0 0.0
    %3876 = vmatpush1.xpose.msra.mxu0 0.0
    %3877 = vmatprep.subr.mxu0 0.0
    %3878 = vmatpush1.xpose.msra.mxu0 0.0
    %3879 = vmatprep.subr.mxu0 0.0
    %3880 = vmatpush1.xpose.msra.mxu0 0.0
    %3881 = vmatprep.subr.mxu0 0.0
    %3882 = vmatpush1.xpose.msra.mxu0 0.0
    %3883 = vmatprep.subr.mxu0 0.0
    %3884 = vmatpush1.xpose.msra.mxu0 0.0
    %3885 = vmatprep.subr.mxu0 0.0
    %3886 = vmatpush1.xpose.msra.mxu0 0.0
    %3887 = vmatprep.subr.mxu0 0.0
    %3888 = vmatpush1.xpose.msra.mxu0 0.0
    %3889 = vmatprep.mubr.f32.mxu0 0.0
    %3890 = vmatmul.mubr.f32.gmra.mrb[0].mxu0 %v3811
    %v3891 = vpop.f32.mrb[0].mxu0
    %v3892 = vadd.f32 %v3808, %v3891
    %v3893 = vpop.f32.mrb[0].mxu0
    %3894 = vdwg.mxu0
    %v3895 = vmax.f32 %v3892, 0.0
    %v3897 = vlaneseq
    %v3898 = vshrl.u32 %v3897, 7
    %v3899 = vsub.s32 0, %v3898
    %v3900 = vrot.slane %v3701, %v3899
    %v3903 = vsel %vm154, %v3895, 0
    %v3906 = vsel %vm154, %v3695, 0
    %3908 = vmatprep.subr.mxu0 0.0
    %3909 = vmatpush1.xpose.msra.mxu0 %v3906
    %3910 = vmatprep.subr.mxu0 0.0
    %3911 = vmatpush1.xpose.msra.mxu0 0.0
    %3912 = vmatprep.subr.mxu0 0.0
    %3913 = vmatpush1.xpose.msra.mxu0 0.0
    %3914 = vmatprep.subr.mxu0 0.0
    %3915 = vmatpush1.xpose.msra.mxu0 0.0
    %3916 = vmatprep.subr.mxu0 0.0
    %3917 = vmatpush1.xpose.msra.mxu0 0.0
    %3918 = vmatprep.subr.mxu0 0.0
    %3919 = vmatpush1.xpose.msra.mxu0 0.0
    %3920 = vmatprep.subr.mxu0 0.0
    %3921 = vmatpush1.xpose.msra.mxu0 0.0
    %3922 = vmatprep.subr.mxu0 0.0
    %3923 = vmatpush1.xpose.msra.mxu0 0.0
    %3924 = vmatprep.subr.mxu0 0.0
    %3925 = vmatpush1.xpose.msra.mxu0 0.0
    %3926 = vmatprep.subr.mxu0 0.0
    %3927 = vmatpush1.xpose.msra.mxu0 0.0
    %3928 = vmatprep.subr.mxu0 0.0
    %3929 = vmatpush1.xpose.msra.mxu0 0.0
    %3930 = vmatprep.subr.mxu0 0.0
    %3931 = vmatpush1.xpose.msra.mxu0 0.0
    %3932 = vmatprep.subr.mxu0 0.0
    %3933 = vmatpush1.xpose.msra.mxu0 0.0
    %3934 = vmatprep.subr.mxu0 0.0
    %3935 = vmatpush1.xpose.msra.mxu0 0.0
    %3936 = vmatprep.subr.mxu0 0.0
    %3937 = vmatpush1.xpose.msra.mxu0 0.0
    %3938 = vmatprep.subr.mxu0 0.0
    %3939 = vmatpush1.xpose.msra.mxu0 0.0
    %3940 = vmatprep.subr.mxu0 0.0
    %3941 = vmatpush1.xpose.msra.mxu0 0.0
    %3942 = vmatprep.subr.mxu0 0.0
    %3943 = vmatpush1.xpose.msra.mxu0 0.0
    %3944 = vmatprep.subr.mxu0 0.0
    %3945 = vmatpush1.xpose.msra.mxu0 0.0
    %3946 = vmatprep.subr.mxu0 0.0
    %3947 = vmatpush1.xpose.msra.mxu0 0.0
    %3948 = vmatprep.subr.mxu0 0.0
    %3949 = vmatpush1.xpose.msra.mxu0 0.0
    %3950 = vmatprep.subr.mxu0 0.0
    %3951 = vmatpush1.xpose.msra.mxu0 0.0
    %3952 = vmatprep.subr.mxu0 0.0
    %3953 = vmatpush1.xpose.msra.mxu0 0.0
    %3954 = vmatprep.subr.mxu0 0.0
    %3955 = vmatpush1.xpose.msra.mxu0 0.0
    %3956 = vmatprep.subr.mxu0 0.0
    %3957 = vmatpush1.xpose.msra.mxu0 0.0
    %3958 = vmatprep.subr.mxu0 0.0
    %3959 = vmatpush1.xpose.msra.mxu0 0.0
    %3960 = vmatprep.subr.mxu0 0.0
    %3961 = vmatpush1.xpose.msra.mxu0 0.0
    %3962 = vmatprep.subr.mxu0 0.0
    %3963 = vmatpush1.xpose.msra.mxu0 0.0
    %3964 = vmatprep.subr.mxu0 0.0
    %3965 = vmatpush1.xpose.msra.mxu0 0.0
    %3966 = vmatprep.subr.mxu0 0.0
    %3967 = vmatpush1.xpose.msra.mxu0 0.0
    %3968 = vmatprep.subr.mxu0 0.0
    %3969 = vmatpush1.xpose.msra.mxu0 0.0
    %3970 = vmatprep.subr.mxu0 0.0
    %3971 = vmatpush1.xpose.msra.mxu0 0.0
    %3972 = vmatprep.mubr.f32.mxu0 0.0
    %3973 = vmatmul.mubr.f32.gmra.mrb[0].mxu0 %v3903
    %v3974 = vpop.f32.mrb[0].mxu0
    %v3975 = vadd.f32 %v3900, %v3974
    %v3976 = vpop.f32.mrb[0].mxu0
    %3977 = vdwg.mxu0
    %vm3978 = vcmask 9216
    %3979 = vst.msk [vmem:[#allocation2] sm:$0x3] %vm3978, %v3975
    %vm3980 = vcmask 254976
    %3981 = vst.msk [vmem:[#allocation4] sm:$0x3] %vm3980, %v3895
    // Predicated region
    $region38: #{distill_forward.1} parent=1 // pred_check
      _
    $region39: #{distill_forward.1} parent=1 // pred_check_branch
      %3983 = sbr.rel (0) target = $region41
    $region40: #{distill_forward.1} parent=1 // pred_region
      %s3985 = ssub.s32 32, 32
      %3986 = vsyncadd [#allocation3], %s3985
      %s3988 = sshll.u32 [#allocation2], 4
      %s3989 = int_to_ptr.vmem [resolvable:$true] %s3988
      %3991 = dma.vmem_to_hbm [thread:$0]  %s3989, 32, %s9, [#allocation3]
    $region41: #{distill_forward.1} parent=1 // pred_fallthru
      _
    // Predicated region
    $region42: #{distill_forward.1} parent=1 // pred_check
      _
    $region43: #{distill_forward.1} parent=1 // pred_check_branch
      %3993 = sbr.rel (0) target = $region45
    $region44: #{distill_forward.1} parent=1 // pred_region
      %s3995 = ssub.s32 32, 32
      %3996 = vsyncadd [#allocation5], %s3995
      %s3998 = sshll.u32 [#allocation4], 4
      %s3999 = int_to_ptr.vmem [resolvable:$true] %s3998
      %4001 = dma.vmem_to_hbm [thread:$0]  %s3999, 32, %s10, [#allocation5]
    $region45: #{distill_forward.1} parent=1 // pred_fallthru
      _
    // Predicated region
    $region46: #{distill_forward.1} parent=1 // pred_check
      _
    $region47: #{distill_forward.1} parent=1 // pred_check_branch
      %4003 = sbr.rel (0) target = $region49
    $region48: #{distill_forward.1} parent=1 // pred_region
      %4004 = dma.done [#allocation3], 32
    $region49: #{distill_forward.1} parent=1 // pred_fallthru
      _
    // Predicated region
    $region50: #{distill_forward.1} parent=1 // pred_check
      _
    $region51: #{distill_forward.1} parent=1 // pred_check_branch
      %4006 = sbr.rel (0) target = $region53
    $region52: #{distill_forward.1} parent=1 // pred_region
      %4007 = dma.done [#allocation5], 32
    $region53: #{distill_forward.1} parent=1 // pred_fallthru
      _
    %4008 = vsyncpa [#allocation3], 1
    %4009 = vsyncpa [#allocation5], 1

</llo_original>
